<compile_context>
chip_gen: v7x
topology: tpu7x:2x2x1
jax: 0.10.0
libtpu: 0.0.40
codegen_flags: <defaults>
</compile_context>

<pallas_src>
import functools

import jax
import jax.numpy as jnp
from jax import lax
from jax.experimental import pallas as pl
from jax.experimental.pallas import tpu as pltpu

_NEG_SLOPE = 0.2  # PyG GATConv default negative_slope


# ----------------------------------------------------------------------------
# In-kernel helpers
# ----------------------------------------------------------------------------
def _attention_aggregate(h_bf, a_src_rows, a_dst_tile, mask_bias, heads, head_dim):
    """Multi-head GAT attention for one destination-row tile.

    h_bf        : [N, H*hd] bf16  transformed source features (all nodes)
    a_src_rows  : [H, N]    f32   source attention logits, lane-major
    a_dst_tile  : [tm, H]   f32   destination attention logits (this tile's rows)
    mask_bias   : [tm, N]   f32   0 where edge j->i exists (incl. self loop), -1e9 else
    returns     : [tm, H*hd] f32  per-head aggregation in concat layout (no bias)
    """
    tm = mask_bias.shape[0]
    fo = heads * head_dim
    col = lax.broadcasted_iota(jnp.int32, (1, fo), 1)
    out = jnp.zeros((tm, fo), jnp.float32)
    # Static unroll over heads (H is small); row tiling already bounds the
    # [tm, N] score/prob temporaries.
    # TODO(synk): switch to lax.fori_loop over heads if heads grows, so only one
    # head's [tm, N] temporaries are live at a time.
    for k in range(heads):
        s = a_dst_tile[:, k:k + 1] + a_src_rows[k:k + 1, :]            # [tm, N]
        s = jnp.maximum(s, _NEG_SLOPE * s) + mask_bias                 # leaky_relu (2 VPU ops)
        m = jnp.max(s, axis=-1, keepdims=True)
        p = jnp.exp(s - m)                                             # f32 softmax math
        denom = jnp.sum(p, axis=-1, keepdims=True)
        # Deferred normalization: unnormalized matmul over the lane-dense slab,
        # then one exact divide (parity with the PyTorch reference).
        agg = jnp.dot(p.astype(jnp.bfloat16), h_bf,
                      preferred_element_type=jnp.float32)              # [tm, fo]
        agg = agg / denom
        if heads == 1:
            out = agg
        else:
            head_mask = (col >= k * head_dim) & (col < (k + 1) * head_dim)
            out = out + agg * head_mask.astype(jnp.float32)
    return out


def _gat_layer_kernel(x_ref, xt_ref, xtile_ref, mask_ref,
                      wt_ref, aspt_ref, adp_ref, b_ref, out_ref,
                      *, heads, head_dim, apply_relu):
    x_all = x_ref[...].astype(jnp.bfloat16)         # [N, F]   all source nodes
    x_t = xt_ref[...].astype(jnp.bfloat16)          # [F, N]   transposed features
    x_tile = xtile_ref[...].astype(jnp.bfloat16)    # [tm, F]  this tile's dest rows
    mask_bias = mask_ref[...].astype(jnp.float32)   # [tm, N]  bf16 in HBM -> f32

    # Source-side feature transform (bf16 MXU, f32 accumulate).
    h_bf = jnp.dot(x_all, wt_ref[...],
                   preferred_element_type=jnp.float32).astype(jnp.bfloat16)       # [N, fo]
    # Folded attention projections: a_src produced lane-major ([H, N]) so no
    # in-kernel relayout is needed; a_dst only for this tile's rows.
    a_src_rows = jnp.dot(aspt_ref[...], x_t, preferred_element_type=jnp.float32)   # [H, N]
    a_dst_tile = jnp.dot(x_tile, adp_ref[...], preferred_element_type=jnp.float32)  # [tm, H]

    out = _attention_aggregate(h_bf, a_src_rows, a_dst_tile, mask_bias,
                               heads, head_dim) + b_ref[...]
    if apply_relu:
        out = jnp.maximum(out, 0.0)
    out_ref[...] = out


def _gat3_mlp_kernel(x2_ref, x2t_ref, x2tile_ref, mask_ref,
                     w3t_ref, asp3t_ref, adp3_ref, b3_ref,
                     mw1a_ref, mw1b_ref, mb1_ref, mw2t_ref, mb2_ref, out_ref,
                     *, out_dim):
    x2_all = x2_ref[...].astype(jnp.bfloat16)        # [N, F2]
    x2_t = x2t_ref[...].astype(jnp.bfloat16)         # [F2, N]
    x2_tile = x2tile_ref[...].astype(jnp.bfloat16)   # [tm, F2] hoisted cast (gat3 + MLP)
    mask_bias = mask_ref[...].astype(jnp.float32)    # [tm, N]

    # gat3 (single head, concat=False)
    h_bf = jnp.dot(x2_all, w3t_ref[...],
                   preferred_element_type=jnp.float32).astype(jnp.bfloat16)        # [N, out_dim]
    a_src_rows = jnp.dot(asp3t_ref[...], x2_t, preferred_element_type=jnp.float32)  # [1, N]
    a_dst_tile = jnp.dot(x2_tile, adp3_ref[...], preferred_element_type=jnp.float32)  # [tm, 1]
    x3 = _attention_aggregate(h_bf, a_src_rows, a_dst_tile, mask_bias,
                              heads=1, head_dim=out_dim) + b3_ref[...]
    # dropout1: eval-mode identity.

    # MLP on cat([x2_tile, x3], -1) without materializing the concat:
    # fc1 weight split into two row blocks -> two partial matmuls into one acc.
    hm = (jnp.dot(x2_tile, mw1a_ref[...], preferred_element_type=jnp.float32)
          + jnp.dot(x3.astype(jnp.bfloat16), mw1b_ref[...],
                    preferred_element_type=jnp.float32)
          + mb1_ref[...])
    hm = jnp.maximum(hm, 0.0)
    out_ref[...] = (jnp.dot(hm.astype(jnp.bfloat16), mw2t_ref[...],
                            preferred_element_type=jnp.float32) + mb2_ref[...])


# ----------------------------------------------------------------------------
# Wrapper: layout prep (JAX glue) + row-tiled pallas_calls
# ----------------------------------------------------------------------------
def _row_tile(n, cap=128):
    """Row-tile size: a multiple of 8 dividing N (capped) so stores are unmasked
    and per-step [tm, N] score/prob buffers stay within VMEM (cap re-derived
    for v7x's 64 MiB: heads * 2 * tm * N * 4B must stay well under the limit)."""
    if n % 8 != 0:
        return n                      # tiny / ragged graphs: single full block
    tm = 8
    while tm * 2 <= min(cap, n // 2) and n % (tm * 2) == 0:
        tm *= 2
    return tm


_COMPILER_PARAMS = pltpu.CompilerParams(
    dimension_semantics=("parallel",),        # row tiles are independent
    vmem_limit_bytes=48 * 1024 * 1024,        # explicit scoped limit (fits v7x 64 MiB)
)


def _gat_layer_call(x, xt, mask_bf, wt, aspt, adp, b, *, heads, head_dim, apply_relu):
    n, f_in = x.shape
    fo = heads * head_dim
    tm = _row_tile(n)
    grid_n = pl.cdiv(n, tm)
    kernel = functools.partial(_gat_layer_kernel, heads=heads, head_dim=head_dim,
                               apply_relu=apply_relu)
    cost = pl.CostEstimate(
        flops=int(2 * n * f_in * fo * grid_n          # h recomputed per tile
                  + 2 * heads * f_in * n * grid_n     # a_src rows per tile
                  + 2 * n * f_in * heads              # a_dst
                  + heads * n * n * (2 * fo + 6)),    # scores + softmax + p @ h
        transcendentals=int(heads * n * n),
        bytes_accessed=int(2 * n * n                  # bf16 mask
                           + 4 * n * f_in * (2 * grid_n + 1)
                           + 2 * f_in * (fo + 2 * heads)
                           + 4 * n * fo),
    )
    return pl.pallas_call(
        kernel,
        out_shape=jax.ShapeDtypeStruct((n, fo), jnp.float32),
        grid=(grid_n,),
        in_specs=[
            pl.BlockSpec((n, f_in), lambda i: (0, 0)),       # x resident (sources)
            pl.BlockSpec((f_in, n), lambda i: (0, 0)),       # x^T resident (lane-major a_src)
            pl.BlockSpec((tm, f_in), lambda i: (i, 0)),      # x row tile (destinations)
            pl.BlockSpec((tm, n), lambda i: (i, 0)),         # bf16 mask row tile
            pl.BlockSpec((f_in, fo), lambda i: (0, 0)),      # W^T
            pl.BlockSpec((heads, f_in), lambda i: (0, 0)),   # folded a_src proj
            pl.BlockSpec((f_in, heads), lambda i: (0, 0)),   # folded a_dst proj
            pl.BlockSpec((1, fo), lambda i: (0, 0)),         # bias
        ],
        out_specs=pl.BlockSpec((tm, fo), lambda i: (i, 0)),
        compiler_params=_COMPILER_PARAMS,
        cost_estimate=cost,
    )(x, xt, x, mask_bf, wt, aspt, adp, b)


def _gat3_mlp_call(x2, x2t, mask_bf, w3t, asp3t, adp3, b3,
                   mw1a, mw1b, mb1, mw2t, mb2, *, out_dim):
    n, f2 = x2.shape
    tm = _row_tile(n)
    grid_n = pl.cdiv(n, tm)
    kernel = functools.partial(_gat3_mlp_kernel, out_dim=out_dim)
    cost = pl.CostEstimate(
        flops=int(2 * n * f2 * out_dim * grid_n + 2 * n * f2 * grid_n + 2 * n * f2
                  + n * n * (2 * out_dim + 6)
                  + 2 * n * (f2 + out_dim) * out_dim + 2 * n * out_dim * out_dim),
        transcendentals=int(n * n),
        bytes_accessed=int(2 * n * n + 4 * n * f2 * (2 * grid_n + 1)
                           + 2 * (f2 * out_dim + 2 * f2
                                  + (f2 + out_dim) * out_dim + out_dim * out_dim)
                           + 4 * n * out_dim),
    )
    return pl.pallas_call(
        kernel,
        out_shape=jax.ShapeDtypeStruct((n, out_dim), jnp.float32),
        grid=(grid_n,),
        in_specs=[
            pl.BlockSpec((n, f2), lambda i: (0, 0)),              # x2 resident
            pl.BlockSpec((f2, n), lambda i: (0, 0)),              # x2^T resident
            pl.BlockSpec((tm, f2), lambda i: (i, 0)),             # x2 row tile
            pl.BlockSpec((tm, n), lambda i: (i, 0)),              # bf16 mask row tile
            pl.BlockSpec((f2, out_dim), lambda i: (0, 0)),        # W3^T
            pl.BlockSpec((1, f2), lambda i: (0, 0)),              # folded a_src proj
            pl.BlockSpec((f2, 1), lambda i: (0, 0)),              # folded a_dst proj
            pl.BlockSpec((1, out_dim), lambda i: (0, 0)),         # gat3 bias
            pl.BlockSpec((f2, out_dim), lambda i: (0, 0)),        # fc1 rows for x2
            pl.BlockSpec((out_dim, out_dim), lambda i: (0, 0)),   # fc1 rows for x3
            pl.BlockSpec((1, out_dim), lambda i: (0, 0)),         # fc1 bias
            pl.BlockSpec((out_dim, out_dim), lambda i: (0, 0)),   # fc2^T
            pl.BlockSpec((1, out_dim), lambda i: (0, 0)),         # fc2 bias
        ],
        out_specs=pl.BlockSpec((tm, out_dim), lambda i: (i, 0)),
        compiler_params=_COMPILER_PARAMS,
        cost_estimate=cost,
    )(x2, x2t, x2, mask_bf, w3t, asp3t, adp3, b3, mw1a, mw1b, mb1, mw2t, mb2)


def _prep_gat_weights(w, a_src, a_dst, heads, head_dim):
    """Pre-transpose W and fold attention vectors: alpha = a . (x W^T) = x . (W^T a)."""
    f_in = w.shape[-1]
    wr = w.reshape(heads, head_dim, f_in)                              # [H, hd, F]
    aspt = jnp.einsum("khf,kh->kf", wr, a_src).astype(jnp.bfloat16)    # [H, F]
    adp = jnp.einsum("khf,kh->fk", wr, a_dst).astype(jnp.bfloat16)     # [F, H]
    wt = jnp.transpose(w).astype(jnp.bfloat16)                         # [F, H*hd]
    return wt, aspt, adp


def build_adj(edge_index, num_nodes):
    """Dense adjacency with self-loops: adj[i, j] = 1 iff edge (src=j, dst=i)."""
    src = edge_index[0]
    dst = edge_index[1]
    adj = jnp.zeros((num_nodes, num_nodes), jnp.float32)
    adj = adj.at[dst, src].set(1.0)
    adj = jnp.maximum(adj, jnp.eye(num_nodes, dtype=jnp.float32))
    return adj


def rcaid_gat_forward(params, x, edge_index):
    """Forward pass of RCaidGAT (eval mode)."""
    n = x.shape[0]
    heads = params["heads"]
    hid_dim = params["hid_dim"]
    out_dim = params["out_dim"]
    h4 = heads * hid_dim

    adj = build_adj(edge_index, n)
    # The only O(N^2) input: ship as bf16 (0 / -1e9 both representable).
    mask_bias = jnp.where(adj > 0.0, 0.0, -1e9).astype(jnp.bfloat16)

    w1t, asp1t, adp1 = _prep_gat_weights(params["w1"], params["as1"], params["ad1"],
                                         heads, hid_dim)
    w2t, asp2t, adp2 = _prep_gat_weights(params["w2"], params["as2"], params["ad2"],
                                         heads, hid_dim)
    w3t, asp3t, adp3 = _prep_gat_weights(params["w3"], params["as3"], params["ad3"],
                                         1, out_dim)

    mlp_w1t = jnp.transpose(params["mlp_w1"])                 # [h4+out_dim, out_dim]
    mw1a = mlp_w1t[:h4].astype(jnp.bfloat16)                  # multiplies x2
    mw1b = mlp_w1t[h4:].astype(jnp.bfloat16)                  # multiplies x3
    mw2t = jnp.transpose(params["mlp_w2"]).astype(jnp.bfloat16)

    # gat1 -> relu
    x1 = _gat_layer_call(x, jnp.transpose(x), mask_bias, w1t, asp1t, adp1,
                         params["b1"], heads=heads, head_dim=hid_dim, apply_relu=True)
    # gat2 -> relu
    x2 = _gat_layer_call(x1, jnp.transpose(x1), mask_bias, w2t, asp2t, adp2,
                         params["b2"], heads=heads, head_dim=hid_dim, apply_relu=True)
    # gat3 (heads=1, concat=False) -> dropout (eval identity) -> MLP on cat([x2, x3])
    out = _gat3_mlp_call(x2, jnp.transpose(x2), mask_bias, w3t, asp3t, adp3,
                         params["b3"], mw1a, mw1b, params["mlp_b1"], mw2t,
                         params["mlp_b2"], out_dim=out_dim)
    return {"h": out}


# ----------------------------------------------------------------------------
# Deterministic parameter initialization (shapes follow the PyTorch __init__)
# ----------------------------------------------------------------------------
def init_params(key, in_dim, hid_dim, out_dim, num_heads):
    ks = jax.random.split(key, 16)

    def glorot(k, shape):
        fan_in = shape[-1]
        fan_out = shape[0]
        lim = (6.0 / (fan_in + fan_out)) ** 0.5
        return jax.random.uniform(k, shape, jnp.float32, -lim, lim)

    h4 = hid_dim * num_heads
    return {
        "heads": num_heads, "hid_dim": hid_dim, "out_dim": out_dim,
        # gat1: in_dim -> hid_dim, H heads, concat
        "w1": glorot(ks[0], (h4, in_dim)),
        "as1": glorot(ks[1], (num_heads, hid_dim)),
        "ad1": glorot(ks[2], (num_heads, hid_dim)),
        "b1": jnp.zeros((1, h4), jnp.float32),
        # gat2: h4 -> hid_dim, H heads, concat
        "w2": glorot(ks[3], (h4, h4)),
        "as2": glorot(ks[4], (num_heads, hid_dim)),
        "ad2": glorot(ks[5], (num_heads, hid_dim)),
        "b2": jnp.zeros((1, h4), jnp.float32),
        # gat3: h4 -> out_dim, 1 head, concat=False
        "w3": glorot(ks[6], (out_dim, h4)),
        "as3": glorot(ks[7], (1, out_dim)),
        "ad3": glorot(ks[8], (1, out_dim)),
        "b3": jnp.zeros((1, out_dim), jnp.float32),
        # MLP: (h4 + out_dim) -> out_dim -> out_dim
        "mlp_w1": glorot(ks[9], (out_dim, h4 + out_dim)),
        "mlp_b1": jnp.zeros((1, out_dim), jnp.float32),
        "mlp_w2": glorot(ks[10], (out_dim, out_dim)),
        "mlp_b2": jnp.zeros((1, out_dim), jnp.float32),
    }


# ----------------------------------------------------------------------------
if __name__ == "__main__":
    key = jax.random.PRNGKey(0)
    k_x, k_e, k_p = jax.random.split(key, 3)

    # Small synthetic graph: 16 nodes, in_dim=16, hid_dim=8, out_dim=16, 4 heads.
    num_nodes, in_dim, hid_dim, out_dim, num_heads = 16, 16, 8, 16, 4
    num_edges = 32

    x = jax.random.normal(k_x, (num_nodes, in_dim), jnp.float32)
    edge_index = jax.random.randint(k_e, (2, num_edges), 0, num_nodes, jnp.int32)
    params = init_params(k_p, in_dim, hid_dim, out_dim, num_heads)

    fwd = jax.jit(lambda xx, ei: rcaid_gat_forward(params, xx, ei))
    out = fwd(x, edge_index)
    jax.block_until_ready(out["h"])

    assert out["h"].shape == (num_nodes, out_dim)
    assert bool(jnp.all(jnp.isfinite(out["h"])))
    print("KERNEL_OK")
</pallas_src>

<mosaic_0001>
module attributes {stable_mosaic.version = 11 : i64} {
  func.func @_gat_layer_kernel(%arg0: i32, %arg1: memref<16x16xf32, #tpu.memory_space<vmem>>, %arg2: memref<16x16xf32, #tpu.memory_space<vmem>>, %arg3: memref<8x16xf32, #tpu.memory_space<vmem>>, %arg4: memref<8x16xbf16, #tpu.memory_space<vmem>>, %arg5: memref<16x32xbf16, #tpu.memory_space<vmem>>, %arg6: memref<4x16xbf16, #tpu.memory_space<vmem>>, %arg7: memref<16x4xbf16, #tpu.memory_space<vmem>>, %arg8: memref<1x32xf32, #tpu.memory_space<vmem>>, %arg9: memref<8x32xf32, #tpu.memory_space<vmem>>) attributes {dimension_semantics = [#tpu.dimension_semantics<parallel>], iteration_bounds = array<i64: 2>, scalar_prefetch = 0 : i64, scratch_operands = 0 : i64, tpu.core_type = #tpu.core_type<tc>, window_params = [{pipeline_mode = #tpu.pipeline_mode<synchronous>, transform_indices = @transform_0, window_bounds = array<i64: 16, 16>}, {pipeline_mode = #tpu.pipeline_mode<synchronous>, transform_indices = @transform_1, window_bounds = array<i64: 16, 16>}, {transform_indices = @transform_2, window_bounds = array<i64: 8, 16>}, {transform_indices = @transform_3, window_bounds = array<i64: 8, 16>}, {pipeline_mode = #tpu.pipeline_mode<synchronous>, transform_indices = @transform_4, window_bounds = array<i64: 16, 32>}, {pipeline_mode = #tpu.pipeline_mode<synchronous>, transform_indices = @transform_5, window_bounds = array<i64: 4, 16>}, {pipeline_mode = #tpu.pipeline_mode<synchronous>, transform_indices = @transform_6, window_bounds = array<i64: 16, 4>}, {pipeline_mode = #tpu.pipeline_mode<synchronous>, transform_indices = @transform_7, window_bounds = array<i64: 1, 32>}, {transform_indices = @transform_8, window_bounds = array<i64: 8, 32>}]} {
    %c0 = arith.constant 0 : index
    %c0_0 = arith.constant 0 : index
    %0 = vector.load %arg1[%c0, %c0_0] : memref<16x16xf32, #tpu.memory_space<vmem>>, vector<16x16xf32>
    %1 = arith.truncf %0 : vector<16x16xf32> to vector<16x16xbf16>
    %c0_1 = arith.constant 0 : index
    %c0_2 = arith.constant 0 : index
    %2 = vector.load %arg2[%c0_1, %c0_2] : memref<16x16xf32, #tpu.memory_space<vmem>>, vector<16x16xf32>
    %3 = arith.truncf %2 : vector<16x16xf32> to vector<16x16xbf16>
    %c0_3 = arith.constant 0 : index
    %c0_4 = arith.constant 0 : index
    %4 = vector.load %arg3[%c0_3, %c0_4] : memref<8x16xf32, #tpu.memory_space<vmem>>, vector<8x16xf32>
    %5 = arith.truncf %4 : vector<8x16xf32> to vector<8x16xbf16>
    %c0_5 = arith.constant 0 : index
    %c0_6 = arith.constant 0 : index
    %6 = vector.load %arg4[%c0_5, %c0_6] : memref<8x16xbf16, #tpu.memory_space<vmem>>, vector<8x16xbf16>
    %7 = arith.extf %6 : vector<8x16xbf16> to vector<8x16xf32>
    %c0_7 = arith.constant 0 : index
    %c0_8 = arith.constant 0 : index
    %8 = vector.load %arg5[%c0_7, %c0_8] : memref<16x32xbf16, #tpu.memory_space<vmem>>, vector<16x32xbf16>
    %cst = arith.constant dense<0.000000e+00> : vector<16x32xf32>
    %9 = tpu.matmul %1, %8, %cst {dimension_numbers = #tpu.dot_dimension_numbers<[1], [0], [0], [1], [0, 0, 1, 1], [], []>} : vector<16x16xbf16>, vector<16x32xbf16>, vector<16x32xf32> -> vector<16x32xf32>
    %10 = arith.truncf %9 : vector<16x32xf32> to vector<16x32xbf16>
    %c0_9 = arith.constant 0 : index
    %c0_10 = arith.constant 0 : index
    %11 = vector.load %arg6[%c0_9, %c0_10] : memref<4x16xbf16, #tpu.memory_space<vmem>>, vector<4x16xbf16>
    %cst_11 = arith.constant dense<0.000000e+00> : vector<4x16xf32>
    %12 = tpu.matmul %11, %3, %cst_11 {dimension_numbers = #tpu.dot_dimension_numbers<[1], [0], [0], [1], [0, 0, 1, 1], [], []>} : vector<4x16xbf16>, vector<16x16xbf16>, vector<4x16xf32> -> vector<4x16xf32>
    %c0_12 = arith.constant 0 : index
    %c0_13 = arith.constant 0 : index
    %13 = vector.load %arg7[%c0_12, %c0_13] : memref<16x4xbf16, #tpu.memory_space<vmem>>, vector<16x4xbf16>
    %cst_14 = arith.constant dense<0.000000e+00> : vector<8x4xf32>
    %14 = tpu.matmul %5, %13, %cst_14 {dimension_numbers = #tpu.dot_dimension_numbers<[1], [0], [0], [1], [0, 0, 1, 1], [], []>} : vector<8x16xbf16>, vector<16x4xbf16>, vector<8x4xf32> -> vector<8x4xf32>
    %15 = tpu.iota {dimensions = array<i32: 1>} : vector<1x32xi32>
    %cst_15 = arith.constant 0.000000e+00 : f32
    %16 = vector.broadcast %cst_15 : f32 to vector<8x32xf32>
    %17 = vector.extract_strided_slice %14 {offsets = [0, 0], sizes = [8, 1], strides = [1, 1]} : vector<8x4xf32> to vector<8x1xf32>
    %18 = vector.extract_strided_slice %12 {offsets = [0, 0], sizes = [1, 16], strides = [1, 1]} : vector<4x16xf32> to vector<1x16xf32>
    %19 = vector.broadcast %17 : vector<8x1xf32> to vector<8x16xf32>
    %20 = vector.broadcast %18 : vector<1x16xf32> to vector<8x16xf32>
    %21 = arith.addf %19, %20 : vector<8x16xf32>
    %cst_16 = arith.constant 2.000000e-01 : f32
    %22 = vector.broadcast %cst_16 : f32 to vector<8x16xf32>
    %23 = arith.mulf %22, %21 : vector<8x16xf32>
    %24 = arith.maximumf %21, %23 : vector<8x16xf32>
    %25 = arith.addf %24, %7 : vector<8x16xf32>
    %cst_17 = arith.constant dense<0xFF800000> : vector<8xf32>
    %26 = vector.multi_reduction <maximumf>, %25, %cst_17 [1] : vector<8x16xf32> to vector<8xf32>
    %27 = vector.shape_cast %26 : vector<8xf32> to vector<8x1xf32>
    %28 = vector.broadcast %27 : vector<8x1xf32> to vector<8x16xf32>
    %29 = arith.subf %25, %28 : vector<8x16xf32>
    %30 = math.exp %29 : vector<8x16xf32>
    %cst_18 = arith.constant dense<0.000000e+00> : vector<8xf32>
    %31 = vector.multi_reduction <add>, %30, %cst_18 [1] : vector<8x16xf32> to vector<8xf32>
    %32 = vector.shape_cast %31 : vector<8xf32> to vector<8x1xf32>
    %33 = arith.truncf %30 : vector<8x16xf32> to vector<8x16xbf16>
    %cst_19 = arith.constant dense<0.000000e+00> : vector<8x32xf32>
    %34 = tpu.matmul %33, %10, %cst_19 {dimension_numbers = #tpu.dot_dimension_numbers<[1], [0], [0], [1], [0, 0, 1, 1], [], []>} : vector<8x16xbf16>, vector<16x32xbf16>, vector<8x32xf32> -> vector<8x32xf32>
    %35 = vector.broadcast %32 : vector<8x1xf32> to vector<8x32xf32>
    %36 = arith.divf %34, %35 : vector<8x32xf32>
    %c0_i32 = arith.constant 0 : i32
    %37 = vector.broadcast %c0_i32 : i32 to vector<1x32xi32>
    %38 = arith.cmpi sge, %15, %37 : vector<1x32xi32>
    %c8_i32 = arith.constant 8 : i32
    %39 = vector.broadcast %c8_i32 : i32 to vector<1x32xi32>
    %40 = arith.cmpi slt, %15, %39 : vector<1x32xi32>
    %41 = arith.andi %38, %40 : vector<1x32xi1>
    %42 = arith.extui %41 : vector<1x32xi1> to vector<1x32xi32>
    %43 = arith.sitofp %42 : vector<1x32xi32> to vector<1x32xf32>
    %44 = vector.broadcast %43 : vector<1x32xf32> to vector<8x32xf32>
    %45 = arith.mulf %36, %44 : vector<8x32xf32>
    %46 = arith.addf %16, %45 : vector<8x32xf32>
    %47 = vector.extract_strided_slice %14 {offsets = [0, 1], sizes = [8, 1], strides = [1, 1]} : vector<8x4xf32> to vector<8x1xf32>
    %48 = vector.extract_strided_slice %12 {offsets = [1, 0], sizes = [1, 16], strides = [1, 1]} : vector<4x16xf32> to vector<1x16xf32>
    %49 = vector.broadcast %47 : vector<8x1xf32> to vector<8x16xf32>
    %50 = vector.broadcast %48 : vector<1x16xf32> to vector<8x16xf32>
    %51 = arith.addf %49, %50 : vector<8x16xf32>
    %cst_20 = arith.constant 2.000000e-01 : f32
    %52 = vector.broadcast %cst_20 : f32 to vector<8x16xf32>
    %53 = arith.mulf %52, %51 : vector<8x16xf32>
    %54 = arith.maximumf %51, %53 : vector<8x16xf32>
    %55 = arith.addf %54, %7 : vector<8x16xf32>
    %cst_21 = arith.constant dense<0xFF800000> : vector<8xf32>
    %56 = vector.multi_reduction <maximumf>, %55, %cst_21 [1] : vector<8x16xf32> to vector<8xf32>
    %57 = vector.shape_cast %56 : vector<8xf32> to vector<8x1xf32>
    %58 = vector.broadcast %57 : vector<8x1xf32> to vector<8x16xf32>
    %59 = arith.subf %55, %58 : vector<8x16xf32>
    %60 = math.exp %59 : vector<8x16xf32>
    %cst_22 = arith.constant dense<0.000000e+00> : vector<8xf32>
    %61 = vector.multi_reduction <add>, %60, %cst_22 [1] : vector<8x16xf32> to vector<8xf32>
    %62 = vector.shape_cast %61 : vector<8xf32> to vector<8x1xf32>
    %63 = arith.truncf %60 : vector<8x16xf32> to vector<8x16xbf16>
    %cst_23 = arith.constant dense<0.000000e+00> : vector<8x32xf32>
    %64 = tpu.matmul %63, %10, %cst_23 {dimension_numbers = #tpu.dot_dimension_numbers<[1], [0], [0], [1], [0, 0, 1, 1], [], []>} : vector<8x16xbf16>, vector<16x32xbf16>, vector<8x32xf32> -> vector<8x32xf32>
    %65 = vector.broadcast %62 : vector<8x1xf32> to vector<8x32xf32>
    %66 = arith.divf %64, %65 : vector<8x32xf32>
    %c8_i32_24 = arith.constant 8 : i32
    %67 = vector.broadcast %c8_i32_24 : i32 to vector<1x32xi32>
    %68 = arith.cmpi sge, %15, %67 : vector<1x32xi32>
    %c16_i32 = arith.constant 16 : i32
    %69 = vector.broadcast %c16_i32 : i32 to vector<1x32xi32>
    %70 = arith.cmpi slt, %15, %69 : vector<1x32xi32>
    %71 = arith.andi %68, %70 : vector<1x32xi1>
    %72 = arith.extui %71 : vector<1x32xi1> to vector<1x32xi32>
    %73 = arith.sitofp %72 : vector<1x32xi32> to vector<1x32xf32>
    %74 = vector.broadcast %73 : vector<1x32xf32> to vector<8x32xf32>
    %75 = arith.mulf %66, %74 : vector<8x32xf32>
    %76 = arith.addf %46, %75 : vector<8x32xf32>
    %77 = vector.extract_strided_slice %14 {offsets = [0, 2], sizes = [8, 1], strides = [1, 1]} : vector<8x4xf32> to vector<8x1xf32>
    %78 = vector.extract_strided_slice %12 {offsets = [2, 0], sizes = [1, 16], strides = [1, 1]} : vector<4x16xf32> to vector<1x16xf32>
    %79 = vector.broadcast %77 : vector<8x1xf32> to vector<8x16xf32>
    %80 = vector.broadcast %78 : vector<1x16xf32> to vector<8x16xf32>
    %81 = arith.addf %79, %80 : vector<8x16xf32>
    %cst_25 = arith.constant 2.000000e-01 : f32
    %82 = vector.broadcast %cst_25 : f32 to vector<8x16xf32>
    %83 = arith.mulf %82, %81 : vector<8x16xf32>
    %84 = arith.maximumf %81, %83 : vector<8x16xf32>
    %85 = arith.addf %84, %7 : vector<8x16xf32>
    %cst_26 = arith.constant dense<0xFF800000> : vector<8xf32>
    %86 = vector.multi_reduction <maximumf>, %85, %cst_26 [1] : vector<8x16xf32> to vector<8xf32>
    %87 = vector.shape_cast %86 : vector<8xf32> to vector<8x1xf32>
    %88 = vector.broadcast %87 : vector<8x1xf32> to vector<8x16xf32>
    %89 = arith.subf %85, %88 : vector<8x16xf32>
    %90 = math.exp %89 : vector<8x16xf32>
    %cst_27 = arith.constant dense<0.000000e+00> : vector<8xf32>
    %91 = vector.multi_reduction <add>, %90, %cst_27 [1] : vector<8x16xf32> to vector<8xf32>
    %92 = vector.shape_cast %91 : vector<8xf32> to vector<8x1xf32>
    %93 = arith.truncf %90 : vector<8x16xf32> to vector<8x16xbf16>
    %cst_28 = arith.constant dense<0.000000e+00> : vector<8x32xf32>
    %94 = tpu.matmul %93, %10, %cst_28 {dimension_numbers = #tpu.dot_dimension_numbers<[1], [0], [0], [1], [0, 0, 1, 1], [], []>} : vector<8x16xbf16>, vector<16x32xbf16>, vector<8x32xf32> -> vector<8x32xf32>
    %95 = vector.broadcast %92 : vector<8x1xf32> to vector<8x32xf32>
    %96 = arith.divf %94, %95 : vector<8x32xf32>
    %c16_i32_29 = arith.constant 16 : i32
    %97 = vector.broadcast %c16_i32_29 : i32 to vector<1x32xi32>
    %98 = arith.cmpi sge, %15, %97 : vector<1x32xi32>
    %c24_i32 = arith.constant 24 : i32
    %99 = vector.broadcast %c24_i32 : i32 to vector<1x32xi32>
    %100 = arith.cmpi slt, %15, %99 : vector<1x32xi32>
    %101 = arith.andi %98, %100 : vector<1x32xi1>
    %102 = arith.extui %101 : vector<1x32xi1> to vector<1x32xi32>
    %103 = arith.sitofp %102 : vector<1x32xi32> to vector<1x32xf32>
    %104 = vector.broadcast %103 : vector<1x32xf32> to vector<8x32xf32>
    %105 = arith.mulf %96, %104 : vector<8x32xf32>
    %106 = arith.addf %76, %105 : vector<8x32xf32>
    %107 = vector.extract_strided_slice %14 {offsets = [0, 3], sizes = [8, 1], strides = [1, 1]} : vector<8x4xf32> to vector<8x1xf32>
    %108 = vector.extract_strided_slice %12 {offsets = [3, 0], sizes = [1, 16], strides = [1, 1]} : vector<4x16xf32> to vector<1x16xf32>
    %109 = vector.broadcast %107 : vector<8x1xf32> to vector<8x16xf32>
    %110 = vector.broadcast %108 : vector<1x16xf32> to vector<8x16xf32>
    %111 = arith.addf %109, %110 : vector<8x16xf32>
    %cst_30 = arith.constant 2.000000e-01 : f32
    %112 = vector.broadcast %cst_30 : f32 to vector<8x16xf32>
    %113 = arith.mulf %112, %111 : vector<8x16xf32>
    %114 = arith.maximumf %111, %113 : vector<8x16xf32>
    %115 = arith.addf %114, %7 : vector<8x16xf32>
    %cst_31 = arith.constant dense<0xFF800000> : vector<8xf32>
    %116 = vector.multi_reduction <maximumf>, %115, %cst_31 [1] : vector<8x16xf32> to vector<8xf32>
    %117 = vector.shape_cast %116 : vector<8xf32> to vector<8x1xf32>
    %118 = vector.broadcast %117 : vector<8x1xf32> to vector<8x16xf32>
    %119 = arith.subf %115, %118 : vector<8x16xf32>
    %120 = math.exp %119 : vector<8x16xf32>
    %cst_32 = arith.constant dense<0.000000e+00> : vector<8xf32>
    %121 = vector.multi_reduction <add>, %120, %cst_32 [1] : vector<8x16xf32> to vector<8xf32>
    %122 = vector.shape_cast %121 : vector<8xf32> to vector<8x1xf32>
    %123 = arith.truncf %120 : vector<8x16xf32> to vector<8x16xbf16>
    %cst_33 = arith.constant dense<0.000000e+00> : vector<8x32xf32>
    %124 = tpu.matmul %123, %10, %cst_33 {dimension_numbers = #tpu.dot_dimension_numbers<[1], [0], [0], [1], [0, 0, 1, 1], [], []>} : vector<8x16xbf16>, vector<16x32xbf16>, vector<8x32xf32> -> vector<8x32xf32>
    %125 = vector.broadcast %122 : vector<8x1xf32> to vector<8x32xf32>
    %126 = arith.divf %124, %125 : vector<8x32xf32>
    %c24_i32_34 = arith.constant 24 : i32
    %127 = vector.broadcast %c24_i32_34 : i32 to vector<1x32xi32>
    %128 = arith.cmpi sge, %15, %127 : vector<1x32xi32>
    %c32_i32 = arith.constant 32 : i32
    %129 = vector.broadcast %c32_i32 : i32 to vector<1x32xi32>
    %130 = arith.cmpi slt, %15, %129 : vector<1x32xi32>
    %131 = arith.andi %128, %130 : vector<1x32xi1>
    %132 = arith.extui %131 : vector<1x32xi1> to vector<1x32xi32>
    %133 = arith.sitofp %132 : vector<1x32xi32> to vector<1x32xf32>
    %134 = vector.broadcast %133 : vector<1x32xf32> to vector<8x32xf32>
    %135 = arith.mulf %126, %134 : vector<8x32xf32>
    %136 = arith.addf %106, %135 : vector<8x32xf32>
    %c0_35 = arith.constant 0 : index
    %c0_36 = arith.constant 0 : index
    %137 = vector.load %arg8[%c0_35, %c0_36] : memref<1x32xf32, #tpu.memory_space<vmem>>, vector<1x32xf32>
    %138 = vector.broadcast %137 : vector<1x32xf32> to vector<8x32xf32>
    %139 = arith.addf %136, %138 : vector<8x32xf32>
    %cst_37 = arith.constant 0.000000e+00 : f32
    %140 = vector.broadcast %cst_37 : f32 to vector<8x32xf32>
    %141 = arith.maximumf %139, %140 : vector<8x32xf32>
    %c0_38 = arith.constant 0 : index
    %c0_39 = arith.constant 0 : index
    %142 = vector.load %arg9[%c0_38, %c0_39] : memref<8x32xf32, #tpu.memory_space<vmem>>, vector<8x32xf32>
    tpu.vector_store %arg9[%c0_38, %c0_39], %141 {strides = array<i32>} : memref<8x32xf32, #tpu.memory_space<vmem>>, vector<8x32xf32>,
    return
  }
  func.func @transform_0(%arg0: i32) -> (i32, i32) {
    %c0_i32 = arith.constant 0 : i32
    %c0_i32_0 = arith.constant 0 : i32
    %c0_i32_1 = arith.constant 0 : i32
    return %c0_i32, %c0_i32_0 : i32, i32
  }
  func.func @transform_1(%arg0: i32) -> (i32, i32) {
    %c0_i32 = arith.constant 0 : i32
    %c0_i32_0 = arith.constant 0 : i32
    %c0_i32_1 = arith.constant 0 : i32
    return %c0_i32, %c0_i32_0 : i32, i32
  }
  func.func @transform_2(%arg0: i32) -> (i32, i32) {
    %c0_i32 = arith.constant 0 : i32
    %c0_i32_0 = arith.constant 0 : i32
    return %arg0, %c0_i32 : i32, i32
  }
  func.func @transform_3(%arg0: i32) -> (i32, i32) {
    %c0_i32 = arith.constant 0 : i32
    %c0_i32_0 = arith.constant 0 : i32
    return %arg0, %c0_i32 : i32, i32
  }
  func.func @transform_4(%arg0: i32) -> (i32, i32) {
    %c0_i32 = arith.constant 0 : i32
    %c0_i32_0 = arith.constant 0 : i32
    %c0_i32_1 = arith.constant 0 : i32
    return %c0_i32, %c0_i32_0 : i32, i32
  }
  func.func @transform_5(%arg0: i32) -> (i32, i32) {
    %c0_i32 = arith.constant 0 : i32
    %c0_i32_0 = arith.constant 0 : i32
    %c0_i32_1 = arith.constant 0 : i32
    return %c0_i32, %c0_i32_0 : i32, i32
  }
  func.func @transform_6(%arg0: i32) -> (i32, i32) {
    %c0_i32 = arith.constant 0 : i32
    %c0_i32_0 = arith.constant 0 : i32
    %c0_i32_1 = arith.constant 0 : i32
    return %c0_i32, %c0_i32_0 : i32, i32
  }
  func.func @transform_7(%arg0: i32) -> (i32, i32) {
    %c0_i32 = arith.constant 0 : i32
    %c0_i32_0 = arith.constant 0 : i32
    %c0_i32_1 = arith.constant 0 : i32
    return %c0_i32, %c0_i32_0 : i32, i32
  }
  func.func @transform_8(%arg0: i32) -> (i32, i32) {
    %c0_i32 = arith.constant 0 : i32
    %c0_i32_0 = arith.constant 0 : i32
    return %arg0, %c0_i32 : i32, i32
  }
}

module attributes {stable_mosaic.version = 11 : i64} {
  func.func @_gat_layer_kernel(%arg0: i32, %arg1: memref<16x32xf32, #tpu.memory_space<vmem>>, %arg2: memref<32x16xf32, #tpu.memory_space<vmem>>, %arg3: memref<8x32xf32, #tpu.memory_space<vmem>>, %arg4: memref<8x16xbf16, #tpu.memory_space<vmem>>, %arg5: memref<32x32xbf16, #tpu.memory_space<vmem>>, %arg6: memref<4x32xbf16, #tpu.memory_space<vmem>>, %arg7: memref<32x4xbf16, #tpu.memory_space<vmem>>, %arg8: memref<1x32xf32, #tpu.memory_space<vmem>>, %arg9: memref<8x32xf32, #tpu.memory_space<vmem>>) attributes {dimension_semantics = [#tpu.dimension_semantics<parallel>], iteration_bounds = array<i64: 2>, scalar_prefetch = 0 : i64, scratch_operands = 0 : i64, tpu.core_type = #tpu.core_type<tc>, window_params = [{pipeline_mode = #tpu.pipeline_mode<synchronous>, transform_indices = @transform_0, window_bounds = array<i64: 16, 32>}, {pipeline_mode = #tpu.pipeline_mode<synchronous>, transform_indices = @transform_1, window_bounds = array<i64: 32, 16>}, {transform_indices = @transform_2, window_bounds = array<i64: 8, 32>}, {transform_indices = @transform_3, window_bounds = array<i64: 8, 16>}, {pipeline_mode = #tpu.pipeline_mode<synchronous>, transform_indices = @transform_4, window_bounds = array<i64: 32, 32>}, {pipeline_mode = #tpu.pipeline_mode<synchronous>, transform_indices = @transform_5, window_bounds = array<i64: 4, 32>}, {pipeline_mode = #tpu.pipeline_mode<synchronous>, transform_indices = @transform_6, window_bounds = array<i64: 32, 4>}, {pipeline_mode = #tpu.pipeline_mode<synchronous>, transform_indices = @transform_7, window_bounds = array<i64: 1, 32>}, {transform_indices = @transform_8, window_bounds = array<i64: 8, 32>}]} {
    %c0 = arith.constant 0 : index
    %c0_0 = arith.constant 0 : index
    %0 = vector.load %arg1[%c0, %c0_0] : memref<16x32xf32, #tpu.memory_space<vmem>>, vector<16x32xf32>
    %1 = arith.truncf %0 : vector<16x32xf32> to vector<16x32xbf16>
    %c0_1 = arith.constant 0 : index
    %c0_2 = arith.constant 0 : index
    %2 = vector.load %arg2[%c0_1, %c0_2] : memref<32x16xf32, #tpu.memory_space<vmem>>, vector<32x16xf32>
    %3 = arith.truncf %2 : vector<32x16xf32> to vector<32x16xbf16>
    %c0_3 = arith.constant 0 : index
    %c0_4 = arith.constant 0 : index
    %4 = vector.load %arg3[%c0_3, %c0_4] : memref<8x32xf32, #tpu.memory_space<vmem>>, vector<8x32xf32>
    %5 = arith.truncf %4 : vector<8x32xf32> to vector<8x32xbf16>
    %c0_5 = arith.constant 0 : index
    %c0_6 = arith.constant 0 : index
    %6 = vector.load %arg4[%c0_5, %c0_6] : memref<8x16xbf16, #tpu.memory_space<vmem>>, vector<8x16xbf16>
    %7 = arith.extf %6 : vector<8x16xbf16> to vector<8x16xf32>
    %c0_7 = arith.constant 0 : index
    %c0_8 = arith.constant 0 : index
    %8 = vector.load %arg5[%c0_7, %c0_8] : memref<32x32xbf16, #tpu.memory_space<vmem>>, vector<32x32xbf16>
    %cst = arith.constant dense<0.000000e+00> : vector<16x32xf32>
    %9 = tpu.matmul %1, %8, %cst {dimension_numbers = #tpu.dot_dimension_numbers<[1], [0], [0], [1], [0, 0, 1, 1], [], []>} : vector<16x32xbf16>, vector<32x32xbf16>, vector<16x32xf32> -> vector<16x32xf32>
    %10 = arith.truncf %9 : vector<16x32xf32> to vector<16x32xbf16>
    %c0_9 = arith.constant 0 : index
    %c0_10 = arith.constant 0 : index
    %11 = vector.load %arg6[%c0_9, %c0_10] : memref<4x32xbf16, #tpu.memory_space<vmem>>, vector<4x32xbf16>
    %cst_11 = arith.constant dense<0.000000e+00> : vector<4x16xf32>
    %12 = tpu.matmul %11, %3, %cst_11 {dimension_numbers = #tpu.dot_dimension_numbers<[1], [0], [0], [1], [0, 0, 1, 1], [], []>} : vector<4x32xbf16>, vector<32x16xbf16>, vector<4x16xf32> -> vector<4x16xf32>
    %c0_12 = arith.constant 0 : index
    %c0_13 = arith.constant 0 : index
    %13 = vector.load %arg7[%c0_12, %c0_13] : memref<32x4xbf16, #tpu.memory_space<vmem>>, vector<32x4xbf16>
    %cst_14 = arith.constant dense<0.000000e+00> : vector<8x4xf32>
    %14 = tpu.matmul %5, %13, %cst_14 {dimension_numbers = #tpu.dot_dimension_numbers<[1], [0], [0], [1], [0, 0, 1, 1], [], []>} : vector<8x32xbf16>, vector<32x4xbf16>, vector<8x4xf32> -> vector<8x4xf32>
    %15 = tpu.iota {dimensions = array<i32: 1>} : vector<1x32xi32>
    %cst_15 = arith.constant 0.000000e+00 : f32
    %16 = vector.broadcast %cst_15 : f32 to vector<8x32xf32>
    %17 = vector.extract_strided_slice %14 {offsets = [0, 0], sizes = [8, 1], strides = [1, 1]} : vector<8x4xf32> to vector<8x1xf32>
    %18 = vector.extract_strided_slice %12 {offsets = [0, 0], sizes = [1, 16], strides = [1, 1]} : vector<4x16xf32> to vector<1x16xf32>
    %19 = vector.broadcast %17 : vector<8x1xf32> to vector<8x16xf32>
    %20 = vector.broadcast %18 : vector<1x16xf32> to vector<8x16xf32>
    %21 = arith.addf %19, %20 : vector<8x16xf32>
    %cst_16 = arith.constant 2.000000e-01 : f32
    %22 = vector.broadcast %cst_16 : f32 to vector<8x16xf32>
    %23 = arith.mulf %22, %21 : vector<8x16xf32>
    %24 = arith.maximumf %21, %23 : vector<8x16xf32>
    %25 = arith.addf %24, %7 : vector<8x16xf32>
    %cst_17 = arith.constant dense<0xFF800000> : vector<8xf32>
    %26 = vector.multi_reduction <maximumf>, %25, %cst_17 [1] : vector<8x16xf32> to vector<8xf32>
    %27 = vector.shape_cast %26 : vector<8xf32> to vector<8x1xf32>
    %28 = vector.broadcast %27 : vector<8x1xf32> to vector<8x16xf32>
    %29 = arith.subf %25, %28 : vector<8x16xf32>
    %30 = math.exp %29 : vector<8x16xf32>
    %cst_18 = arith.constant dense<0.000000e+00> : vector<8xf32>
    %31 = vector.multi_reduction <add>, %30, %cst_18 [1] : vector<8x16xf32> to vector<8xf32>
    %32 = vector.shape_cast %31 : vector<8xf32> to vector<8x1xf32>
    %33 = arith.truncf %30 : vector<8x16xf32> to vector<8x16xbf16>
    %cst_19 = arith.constant dense<0.000000e+00> : vector<8x32xf32>
    %34 = tpu.matmul %33, %10, %cst_19 {dimension_numbers = #tpu.dot_dimension_numbers<[1], [0], [0], [1], [0, 0, 1, 1], [], []>} : vector<8x16xbf16>, vector<16x32xbf16>, vector<8x32xf32> -> vector<8x32xf32>
    %35 = vector.broadcast %32 : vector<8x1xf32> to vector<8x32xf32>
    %36 = arith.divf %34, %35 : vector<8x32xf32>
    %c0_i32 = arith.constant 0 : i32
    %37 = vector.broadcast %c0_i32 : i32 to vector<1x32xi32>
    %38 = arith.cmpi sge, %15, %37 : vector<1x32xi32>
    %c8_i32 = arith.constant 8 : i32
    %39 = vector.broadcast %c8_i32 : i32 to vector<1x32xi32>
    %40 = arith.cmpi slt, %15, %39 : vector<1x32xi32>
    %41 = arith.andi %38, %40 : vector<1x32xi1>
    %42 = arith.extui %41 : vector<1x32xi1> to vector<1x32xi32>
    %43 = arith.sitofp %42 : vector<1x32xi32> to vector<1x32xf32>
    %44 = vector.broadcast %43 : vector<1x32xf32> to vector<8x32xf32>
    %45 = arith.mulf %36, %44 : vector<8x32xf32>
    %46 = arith.addf %16, %45 : vector<8x32xf32>
    %47 = vector.extract_strided_slice %14 {offsets = [0, 1], sizes = [8, 1], strides = [1, 1]} : vector<8x4xf32> to vector<8x1xf32>
    %48 = vector.extract_strided_slice %12 {offsets = [1, 0], sizes = [1, 16], strides = [1, 1]} : vector<4x16xf32> to vector<1x16xf32>
    %49 = vector.broadcast %47 : vector<8x1xf32> to vector<8x16xf32>
    %50 = vector.broadcast %48 : vector<1x16xf32> to vector<8x16xf32>
    %51 = arith.addf %49, %50 : vector<8x16xf32>
    %cst_20 = arith.constant 2.000000e-01 : f32
    %52 = vector.broadcast %cst_20 : f32 to vector<8x16xf32>
    %53 = arith.mulf %52, %51 : vector<8x16xf32>
    %54 = arith.maximumf %51, %53 : vector<8x16xf32>
    %55 = arith.addf %54, %7 : vector<8x16xf32>
    %cst_21 = arith.constant dense<0xFF800000> : vector<8xf32>
    %56 = vector.multi_reduction <maximumf>, %55, %cst_21 [1] : vector<8x16xf32> to vector<8xf32>
    %57 = vector.shape_cast %56 : vector<8xf32> to vector<8x1xf32>
    %58 = vector.broadcast %57 : vector<8x1xf32> to vector<8x16xf32>
    %59 = arith.subf %55, %58 : vector<8x16xf32>
    %60 = math.exp %59 : vector<8x16xf32>
    %cst_22 = arith.constant dense<0.000000e+00> : vector<8xf32>
    %61 = vector.multi_reduction <add>, %60, %cst_22 [1] : vector<8x16xf32> to vector<8xf32>
    %62 = vector.shape_cast %61 : vector<8xf32> to vector<8x1xf32>
    %63 = arith.truncf %60 : vector<8x16xf32> to vector<8x16xbf16>
    %cst_23 = arith.constant dense<0.000000e+00> : vector<8x32xf32>
    %64 = tpu.matmul %63, %10, %cst_23 {dimension_numbers = #tpu.dot_dimension_numbers<[1], [0], [0], [1], [0, 0, 1, 1], [], []>} : vector<8x16xbf16>, vector<16x32xbf16>, vector<8x32xf32> -> vector<8x32xf32>
    %65 = vector.broadcast %62 : vector<8x1xf32> to vector<8x32xf32>
    %66 = arith.divf %64, %65 : vector<8x32xf32>
    %c8_i32_24 = arith.constant 8 : i32
    %67 = vector.broadcast %c8_i32_24 : i32 to vector<1x32xi32>
    %68 = arith.cmpi sge, %15, %67 : vector<1x32xi32>
    %c16_i32 = arith.constant 16 : i32
    %69 = vector.broadcast %c16_i32 : i32 to vector<1x32xi32>
    %70 = arith.cmpi slt, %15, %69 : vector<1x32xi32>
    %71 = arith.andi %68, %70 : vector<1x32xi1>
    %72 = arith.extui %71 : vector<1x32xi1> to vector<1x32xi32>
    %73 = arith.sitofp %72 : vector<1x32xi32> to vector<1x32xf32>
    %74 = vector.broadcast %73 : vector<1x32xf32> to vector<8x32xf32>
    %75 = arith.mulf %66, %74 : vector<8x32xf32>
    %76 = arith.addf %46, %75 : vector<8x32xf32>
    %77 = vector.extract_strided_slice %14 {offsets = [0, 2], sizes = [8, 1], strides = [1, 1]} : vector<8x4xf32> to vector<8x1xf32>
    %78 = vector.extract_strided_slice %12 {offsets = [2, 0], sizes = [1, 16], strides = [1, 1]} : vector<4x16xf32> to vector<1x16xf32>
    %79 = vector.broadcast %77 : vector<8x1xf32> to vector<8x16xf32>
    %80 = vector.broadcast %78 : vector<1x16xf32> to vector<8x16xf32>
    %81 = arith.addf %79, %80 : vector<8x16xf32>
    %cst_25 = arith.constant 2.000000e-01 : f32
    %82 = vector.broadcast %cst_25 : f32 to vector<8x16xf32>
    %83 = arith.mulf %82, %81 : vector<8x16xf32>
    %84 = arith.maximumf %81, %83 : vector<8x16xf32>
    %85 = arith.addf %84, %7 : vector<8x16xf32>
    %cst_26 = arith.constant dense<0xFF800000> : vector<8xf32>
    %86 = vector.multi_reduction <maximumf>, %85, %cst_26 [1] : vector<8x16xf32> to vector<8xf32>
    %87 = vector.shape_cast %86 : vector<8xf32> to vector<8x1xf32>
    %88 = vector.broadcast %87 : vector<8x1xf32> to vector<8x16xf32>
    %89 = arith.subf %85, %88 : vector<8x16xf32>
    %90 = math.exp %89 : vector<8x16xf32>
    %cst_27 = arith.constant dense<0.000000e+00> : vector<8xf32>
    %91 = vector.multi_reduction <add>, %90, %cst_27 [1] : vector<8x16xf32> to vector<8xf32>
    %92 = vector.shape_cast %91 : vector<8xf32> to vector<8x1xf32>
    %93 = arith.truncf %90 : vector<8x16xf32> to vector<8x16xbf16>
    %cst_28 = arith.constant dense<0.000000e+00> : vector<8x32xf32>
    %94 = tpu.matmul %93, %10, %cst_28 {dimension_numbers = #tpu.dot_dimension_numbers<[1], [0], [0], [1], [0, 0, 1, 1], [], []>} : vector<8x16xbf16>, vector<16x32xbf16>, vector<8x32xf32> -> vector<8x32xf32>
    %95 = vector.broadcast %92 : vector<8x1xf32> to vector<8x32xf32>
    %96 = arith.divf %94, %95 : vector<8x32xf32>
    %c16_i32_29 = arith.constant 16 : i32
    %97 = vector.broadcast %c16_i32_29 : i32 to vector<1x32xi32>
    %98 = arith.cmpi sge, %15, %97 : vector<1x32xi32>
    %c24_i32 = arith.constant 24 : i32
    %99 = vector.broadcast %c24_i32 : i32 to vector<1x32xi32>
    %100 = arith.cmpi slt, %15, %99 : vector<1x32xi32>
    %101 = arith.andi %98, %100 : vector<1x32xi1>
    %102 = arith.extui %101 : vector<1x32xi1> to vector<1x32xi32>
    %103 = arith.sitofp %102 : vector<1x32xi32> to vector<1x32xf32>
    %104 = vector.broadcast %103 : vector<1x32xf32> to vector<8x32xf32>
    %105 = arith.mulf %96, %104 : vector<8x32xf32>
    %106 = arith.addf %76, %105 : vector<8x32xf32>
    %107 = vector.extract_strided_slice %14 {offsets = [0, 3], sizes = [8, 1], strides = [1, 1]} : vector<8x4xf32> to vector<8x1xf32>
    %108 = vector.extract_strided_slice %12 {offsets = [3, 0], sizes = [1, 16], strides = [1, 1]} : vector<4x16xf32> to vector<1x16xf32>
    %109 = vector.broadcast %107 : vector<8x1xf32> to vector<8x16xf32>
    %110 = vector.broadcast %108 : vector<1x16xf32> to vector<8x16xf32>
    %111 = arith.addf %109, %110 : vector<8x16xf32>
    %cst_30 = arith.constant 2.000000e-01 : f32
    %112 = vector.broadcast %cst_30 : f32 to vector<8x16xf32>
    %113 = arith.mulf %112, %111 : vector<8x16xf32>
    %114 = arith.maximumf %111, %113 : vector<8x16xf32>
    %115 = arith.addf %114, %7 : vector<8x16xf32>
    %cst_31 = arith.constant dense<0xFF800000> : vector<8xf32>
    %116 = vector.multi_reduction <maximumf>, %115, %cst_31 [1] : vector<8x16xf32> to vector<8xf32>
    %117 = vector.shape_cast %116 : vector<8xf32> to vector<8x1xf32>
    %118 = vector.broadcast %117 : vector<8x1xf32> to vector<8x16xf32>
    %119 = arith.subf %115, %118 : vector<8x16xf32>
    %120 = math.exp %119 : vector<8x16xf32>
    %cst_32 = arith.constant dense<0.000000e+00> : vector<8xf32>
    %121 = vector.multi_reduction <add>, %120, %cst_32 [1] : vector<8x16xf32> to vector<8xf32>
    %122 = vector.shape_cast %121 : vector<8xf32> to vector<8x1xf32>
    %123 = arith.truncf %120 : vector<8x16xf32> to vector<8x16xbf16>
    %cst_33 = arith.constant dense<0.000000e+00> : vector<8x32xf32>
    %124 = tpu.matmul %123, %10, %cst_33 {dimension_numbers = #tpu.dot_dimension_numbers<[1], [0], [0], [1], [0, 0, 1, 1], [], []>} : vector<8x16xbf16>, vector<16x32xbf16>, vector<8x32xf32> -> vector<8x32xf32>
    %125 = vector.broadcast %122 : vector<8x1xf32> to vector<8x32xf32>
    %126 = arith.divf %124, %125 : vector<8x32xf32>
    %c24_i32_34 = arith.constant 24 : i32
    %127 = vector.broadcast %c24_i32_34 : i32 to vector<1x32xi32>
    %128 = arith.cmpi sge, %15, %127 : vector<1x32xi32>
    %c32_i32 = arith.constant 32 : i32
    %129 = vector.broadcast %c32_i32 : i32 to vector<1x32xi32>
    %130 = arith.cmpi slt, %15, %129 : vector<1x32xi32>
    %131 = arith.andi %128, %130 : vector<1x32xi1>
    %132 = arith.extui %131 : vector<1x32xi1> to vector<1x32xi32>
    %133 = arith.sitofp %132 : vector<1x32xi32> to vector<1x32xf32>
    %134 = vector.broadcast %133 : vector<1x32xf32> to vector<8x32xf32>
    %135 = arith.mulf %126, %134 : vector<8x32xf32>
    %136 = arith.addf %106, %135 : vector<8x32xf32>
    %c0_35 = arith.constant 0 : index
    %c0_36 = arith.constant 0 : index
    %137 = vector.load %arg8[%c0_35, %c0_36] : memref<1x32xf32, #tpu.memory_space<vmem>>, vector<1x32xf32>
    %138 = vector.broadcast %137 : vector<1x32xf32> to vector<8x32xf32>
    %139 = arith.addf %136, %138 : vector<8x32xf32>
    %cst_37 = arith.constant 0.000000e+00 : f32
    %140 = vector.broadcast %cst_37 : f32 to vector<8x32xf32>
    %141 = arith.maximumf %139, %140 : vector<8x32xf32>
    %c0_38 = arith.constant 0 : index
    %c0_39 = arith.constant 0 : index
    %142 = vector.load %arg9[%c0_38, %c0_39] : memref<8x32xf32, #tpu.memory_space<vmem>>, vector<8x32xf32>
    tpu.vector_store %arg9[%c0_38, %c0_39], %141 {strides = array<i32>} : memref<8x32xf32, #tpu.memory_space<vmem>>, vector<8x32xf32>,
    return
  }
  func.func @transform_0(%arg0: i32) -> (i32, i32) {
    %c0_i32 = arith.constant 0 : i32
    %c0_i32_0 = arith.constant 0 : i32
    %c0_i32_1 = arith.constant 0 : i32
    return %c0_i32, %c0_i32_0 : i32, i32
  }
  func.func @transform_1(%arg0: i32) -> (i32, i32) {
    %c0_i32 = arith.constant 0 : i32
    %c0_i32_0 = arith.constant 0 : i32
    %c0_i32_1 = arith.constant 0 : i32
    return %c0_i32, %c0_i32_0 : i32, i32
  }
  func.func @transform_2(%arg0: i32) -> (i32, i32) {
    %c0_i32 = arith.constant 0 : i32
    %c0_i32_0 = arith.constant 0 : i32
    return %arg0, %c0_i32 : i32, i32
  }
  func.func @transform_3(%arg0: i32) -> (i32, i32) {
    %c0_i32 = arith.constant 0 : i32
    %c0_i32_0 = arith.constant 0 : i32
    return %arg0, %c0_i32 : i32, i32
  }
  func.func @transform_4(%arg0: i32) -> (i32, i32) {
    %c0_i32 = arith.constant 0 : i32
    %c0_i32_0 = arith.constant 0 : i32
    %c0_i32_1 = arith.constant 0 : i32
    return %c0_i32, %c0_i32_0 : i32, i32
  }
  func.func @transform_5(%arg0: i32) -> (i32, i32) {
    %c0_i32 = arith.constant 0 : i32
    %c0_i32_0 = arith.constant 0 : i32
    %c0_i32_1 = arith.constant 0 : i32
    return %c0_i32, %c0_i32_0 : i32, i32
  }
  func.func @transform_6(%arg0: i32) -> (i32, i32) {
    %c0_i32 = arith.constant 0 : i32
    %c0_i32_0 = arith.constant 0 : i32
    %c0_i32_1 = arith.constant 0 : i32
    return %c0_i32, %c0_i32_0 : i32, i32
  }
  func.func @transform_7(%arg0: i32) -> (i32, i32) {
    %c0_i32 = arith.constant 0 : i32
    %c0_i32_0 = arith.constant 0 : i32
    %c0_i32_1 = arith.constant 0 : i32
    return %c0_i32, %c0_i32_0 : i32, i32
  }
  func.func @transform_8(%arg0: i32) -> (i32, i32) {
    %c0_i32 = arith.constant 0 : i32
    %c0_i32_0 = arith.constant 0 : i32
    return %arg0, %c0_i32 : i32, i32
  }
}

module attributes {stable_mosaic.version = 11 : i64} {
  func.func @_gat3_mlp_kernel(%arg0: i32, %arg1: memref<16x32xf32, #tpu.memory_space<vmem>>, %arg2: memref<32x16xf32, #tpu.memory_space<vmem>>, %arg3: memref<8x32xf32, #tpu.memory_space<vmem>>, %arg4: memref<8x16xbf16, #tpu.memory_space<vmem>>, %arg5: memref<32x16xbf16, #tpu.memory_space<vmem>>, %arg6: memref<1x32xbf16, #tpu.memory_space<vmem>>, %arg7: memref<32x1xbf16, #tpu.memory_space<vmem>>, %arg8: memref<1x16xf32, #tpu.memory_space<vmem>>, %arg9: memref<32x16xbf16, #tpu.memory_space<vmem>>, %arg10: memref<16x16xbf16, #tpu.memory_space<vmem>>, %arg11: memref<1x16xf32, #tpu.memory_space<vmem>>, %arg12: memref<16x16xbf16, #tpu.memory_space<vmem>>, %arg13: memref<1x16xf32, #tpu.memory_space<vmem>>, %arg14: memref<8x16xf32, #tpu.memory_space<vmem>>) attributes {dimension_semantics = [#tpu.dimension_semantics<parallel>], iteration_bounds = array<i64: 2>, scalar_prefetch = 0 : i64, scratch_operands = 0 : i64, tpu.core_type = #tpu.core_type<tc>, window_params = [{pipeline_mode = #tpu.pipeline_mode<synchronous>, transform_indices = @transform_0, window_bounds = array<i64: 16, 32>}, {pipeline_mode = #tpu.pipeline_mode<synchronous>, transform_indices = @transform_1, window_bounds = array<i64: 32, 16>}, {transform_indices = @transform_2, window_bounds = array<i64: 8, 32>}, {transform_indices = @transform_3, window_bounds = array<i64: 8, 16>}, {pipeline_mode = #tpu.pipeline_mode<synchronous>, transform_indices = @transform_4, window_bounds = array<i64: 32, 16>}, {pipeline_mode = #tpu.pipeline_mode<synchronous>, transform_indices = @transform_5, window_bounds = array<i64: 1, 32>}, {pipeline_mode = #tpu.pipeline_mode<synchronous>, transform_indices = @transform_6, window_bounds = array<i64: 32, 1>}, {pipeline_mode = #tpu.pipeline_mode<synchronous>, transform_indices = @transform_7, window_bounds = array<i64: 1, 16>}, {pipeline_mode = #tpu.pipeline_mode<synchronous>, transform_indices = @transform_8, window_bounds = array<i64: 32, 16>}, {pipeline_mode = #tpu.pipeline_mode<synchronous>, transform_indices = @transform_9, window_bounds = array<i64: 16, 16>}, {pipeline_mode = #tpu.pipeline_mode<synchronous>, transform_indices = @transform_10, window_bounds = array<i64: 1, 16>}, {pipeline_mode = #tpu.pipeline_mode<synchronous>, transform_indices = @transform_11, window_bounds = array<i64: 16, 16>}, {pipeline_mode = #tpu.pipeline_mode<synchronous>, transform_indices = @transform_12, window_bounds = array<i64: 1, 16>}, {transform_indices = @transform_13, window_bounds = array<i64: 8, 16>}]} {
    %c0 = arith.constant 0 : index
    %c0_0 = arith.constant 0 : index
    %0 = vector.load %arg1[%c0, %c0_0] : memref<16x32xf32, #tpu.memory_space<vmem>>, vector<16x32xf32>
    %1 = arith.truncf %0 : vector<16x32xf32> to vector<16x32xbf16>
    %c0_1 = arith.constant 0 : index
    %c0_2 = arith.constant 0 : index
    %2 = vector.load %arg2[%c0_1, %c0_2] : memref<32x16xf32, #tpu.memory_space<vmem>>, vector<32x16xf32>
    %3 = arith.truncf %2 : vector<32x16xf32> to vector<32x16xbf16>
    %c0_3 = arith.constant 0 : index
    %c0_4 = arith.constant 0 : index
    %4 = vector.load %arg3[%c0_3, %c0_4] : memref<8x32xf32, #tpu.memory_space<vmem>>, vector<8x32xf32>
    %5 = arith.truncf %4 : vector<8x32xf32> to vector<8x32xbf16>
    %c0_5 = arith.constant 0 : index
    %c0_6 = arith.constant 0 : index
    %6 = vector.load %arg4[%c0_5, %c0_6] : memref<8x16xbf16, #tpu.memory_space<vmem>>, vector<8x16xbf16>
    %7 = arith.extf %6 : vector<8x16xbf16> to vector<8x16xf32>
    %c0_7 = arith.constant 0 : index
    %c0_8 = arith.constant 0 : index
    %8 = vector.load %arg5[%c0_7, %c0_8] : memref<32x16xbf16, #tpu.memory_space<vmem>>, vector<32x16xbf16>
    %cst = arith.constant dense<0.000000e+00> : vector<16x16xf32>
    %9 = tpu.matmul %1, %8, %cst {dimension_numbers = #tpu.dot_dimension_numbers<[1], [0], [0], [1], [0, 0, 1, 1], [], []>} : vector<16x32xbf16>, vector<32x16xbf16>, vector<16x16xf32> -> vector<16x16xf32>
    %10 = arith.truncf %9 : vector<16x16xf32> to vector<16x16xbf16>
    %c0_9 = arith.constant 0 : index
    %c0_10 = arith.constant 0 : index
    %11 = vector.load %arg6[%c0_9, %c0_10] : memref<1x32xbf16, #tpu.memory_space<vmem>>, vector<1x32xbf16>
    %cst_11 = arith.constant dense<0.000000e+00> : vector<1x16xf32>
    %12 = tpu.matmul %11, %3, %cst_11 {dimension_numbers = #tpu.dot_dimension_numbers<[1], [0], [0], [1], [0, 0, 1, 1], [], []>} : vector<1x32xbf16>, vector<32x16xbf16>, vector<1x16xf32> -> vector<1x16xf32>
    %c0_12 = arith.constant 0 : index
    %c0_13 = arith.constant 0 : index
    %13 = vector.load %arg7[%c0_12, %c0_13] : memref<32x1xbf16, #tpu.memory_space<vmem>>, vector<32x1xbf16>
    %cst_14 = arith.constant dense<0.000000e+00> : vector<8x1xf32>
    %14 = tpu.matmul %5, %13, %cst_14 {dimension_numbers = #tpu.dot_dimension_numbers<[1], [0], [0], [1], [0, 0, 1, 1], [], []>} : vector<8x32xbf16>, vector<32x1xbf16>, vector<8x1xf32> -> vector<8x1xf32>
    %15 = vector.broadcast %14 : vector<8x1xf32> to vector<8x16xf32>
    %16 = vector.broadcast %12 : vector<1x16xf32> to vector<8x16xf32>
    %17 = arith.addf %15, %16 : vector<8x16xf32>
    %cst_15 = arith.constant 2.000000e-01 : f32
    %18 = vector.broadcast %cst_15 : f32 to vector<8x16xf32>
    %19 = arith.mulf %18, %17 : vector<8x16xf32>
    %20 = arith.maximumf %17, %19 : vector<8x16xf32>
    %21 = arith.addf %20, %7 : vector<8x16xf32>
    %cst_16 = arith.constant dense<0xFF800000> : vector<8xf32>
    %22 = vector.multi_reduction <maximumf>, %21, %cst_16 [1] : vector<8x16xf32> to vector<8xf32>
    %23 = vector.shape_cast %22 : vector<8xf32> to vector<8x1xf32>
    %24 = vector.broadcast %23 : vector<8x1xf32> to vector<8x16xf32>
    %25 = arith.subf %21, %24 : vector<8x16xf32>
    %26 = math.exp %25 : vector<8x16xf32>
    %cst_17 = arith.constant dense<0.000000e+00> : vector<8xf32>
    %27 = vector.multi_reduction <add>, %26, %cst_17 [1] : vector<8x16xf32> to vector<8xf32>
    %28 = vector.shape_cast %27 : vector<8xf32> to vector<8x1xf32>
    %29 = arith.truncf %26 : vector<8x16xf32> to vector<8x16xbf16>
    %cst_18 = arith.constant dense<0.000000e+00> : vector<8x16xf32>
    %30 = tpu.matmul %29, %10, %cst_18 {dimension_numbers = #tpu.dot_dimension_numbers<[1], [0], [0], [1], [0, 0, 1, 1], [], []>} : vector<8x16xbf16>, vector<16x16xbf16>, vector<8x16xf32> -> vector<8x16xf32>
    %31 = vector.broadcast %28 : vector<8x1xf32> to vector<8x16xf32>
    %32 = arith.divf %30, %31 : vector<8x16xf32>
    %c0_19 = arith.constant 0 : index
    %c0_20 = arith.constant 0 : index
    %33 = vector.load %arg8[%c0_19, %c0_20] : memref<1x16xf32, #tpu.memory_space<vmem>>, vector<1x16xf32>
    %34 = vector.broadcast %33 : vector<1x16xf32> to vector<8x16xf32>
    %35 = arith.addf %32, %34 : vector<8x16xf32>
    %c0_21 = arith.constant 0 : index
    %c0_22 = arith.constant 0 : index
    %36 = vector.load %arg9[%c0_21, %c0_22] : memref<32x16xbf16, #tpu.memory_space<vmem>>, vector<32x16xbf16>
    %cst_23 = arith.constant dense<0.000000e+00> : vector<8x16xf32>
    %37 = tpu.matmul %5, %36, %cst_23 {dimension_numbers = #tpu.dot_dimension_numbers<[1], [0], [0], [1], [0, 0, 1, 1], [], []>} : vector<8x32xbf16>, vector<32x16xbf16>, vector<8x16xf32> -> vector<8x16xf32>
    %38 = arith.truncf %35 : vector<8x16xf32> to vector<8x16xbf16>
    %c0_24 = arith.constant 0 : index
    %c0_25 = arith.constant 0 : index
    %39 = vector.load %arg10[%c0_24, %c0_25] : memref<16x16xbf16, #tpu.memory_space<vmem>>, vector<16x16xbf16>
    %cst_26 = arith.constant dense<0.000000e+00> : vector<8x16xf32>
    %40 = tpu.matmul %38, %39, %cst_26 {dimension_numbers = #tpu.dot_dimension_numbers<[1], [0], [0], [1], [0, 0, 1, 1], [], []>} : vector<8x16xbf16>, vector<16x16xbf16>, vector<8x16xf32> -> vector<8x16xf32>
    %41 = arith.addf %37, %40 : vector<8x16xf32>
    %c0_27 = arith.constant 0 : index
    %c0_28 = arith.constant 0 : index
    %42 = vector.load %arg11[%c0_27, %c0_28] : memref<1x16xf32, #tpu.memory_space<vmem>>, vector<1x16xf32>
    %43 = vector.broadcast %42 : vector<1x16xf32> to vector<8x16xf32>
    %44 = arith.addf %41, %43 : vector<8x16xf32>
    %cst_29 = arith.constant 0.000000e+00 : f32
    %45 = vector.broadcast %cst_29 : f32 to vector<8x16xf32>
    %46 = arith.maximumf %44, %45 : vector<8x16xf32>
    %47 = arith.truncf %46 : vector<8x16xf32> to vector<8x16xbf16>
    %c0_30 = arith.constant 0 : index
    %c0_31 = arith.constant 0 : index
    %48 = vector.load %arg12[%c0_30, %c0_31] : memref<16x16xbf16, #tpu.memory_space<vmem>>, vector<16x16xbf16>
    %cst_32 = arith.constant dense<0.000000e+00> : vector<8x16xf32>
    %49 = tpu.matmul %47, %48, %cst_32 {dimension_numbers = #tpu.dot_dimension_numbers<[1], [0], [0], [1], [0, 0, 1, 1], [], []>} : vector<8x16xbf16>, vector<16x16xbf16>, vector<8x16xf32> -> vector<8x16xf32>
    %c0_33 = arith.constant 0 : index
    %c0_34 = arith.constant 0 : index
    %50 = vector.load %arg13[%c0_33, %c0_34] : memref<1x16xf32, #tpu.memory_space<vmem>>, vector<1x16xf32>
    %51 = vector.broadcast %50 : vector<1x16xf32> to vector<8x16xf32>
    %52 = arith.addf %49, %51 : vector<8x16xf32>
    %c0_35 = arith.constant 0 : index
    %c0_36 = arith.constant 0 : index
    %53 = vector.load %arg14[%c0_35, %c0_36] : memref<8x16xf32, #tpu.memory_space<vmem>>, vector<8x16xf32>
    tpu.vector_store %arg14[%c0_35, %c0_36], %52 {strides = array<i32>} : memref<8x16xf32, #tpu.memory_space<vmem>>, vector<8x16xf32>,
    return
  }
  func.func @transform_0(%arg0: i32) -> (i32, i32) {
    %c0_i32 = arith.constant 0 : i32
    %c0_i32_0 = arith.constant 0 : i32
    %c0_i32_1 = arith.constant 0 : i32
    return %c0_i32, %c0_i32_0 : i32, i32
  }
  func.func @transform_1(%arg0: i32) -> (i32, i32) {
    %c0_i32 = arith.constant 0 : i32
    %c0_i32_0 = arith.constant 0 : i32
    %c0_i32_1 = arith.constant 0 : i32
    return %c0_i32, %c0_i32_0 : i32, i32
  }
  func.func @transform_2(%arg0: i32) -> (i32, i32) {
    %c0_i32 = arith.constant 0 : i32
    %c0_i32_0 = arith.constant 0 : i32
    return %arg0, %c0_i32 : i32, i32
  }
  func.func @transform_3(%arg0: i32) -> (i32, i32) {
    %c0_i32 = arith.constant 0 : i32
    %c0_i32_0 = arith.constant 0 : i32
    return %arg0, %c0_i32 : i32, i32
  }
  func.func @transform_4(%arg0: i32) -> (i32, i32) {
    %c0_i32 = arith.constant 0 : i32
    %c0_i32_0 = arith.constant 0 : i32
    %c0_i32_1 = arith.constant 0 : i32
    return %c0_i32, %c0_i32_0 : i32, i32
  }
  func.func @transform_5(%arg0: i32) -> (i32, i32) {
    %c0_i32 = arith.constant 0 : i32
    %c0_i32_0 = arith.constant 0 : i32
    %c0_i32_1 = arith.constant 0 : i32
    return %c0_i32, %c0_i32_0 : i32, i32
  }
  func.func @transform_6(%arg0: i32) -> (i32, i32) {
    %c0_i32 = arith.constant 0 : i32
    %c0_i32_0 = arith.constant 0 : i32
    %c0_i32_1 = arith.constant 0 : i32
    return %c0_i32, %c0_i32_0 : i32, i32
  }
  func.func @transform_7(%arg0: i32) -> (i32, i32) {
    %c0_i32 = arith.constant 0 : i32
    %c0_i32_0 = arith.constant 0 : i32
    %c0_i32_1 = arith.constant 0 : i32
    return %c0_i32, %c0_i32_0 : i32, i32
  }
  func.func @transform_8(%arg0: i32) -> (i32, i32) {
    %c0_i32 = arith.constant 0 : i32
    %c0_i32_0 = arith.constant 0 : i32
    %c0_i32_1 = arith.constant 0 : i32
    return %c0_i32, %c0_i32_0 : i32, i32
  }
  func.func @transform_9(%arg0: i32) -> (i32, i32) {
    %c0_i32 = arith.constant 0 : i32
    %c0_i32_0 = arith.constant 0 : i32
    %c0_i32_1 = arith.constant 0 : i32
    return %c0_i32, %c0_i32_0 : i32, i32
  }
  func.func @transform_10(%arg0: i32) -> (i32, i32) {
    %c0_i32 = arith.constant 0 : i32
    %c0_i32_0 = arith.constant 0 : i32
    %c0_i32_1 = arith.constant 0 : i32
    return %c0_i32, %c0_i32_0 : i32, i32
  }
  func.func @transform_11(%arg0: i32) -> (i32, i32) {
    %c0_i32 = arith.constant 0 : i32
    %c0_i32_0 = arith.constant 0 : i32
    %c0_i32_1 = arith.constant 0 : i32
    return %c0_i32, %c0_i32_0 : i32, i32
  }
  func.func @transform_12(%arg0: i32) -> (i32, i32) {
    %c0_i32 = arith.constant 0 : i32
    %c0_i32_0 = arith.constant 0 : i32
    %c0_i32_1 = arith.constant 0 : i32
    return %c0_i32, %c0_i32_0 : i32, i32
  }
  func.func @transform_13(%arg0: i32) -> (i32, i32) {
    %c0_i32 = arith.constant 0 : i32
    %c0_i32_0 = arith.constant 0 : i32
    return %arg0, %c0_i32 : i32, i32
  }
}

</mosaic_0001>

<llo_original>
// kernel: _lambda_.3
$region0: #{_lambda_.3}
  #allocation0 [shape = 'u32[]', space=smem, size = 0x4, offset = 0x4, fixed_abs, tag = 'smem constant byte address 0x4 - core index']
  #allocation1 [shape = 'u32[144,128]{1,0:T(1,128)}', space=vmem, size = 0x12000, scoped, tag = 'internal scratch']
  %s0 = inlined_call_operand.vmem [shape: f32[16,16], index: 0, kind: input, shape index: {}, may-alias: {0,2}]
  %s1 = inlined_call_operand.vmem [shape: f32[16,16], index: 1, kind: input, shape index: {}]
  %s2 = inlined_call_operand.vmem [shape: f32[16,16], index: 2, kind: input, shape index: {}, may-alias: {0,2}]
  %s3 = inlined_call_operand.vmem [shape: bf16[16,16], index: 3, kind: input, shape index: {}]
  %s4 = inlined_call_operand.vmem [shape: bf16[16,32], index: 4, kind: input, shape index: {}]
  %s5 = inlined_call_operand.vmem [shape: bf16[4,16], index: 5, kind: input, shape index: {}]
  %s6 = inlined_call_operand.vmem [shape: bf16[16,4], index: 6, kind: input, shape index: {}]
  %s7 = inlined_call_operand.vmem [shape: f32[1,32], index: 7, kind: input, shape index: {}]
  %s8 = inlined_call_operand.vmem [shape: f32[16,32], index: 8, kind: output, shape index: {}]
  %s9 = sld [smem:[#allocation0]]
  $region65: #{_lambda_.3} parent=0
    _
  %s11 = ssub.s32 1, %s9
  %s12 = scalar_select 0, %s11, %s9
  loop: start=0, step=1, limit=4
  $region2: #{_lambda_.3} parent=0 // loop_pre_header
    _
  $region3: #{_lambda_.3} parent=0 // loop_header
    %s14 = sphi 0, %s18
    %p15 = scmp.ge.s32.totalorder %s14, 4
    %s22 = sphi 0, %s22
    %s24 = sphi 0, %s22
    %s25 = sphi 0, %s24
    %s39 = sphi 0, %s25
    %s43 = sphi 0, %s43
    %s45 = sphi 0, %s43
    %s46 = sphi 0, %s45
    %s60 = sphi 0, %s46
    %s66 = sphi 0, %s68
    %s69 = sphi 0, %s66
    %s70 = sphi 0, %s69
    %s86 = sphi 0, %s70
    %s92 = sphi 0, %s94
    %s95 = sphi 0, %s92
    %s96 = sphi 0, %s95
    %s112 = sphi 0, %s96
    %s116 = sphi 0, %s116
    %s118 = sphi 0, %s116
    %s119 = sphi 0, %s118
    %s133 = sphi 0, %s119
    %s137 = sphi 0, %s137
    %s139 = sphi 0, %s137
    %s140 = sphi 0, %s139
    %s154 = sphi 0, %s140
    %s158 = sphi 0, %s158
    %s160 = sphi 0, %s158
    %s161 = sphi 0, %s160
    %s175 = sphi 0, %s161
    %s179 = sphi 0, %s179
    %s181 = sphi 0, %s179
    %s182 = sphi 0, %s181
    %s196 = sphi 0, %s182
    %s202 = sphi 0, %s204
    %s205 = sphi 0, %s202
    %s206 = sphi 0, %s205
    %s222 = sphi 0, %s206
  $region4: #{_lambda_.3} parent=0 // loop_header_branch
    %17 = sbr.rel (%p15) target = $region8
  $region5: #{_lambda_.3} parent=0 // loop_body
    %s19 = ssub.s32 %s14, 1
    %s20 = ssub.s32 %s14, 2
    %s21 = sadd.s32 %s14, 1
    %s23 = sadd.s32 %s22, 1
    %p26 = scmp.eq.s32.totalorder %s14, 1
    %p27 = scmp.ne.s32.totalorder %s22, %s24
    %p28 = scmp.eq.s32.totalorder %s14, 0
    %p29 = por %p27, %p28
    %p30 = scmp.ne.s32.totalorder %s22, %s24
    %p31 = scmp.eq.s32.totalorder %s19, 1
    %p32 = por %p30, %p31
    %p33 = scmp.ne.s32.totalorder %s24, %s25
    %p34 = scmp.eq.s32.totalorder %s19, 0
    %p35 = por %p33, %p34
    %p36 = scmp.ne.s32.totalorder %s24, %s25
    %p37 = scmp.eq.s32.totalorder %s20, 1
    %p38 = por %p36, %p37
    %p40 = scmp.ne.s32.totalorder %s25, %s39
    %p41 = scmp.eq.s32.totalorder %s20, 0
    %p42 = por %p40, %p41
    %s44 = sadd.s32 %s43, 1
    %p47 = scmp.eq.s32.totalorder %s14, 1
    %p48 = scmp.ne.s32.totalorder %s43, %s45
    %p49 = scmp.eq.s32.totalorder %s14, 0
    %p50 = por %p48, %p49
    %p51 = scmp.ne.s32.totalorder %s43, %s45
    %p52 = scmp.eq.s32.totalorder %s19, 1
    %p53 = por %p51, %p52
    %p54 = scmp.ne.s32.totalorder %s45, %s46
    %p55 = scmp.eq.s32.totalorder %s19, 0
    %p56 = por %p54, %p55
    %p57 = scmp.ne.s32.totalorder %s45, %s46
    %p58 = scmp.eq.s32.totalorder %s20, 1
    %p59 = por %p57, %p58
    %p61 = scmp.ne.s32.totalorder %s46, %s60
    %p62 = scmp.eq.s32.totalorder %s20, 0
    %p63 = por %p61, %p62
    %s64 = ssub.s32 %s14, %s21
    %p65 = scmp.eq.s32.totalorder %s64, 0
    %s67 = sadd.s32 %s66, 1
    %s68 = scalar_select %p65, %s66, %s67
    %p71 = pneg %p65
    %p72 = scmp.eq.s32.totalorder %s14, 1
    %p73 = por %p71, %p72
    %p74 = scmp.ne.s32.totalorder %s66, %s69
    %p75 = scmp.eq.s32.totalorder %s14, 0
    %p76 = por %p74, %p75
    %p77 = scmp.ne.s32.totalorder %s66, %s69
    %p78 = scmp.eq.s32.totalorder %s19, 1
    %p79 = por %p77, %p78
    %p80 = scmp.ne.s32.totalorder %s69, %s70
    %p81 = scmp.eq.s32.totalorder %s19, 0
    %p82 = por %p80, %p81
    %p83 = scmp.ne.s32.totalorder %s69, %s70
    %p84 = scmp.eq.s32.totalorder %s20, 1
    %p85 = por %p83, %p84
    %p87 = scmp.ne.s32.totalorder %s70, %s86
    %p88 = scmp.eq.s32.totalorder %s20, 0
    %p89 = por %p87, %p88
    %s90 = ssub.s32 %s14, %s21
    %p91 = scmp.eq.s32.totalorder %s90, 0
    %s93 = sadd.s32 %s92, 1
    %s94 = scalar_select %p91, %s92, %s93
    %p97 = pneg %p91
    %p98 = scmp.eq.s32.totalorder %s14, 1
    %p99 = por %p97, %p98
    %p100 = scmp.ne.s32.totalorder %s92, %s95
    %p101 = scmp.eq.s32.totalorder %s14, 0
    %p102 = por %p100, %p101
    %p103 = scmp.ne.s32.totalorder %s92, %s95
    %p104 = scmp.eq.s32.totalorder %s19, 1
    %p105 = por %p103, %p104
    %p106 = scmp.ne.s32.totalorder %s95, %s96
    %p107 = scmp.eq.s32.totalorder %s19, 0
    %p108 = por %p106, %p107
    %p109 = scmp.ne.s32.totalorder %s95, %s96
    %p110 = scmp.eq.s32.totalorder %s20, 1
    %p111 = por %p109, %p110
    %p113 = scmp.ne.s32.totalorder %s96, %s112
    %p114 = scmp.eq.s32.totalorder %s20, 0
    %p115 = por %p113, %p114
    %s117 = sadd.s32 %s116, 1
    %p120 = scmp.eq.s32.totalorder %s14, 1
    %p121 = scmp.ne.s32.totalorder %s116, %s118
    %p122 = scmp.eq.s32.totalorder %s14, 0
    %p123 = por %p121, %p122
    %p124 = scmp.ne.s32.totalorder %s116, %s118
    %p125 = scmp.eq.s32.totalorder %s19, 1
    %p126 = por %p124, %p125
    %p127 = scmp.ne.s32.totalorder %s118, %s119
    %p128 = scmp.eq.s32.totalorder %s19, 0
    %p129 = por %p127, %p128
    %p130 = scmp.ne.s32.totalorder %s118, %s119
    %p131 = scmp.eq.s32.totalorder %s20, 1
    %p132 = por %p130, %p131
    %p134 = scmp.ne.s32.totalorder %s119, %s133
    %p135 = scmp.eq.s32.totalorder %s20, 0
    %p136 = por %p134, %p135
    %s138 = sadd.s32 %s137, 1
    %p141 = scmp.eq.s32.totalorder %s14, 1
    %p142 = scmp.ne.s32.totalorder %s137, %s139
    %p143 = scmp.eq.s32.totalorder %s14, 0
    %p144 = por %p142, %p143
    %p145 = scmp.ne.s32.totalorder %s137, %s139
    %p146 = scmp.eq.s32.totalorder %s19, 1
    %p147 = por %p145, %p146
    %p148 = scmp.ne.s32.totalorder %s139, %s140
    %p149 = scmp.eq.s32.totalorder %s19, 0
    %p150 = por %p148, %p149
    %p151 = scmp.ne.s32.totalorder %s139, %s140
    %p152 = scmp.eq.s32.totalorder %s20, 1
    %p153 = por %p151, %p152
    %p155 = scmp.ne.s32.totalorder %s140, %s154
    %p156 = scmp.eq.s32.totalorder %s20, 0
    %p157 = por %p155, %p156
    %s159 = sadd.s32 %s158, 1
    %p162 = scmp.eq.s32.totalorder %s14, 1
    %p163 = scmp.ne.s32.totalorder %s158, %s160
    %p164 = scmp.eq.s32.totalorder %s14, 0
    %p165 = por %p163, %p164
    %p166 = scmp.ne.s32.totalorder %s158, %s160
    %p167 = scmp.eq.s32.totalorder %s19, 1
    %p168 = por %p166, %p167
    %p169 = scmp.ne.s32.totalorder %s160, %s161
    %p170 = scmp.eq.s32.totalorder %s19, 0
    %p171 = por %p169, %p170
    %p172 = scmp.ne.s32.totalorder %s160, %s161
    %p173 = scmp.eq.s32.totalorder %s20, 1
    %p174 = por %p172, %p173
    %p176 = scmp.ne.s32.totalorder %s161, %s175
    %p177 = scmp.eq.s32.totalorder %s20, 0
    %p178 = por %p176, %p177
    %s180 = sadd.s32 %s179, 1
    %p183 = scmp.eq.s32.totalorder %s14, 1
    %p184 = scmp.ne.s32.totalorder %s179, %s181
    %p185 = scmp.eq.s32.totalorder %s14, 0
    %p186 = por %p184, %p185
    %p187 = scmp.ne.s32.totalorder %s179, %s181
    %p188 = scmp.eq.s32.totalorder %s19, 1
    %p189 = por %p187, %p188
    %p190 = scmp.ne.s32.totalorder %s181, %s182
    %p191 = scmp.eq.s32.totalorder %s19, 0
    %p192 = por %p190, %p191
    %p193 = scmp.ne.s32.totalorder %s181, %s182
    %p194 = scmp.eq.s32.totalorder %s20, 1
    %p195 = por %p193, %p194
    %p197 = scmp.ne.s32.totalorder %s182, %s196
    %p198 = scmp.eq.s32.totalorder %s20, 0
    %p199 = por %p197, %p198
    %s200 = ssub.s32 %s14, %s21
    %p201 = scmp.eq.s32.totalorder %s200, 0
    %s203 = sadd.s32 %s202, 1
    %s204 = scalar_select %p201, %s202, %s203
    %p207 = pneg %p201
    %p208 = scmp.eq.s32.totalorder %s14, 1
    %p209 = por %p207, %p208
    %p210 = scmp.ne.s32.totalorder %s202, %s205
    %p211 = scmp.eq.s32.totalorder %s14, 0
    %p212 = por %p210, %p211
    %p213 = scmp.ne.s32.totalorder %s202, %s205
    %p214 = scmp.eq.s32.totalorder %s19, 1
    %p215 = por %p213, %p214
    %p216 = scmp.ne.s32.totalorder %s205, %s206
    %p217 = scmp.eq.s32.totalorder %s19, 0
    %p218 = por %p216, %p217
    %p219 = scmp.ne.s32.totalorder %s205, %s206
    %p220 = scmp.eq.s32.totalorder %s20, 1
    %p221 = por %p219, %p220
    %p223 = scmp.ne.s32.totalorder %s206, %s222
    %p224 = scmp.eq.s32.totalorder %s20, 0
    %p225 = por %p223, %p224
    %p226 = scmp.le.s32.totalorder 1, %s14
    %p227 = scmp.lt.s32.totalorder %s14, 3
    %p228 = pnand %p226, %p227
    %p229 = pneg %p228
    // Predicated region
    $region9: #{_lambda_.3} parent=5 // pred_check
      _
    $region10: #{_lambda_.3} parent=5 // pred_check_branch
      %231 = sbr.rel (%p228) target = $region12
    $region11: #{_lambda_.3} parent=5 // pred_region
      %s232 = ssub.s32 %s14, 1
      // Predicated region
      $region13: #{_lambda_.3} parent=11 // pred_check
        %p233 = pneg %p35
      $region14: #{_lambda_.3} parent=11 // pred_check_branch
        %235 = sbr.rel (%p233) target = $region16
      $region15: #{_lambda_.3} parent=11 // pred_region
        _
      $region16: #{_lambda_.3} parent=11 // pred_fallthru
        _
      // Predicated region
      $region17: #{_lambda_.3} parent=11 // pred_check
        %p236 = pneg %p56
      $region18: #{_lambda_.3} parent=11 // pred_check_branch
        %238 = sbr.rel (%p236) target = $region20
      $region19: #{_lambda_.3} parent=11 // pred_region
        _
      $region20: #{_lambda_.3} parent=11 // pred_fallthru
        _
      // Predicated region
      $region21: #{_lambda_.3} parent=11 // pred_check
        %p239 = pneg %p129
      $region22: #{_lambda_.3} parent=11 // pred_check_branch
        %241 = sbr.rel (%p239) target = $region24
      $region23: #{_lambda_.3} parent=11 // pred_region
        _
      $region24: #{_lambda_.3} parent=11 // pred_fallthru
        _
      // Predicated region
      $region25: #{_lambda_.3} parent=11 // pred_check
        %p242 = pneg %p150
      $region26: #{_lambda_.3} parent=11 // pred_check_branch
        %244 = sbr.rel (%p242) target = $region28
      $region27: #{_lambda_.3} parent=11 // pred_region
        _
      $region28: #{_lambda_.3} parent=11 // pred_fallthru
        _
      // Predicated region
      $region29: #{_lambda_.3} parent=11 // pred_check
        %p245 = pneg %p171
      $region30: #{_lambda_.3} parent=11 // pred_check_branch
        %247 = sbr.rel (%p245) target = $region32
      $region31: #{_lambda_.3} parent=11 // pred_region
        _
      $region32: #{_lambda_.3} parent=11 // pred_fallthru
        _
      // Predicated region
      $region33: #{_lambda_.3} parent=11 // pred_check
        %p248 = pneg %p192
      $region34: #{_lambda_.3} parent=11 // pred_check_branch
        %250 = sbr.rel (%p248) target = $region36
      $region35: #{_lambda_.3} parent=11 // pred_region
        _
      $region36: #{_lambda_.3} parent=11 // pred_fallthru
        _
    $region12: #{_lambda_.3} parent=5 // pred_fallthru
      _
    %p251 = scmp.lt.s32.totalorder %s14, 2
    // Predicated region
    $region37: #{_lambda_.3} parent=5 // pred_check
      %p252 = pneg %p251
    $region38: #{_lambda_.3} parent=5 // pred_check_branch
      %254 = sbr.rel (%p252) target = $region40
    $region39: #{_lambda_.3} parent=5 // pred_region
      // Predicated region
      $region41: #{_lambda_.3} parent=39 // pred_check
        %p255 = pneg %p76
      $region42: #{_lambda_.3} parent=39 // pred_check_branch
        %257 = sbr.rel (%p255) target = $region44
      $region43: #{_lambda_.3} parent=39 // pred_region
        %p258 = scmp.lt.s32.totalorder %s14, 1
        %s259 = scalar_select %p258, %s14, 1
        %s260 = smul.addr %s259, 8
        %s261 = scalar_lea.vmem %s2, %s260
      $region44: #{_lambda_.3} parent=39 // pred_fallthru
        _
      // Predicated region
      $region45: #{_lambda_.3} parent=39 // pred_check
        %p262 = pneg %p102
      $region46: #{_lambda_.3} parent=39 // pred_check_branch
        %264 = sbr.rel (%p262) target = $region48
      $region47: #{_lambda_.3} parent=39 // pred_region
        %p265 = scmp.lt.s32.totalorder %s14, 1
        %s266 = scalar_select %p265, %s14, 1
        %s267 = smul.addr %s266, 4
        %s268 = scalar_lea.vmem %s3, %s267
      $region48: #{_lambda_.3} parent=39 // pred_fallthru
        _
    $region40: #{_lambda_.3} parent=5 // pred_fallthru
      _
    %p269 = scmp.le.s32.totalorder 1, %s14
    %p270 = scmp.lt.s32.totalorder %s14, 3
    %p271 = pnand %p269, %p270
    %p272 = pneg %p271
    // Predicated region
    $region49: #{_lambda_.3} parent=5 // pred_check
      _
    $region50: #{_lambda_.3} parent=5 // pred_check_branch
      %274 = sbr.rel (%p271) target = $region52
    $region51: #{_lambda_.3} parent=5 // pred_region
      %s275 = ssub.s32 %s14, 1
      %p276 = pneg %p35
      %p277 = pneg %p32
      %p278 = pneg %p56
      %p279 = pneg %p53
      %p280 = scmp.lt.s32.totalorder %s19, 1
      %s281 = scalar_select %p280, %s19, 1
      %s282 = smul.addr %s281, 8
      %s283 = scalar_lea.vmem %s2, %s282
      %p284 = pneg %p82
      %p285 = pneg %p79
      %p286 = scmp.lt.s32.totalorder %s19, 1
      %s287 = scalar_select %p286, %s19, 1
      %s288 = smul.addr %s287, 4
      %s289 = scalar_lea.vmem %s3, %s288
      %p290 = pneg %p108
      %p291 = pneg %p105
      %p292 = pneg %p129
      %p293 = pneg %p126
      %p294 = pneg %p150
      %p295 = pneg %p147
      %p296 = pneg %p171
      %p297 = pneg %p168
      %p298 = pneg %p192
      %p299 = pneg %p189
      %p300 = pneg %p218
      %p301 = pneg %p215
      %p302 = scmp.lt.s32.totalorder %s19, 1
      %s303 = scalar_select %p302, %s19, 1
      %s304 = smul.addr %s303, 8
      %s305 = scalar_lea.vmem %s8, %s304
      %p306 = scmp.lt.s32.totalorder %s19, 1
      %s307 = scalar_select %p306, %s19, 1
      %s308 = smul.addr %s307, 8
      %s309 = scalar_lea.vmem %s2, %s308
      %p310 = scmp.lt.s32.totalorder %s19, 1
      %s311 = scalar_select %p310, %s19, 1
      %s312 = smul.addr %s311, 4
      %s313 = scalar_lea.vmem %s3, %s312
      %p314 = scmp.lt.s32.totalorder %s19, 1
      %s315 = scalar_select %p314, %s19, 1
      %s316 = smul.addr %s315, 8
      %s317 = scalar_lea.vmem %s8, %s316
      %v319 = vld [vmem:[%s0] sm:$0xff]
      %v320 = vld [vmem:[%s0 + $0x8] sm:$0xff]
      %v321 = vpack.c.bf16 %v320, %v319
      %v322 = vld [vmem:[%s1] sm:$0xff]
      %v323 = vld [vmem:[%s1 + $0x8] sm:$0xff]
      %v324 = vpack.c.bf16 %v323, %v322
      %v325 = vld [vmem:[%s309] sm:$0xff]
      %v326 = vpack.c.bf16 %v325, %v325
      %v327 = vld [vmem:[%s313] sm:$0xf]
      %v328 = vunpack.c.l.bf16 %v327
      %v329 = vld [vmem:[%s4] sm:$0xf]
      %v330 = vld [vmem:[%s4 + $0x4] sm:$0xf]
      %v333 = vunpack.c.l.b16 %v329
      %v334 = vunpack.c.l.b16 %v330
      %v335 = vpack.c.b16 %v334, %v333
      %vm337 = vcmask 130048
      %v339 = vsel %vm337, %v321, 0
      %341 = vmatprep.subr.bf16.mxu0 0
      %342 = vmatpush1.bf16.msra.mxu0 %v335
      %343 = vmatprep.subr.bf16.mxu0 0
      %344 = vmatpush1.bf16.msra.mxu0 0
      %345 = vmatprep.subr.bf16.mxu0 0
      %346 = vmatpush1.bf16.msra.mxu0 0
      %347 = vmatprep.subr.bf16.mxu0 0
      %348 = vmatpush1.bf16.msra.mxu0 0
      %349 = vmatprep.subr.bf16.mxu0 0
      %350 = vmatpush1.bf16.msra.mxu0 0
      %351 = vmatprep.subr.bf16.mxu0 0
      %352 = vmatpush1.bf16.msra.mxu0 0
      %353 = vmatprep.subr.bf16.mxu0 0
      %354 = vmatpush1.bf16.msra.mxu0 0
      %355 = vmatprep.subr.bf16.mxu0 0
      %356 = vmatpush1.bf16.msra.mxu0 0
      %357 = vmatprep.subr.bf16.mxu0 0
      %358 = vmatpush1.bf16.msra.mxu0 0
      %359 = vmatprep.subr.bf16.mxu0 0
      %360 = vmatpush1.bf16.msra.mxu0 0
      %361 = vmatprep.subr.bf16.mxu0 0
      %362 = vmatpush1.bf16.msra.mxu0 0
      %363 = vmatprep.subr.bf16.mxu0 0
      %364 = vmatpush1.bf16.msra.mxu0 0
      %365 = vmatprep.subr.bf16.mxu0 0
      %366 = vmatpush1.bf16.msra.mxu0 0
      %367 = vmatprep.subr.bf16.mxu0 0
      %368 = vmatpush1.bf16.msra.mxu0 0
      %369 = vmatprep.subr.bf16.mxu0 0
      %370 = vmatpush1.bf16.msra.mxu0 0
      %371 = vmatprep.subr.bf16.mxu0 0
      %372 = vmatpush1.bf16.msra.mxu0 0
      %373 = vmatprep.mubr.bf16.mxu0 0
      %374 = vmatmul.mubr.bf16.gmra.mrb[0].mxu0 %v339
      %v375 = vpop.f32.mrb[0].mxu0
      %v376 = vadd.f32 0.0, %v375
      %v377 = vpop.f32.mrb[0].mxu0
      %v378 = vpop.f32.mrb[0].mxu0
      %v379 = vadd.f32 0.0, %v378
      %v380 = vpop.f32.mrb[0].mxu0
      %381 = vdwg.mxu0
      %v382 = vpack.c.bf16 %v379, %v376
      %v383 = vld [vmem:[%s5] sm:$0x3]
      %v385 = vsel %vm337, %v383, 0
      %387 = vmatprep.subr.bf16.mxu0 0
      %388 = vmatpush1.bf16.msra.mxu0 %v324
      %389 = vmatprep.subr.bf16.mxu0 0
      %390 = vmatpush1.bf16.msra.mxu0 0
      %391 = vmatprep.subr.bf16.mxu0 0
      %392 = vmatpush1.bf16.msra.mxu0 0
      %393 = vmatprep.subr.bf16.mxu0 0
      %394 = vmatpush1.bf16.msra.mxu0 0
      %395 = vmatprep.subr.bf16.mxu0 0
      %396 = vmatpush1.bf16.msra.mxu0 0
      %397 = vmatprep.subr.bf16.mxu0 0
      %398 = vmatpush1.bf16.msra.mxu0 0
      %399 = vmatprep.subr.bf16.mxu0 0
      %400 = vmatpush1.bf16.msra.mxu0 0
      %401 = vmatprep.subr.bf16.mxu0 0
      %402 = vmatpush1.bf16.msra.mxu0 0
      %403 = vmatprep.subr.bf16.mxu0 0
      %404 = vmatpush1.bf16.msra.mxu0 0
      %405 = vmatprep.subr.bf16.mxu0 0
      %406 = vmatpush1.bf16.msra.mxu0 0
      %407 = vmatprep.subr.bf16.mxu0 0
      %408 = vmatpush1.bf16.msra.mxu0 0
      %409 = vmatprep.subr.bf16.mxu0 0
      %410 = vmatpush1.bf16.msra.mxu0 0
      %411 = vmatprep.subr.bf16.mxu0 0
      %412 = vmatpush1.bf16.msra.mxu0 0
      %413 = vmatprep.subr.bf16.mxu0 0
      %414 = vmatpush1.bf16.msra.mxu0 0
      %415 = vmatprep.subr.bf16.mxu0 0
      %416 = vmatpush1.bf16.msra.mxu0 0
      %417 = vmatprep.subr.bf16.mxu0 0
      %418 = vmatpush1.bf16.msra.mxu0 0
      %419 = vmatprep.mubr.bf16.mxu0 0
      %420 = vmatmul.mubr.bf16.gmra.mrb[0].mxu0 %v385
      %v421 = vpop.f32.mrb[0].mxu0
      %v422 = vadd.f32 0.0, %v421
      %v423 = vpop.f32.mrb[0].mxu0
      %v424 = vpop.f32.mrb[0].mxu0
      %v425 = vpop.f32.mrb[0].mxu0
      %426 = vdwg.mxu0
      %v427 = vld [vmem:[%s6] sm:$0xf]
      %v428 = vld [vmem:[%s6 + $0x4] sm:$0xf]
      %v431 = vunpack.c.l.b16 %v427
      %v432 = vunpack.c.l.b16 %v428
      %v433 = vpack.c.b16 %v432, %v431
      %v436 = vsel %vm337, %v326, 0
      %438 = vmatprep.subr.bf16.mxu0 0
      %439 = vmatpush1.bf16.msra.mxu0 %v433
      %440 = vmatprep.subr.bf16.mxu0 0
      %441 = vmatpush1.bf16.msra.mxu0 0
      %442 = vmatprep.subr.bf16.mxu0 0
      %443 = vmatpush1.bf16.msra.mxu0 0
      %444 = vmatprep.subr.bf16.mxu0 0
      %445 = vmatpush1.bf16.msra.mxu0 0
      %446 = vmatprep.subr.bf16.mxu0 0
      %447 = vmatpush1.bf16.msra.mxu0 0
      %448 = vmatprep.subr.bf16.mxu0 0
      %449 = vmatpush1.bf16.msra.mxu0 0
      %450 = vmatprep.subr.bf16.mxu0 0
      %451 = vmatpush1.bf16.msra.mxu0 0
      %452 = vmatprep.subr.bf16.mxu0 0
      %453 = vmatpush1.bf16.msra.mxu0 0
      %454 = vmatprep.subr.bf16.mxu0 0
      %455 = vmatpush1.bf16.msra.mxu0 0
      %456 = vmatprep.subr.bf16.mxu0 0
      %457 = vmatpush1.bf16.msra.mxu0 0
      %458 = vmatprep.subr.bf16.mxu0 0
      %459 = vmatpush1.bf16.msra.mxu0 0
      %460 = vmatprep.subr.bf16.mxu0 0
      %461 = vmatpush1.bf16.msra.mxu0 0
      %462 = vmatprep.subr.bf16.mxu0 0
      %463 = vmatpush1.bf16.msra.mxu0 0
      %464 = vmatprep.subr.bf16.mxu0 0
      %465 = vmatpush1.bf16.msra.mxu0 0
      %466 = vmatprep.subr.bf16.mxu0 0
      %467 = vmatpush1.bf16.msra.mxu0 0
      %468 = vmatprep.subr.bf16.mxu0 0
      %469 = vmatpush1.bf16.msra.mxu0 0
      %470 = vmatprep.mubr.bf16.mxu0 0
      %471 = vmatmul.mubr.bf16.gmra.mrb[0].mxu0 %v436
      %v472 = vpop.f32.mrb[0].mxu0
      %v473 = vadd.f32 0.0, %v472
      %v474 = vpop.f32.mrb[0].mxu0
      %v475 = vpop.f32.mrb[0].mxu0
      %v476 = vpop.f32.mrb[0].mxu0
      %477 = vdwg.mxu0
      %v478 = vlaneseq
      %v479 = vand.u32 %v478, 127
      %481 = vset.pattern.permute.xlu0 0
      %482 = vperm.xlu0 %481, %v473
      %v483 = vpop.permute.xlu0 %482
      %v485 = vlaneseq
      %v486 = vshrl.u32 %v485, 7
      %v487 = vsub.s32 0, %v486
      %v488 = vrot.slane %v422, %v487
      %v489 = vadd.f32 %v483, %v488
      %v490 = vmul.f32 %v489, 0.2
      %v491 = vmax.f32 %v489, %v490
      %v492 = vadd.f32 %v491, %v328
      %v493 = vsel %vm337, %v492, -inf
      %494 = vmax.xlane.f32.xlu0 %v493
      %v495 = vpop.xlane.xlu0 %494
      %v496 = vsub.f32 %v492, %v495
      %v497 = vmul.f32 %v496, 1.442695
      %v498 = vpow.pop %v497
      %v499 = vsel %vm337, %v498, 0.0
      %500 = vadd.xlane.f32.xlu0 %v499
      %v501 = vpop.xlane.xlu0 %500
      %v502 = vpack.c.bf16 %v498, %v498
      %v504 = vsel %vm337, %v502, 0
      %506 = vmatprep.subr.bf16.mxu0 0
      %507 = vmatpush1.bf16.msra.mxu0 %v382
      %508 = vmatprep.subr.bf16.mxu0 0
      %509 = vmatpush1.bf16.msra.mxu0 0
      %510 = vmatprep.subr.bf16.mxu0 0
      %511 = vmatpush1.bf16.msra.mxu0 0
      %512 = vmatprep.subr.bf16.mxu0 0
      %513 = vmatpush1.bf16.msra.mxu0 0
      %514 = vmatprep.subr.bf16.mxu0 0
      %515 = vmatpush1.bf16.msra.mxu0 0
      %516 = vmatprep.subr.bf16.mxu0 0
      %517 = vmatpush1.bf16.msra.mxu0 0
      %518 = vmatprep.subr.bf16.mxu0 0
      %519 = vmatpush1.bf16.msra.mxu0 0
      %520 = vmatprep.subr.bf16.mxu0 0
      %521 = vmatpush1.bf16.msra.mxu0 0
      %522 = vmatprep.subr.bf16.mxu0 0
      %523 = vmatpush1.bf16.msra.mxu0 0
      %524 = vmatprep.subr.bf16.mxu0 0
      %525 = vmatpush1.bf16.msra.mxu0 0
      %526 = vmatprep.subr.bf16.mxu0 0
      %527 = vmatpush1.bf16.msra.mxu0 0
      %528 = vmatprep.subr.bf16.mxu0 0
      %529 = vmatpush1.bf16.msra.mxu0 0
      %530 = vmatprep.subr.bf16.mxu0 0
      %531 = vmatpush1.bf16.msra.mxu0 0
      %532 = vmatprep.subr.bf16.mxu0 0
      %533 = vmatpush1.bf16.msra.mxu0 0
      %534 = vmatprep.subr.bf16.mxu0 0
      %535 = vmatpush1.bf16.msra.mxu0 0
      %536 = vmatprep.subr.bf16.mxu0 0
      %537 = vmatpush1.bf16.msra.mxu0 0
      %538 = vmatprep.mubr.bf16.mxu0 0
      %539 = vmatmul.mubr.bf16.gmra.mrb[0].mxu0 %v504
      %v540 = vpop.f32.mrb[0].mxu0
      %v541 = vadd.f32 0.0, %v540
      %v542 = vpop.f32.mrb[0].mxu0
      %v543 = vpop.f32.mrb[0].mxu0
      %v544 = vpop.f32.mrb[0].mxu0
      %545 = vdwg.mxu0
      %v546 = vrcp.pop %v501
      %v547 = vmul.f32 %v541, %v546
      %vm548 = vcmp.ge.s32.totalorder %v479, 0
      %vm549 = vcmp.lt.s32.totalorder %v479, 8
      %vm550 = vmand %vm548, %vm549
      %v551 = vsel %vm550, 1, 0
      %v552 = vcvt.s32.f32 %v551
      %v553 = vmul.f32 %v547, %v552
      %v554 = vadd.f32 %v553, 0.0
      %555 = vset.pattern.permute.xlu0 1
      %556 = vperm.xlu0 %555, %v473
      %v557 = vpop.permute.xlu0 %556
      %v559 = vlaneseq
      %v560 = vshrl.u32 %v559, 7
      %v561 = vsub.s32 1, %v560
      %v562 = vrot.slane %v422, %v561
      %v563 = vadd.f32 %v557, %v562
      %v564 = vmul.f32 %v563, 0.2
      %v565 = vmax.f32 %v563, %v564
      %v566 = vadd.f32 %v565, %v328
      %v567 = vsel %vm337, %v566, -inf
      %568 = vmax.xlane.f32.xlu0 %v567
      %v569 = vpop.xlane.xlu0 %568
      %v570 = vsub.f32 %v566, %v569
      %v571 = vmul.f32 %v570, 1.442695
      %v572 = vpow.pop %v571
      %v573 = vsel %vm337, %v572, 0.0
      %574 = vadd.xlane.f32.xlu0 %v573
      %v575 = vpop.xlane.xlu0 %574
      %v576 = vpack.c.bf16 %v572, %v572
      %v578 = vsel %vm337, %v576, 0
      %580 = vmatprep.subr.bf16.mxu0 0
      %581 = vmatpush1.bf16.msra.mxu0 %v382
      %582 = vmatprep.subr.bf16.mxu0 0
      %583 = vmatpush1.bf16.msra.mxu0 0
      %584 = vmatprep.subr.bf16.mxu0 0
      %585 = vmatpush1.bf16.msra.mxu0 0
      %586 = vmatprep.subr.bf16.mxu0 0
      %587 = vmatpush1.bf16.msra.mxu0 0
      %588 = vmatprep.subr.bf16.mxu0 0
      %589 = vmatpush1.bf16.msra.mxu0 0
      %590 = vmatprep.subr.bf16.mxu0 0
      %591 = vmatpush1.bf16.msra.mxu0 0
      %592 = vmatprep.subr.bf16.mxu0 0
      %593 = vmatpush1.bf16.msra.mxu0 0
      %594 = vmatprep.subr.bf16.mxu0 0
      %595 = vmatpush1.bf16.msra.mxu0 0
      %596 = vmatprep.subr.bf16.mxu0 0
      %597 = vmatpush1.bf16.msra.mxu0 0
      %598 = vmatprep.subr.bf16.mxu0 0
      %599 = vmatpush1.bf16.msra.mxu0 0
      %600 = vmatprep.subr.bf16.mxu0 0
      %601 = vmatpush1.bf16.msra.mxu0 0
      %602 = vmatprep.subr.bf16.mxu0 0
      %603 = vmatpush1.bf16.msra.mxu0 0
      %604 = vmatprep.subr.bf16.mxu0 0
      %605 = vmatpush1.bf16.msra.mxu0 0
      %606 = vmatprep.subr.bf16.mxu0 0
      %607 = vmatpush1.bf16.msra.mxu0 0
      %608 = vmatprep.subr.bf16.mxu0 0
      %609 = vmatpush1.bf16.msra.mxu0 0
      %610 = vmatprep.subr.bf16.mxu0 0
      %611 = vmatpush1.bf16.msra.mxu0 0
      %612 = vmatprep.mubr.bf16.mxu0 0
      %613 = vmatmul.mubr.bf16.gmra.mrb[0].mxu0 %v578
      %v614 = vpop.f32.mrb[0].mxu0
      %v615 = vadd.f32 0.0, %v614
      %v616 = vpop.f32.mrb[0].mxu0
      %v617 = vpop.f32.mrb[0].mxu0
      %v618 = vpop.f32.mrb[0].mxu0
      %619 = vdwg.mxu0
      %v620 = vrcp.pop %v575
      %v621 = vmul.f32 %v615, %v620
      %vm622 = vcmp.ge.s32.totalorder %v479, 8
      %vm623 = vcmp.lt.s32.totalorder %v479, 16
      %vm624 = vmand %vm622, %vm623
      %v625 = vsel %vm624, 1, 0
      %v626 = vcvt.s32.f32 %v625
      %v627 = vmul.f32 %v621, %v626
      %v628 = vadd.f32 %v554, %v627
      %629 = vset.pattern.permute.xlu0 2
      %630 = vperm.xlu0 %629, %v473
      %v631 = vpop.permute.xlu0 %630
      %v633 = vlaneseq
      %v634 = vshrl.u32 %v633, 7
      %v635 = vsub.s32 2, %v634
      %v636 = vrot.slane %v422, %v635
      %v637 = vadd.f32 %v631, %v636
      %v638 = vmul.f32 %v637, 0.2
      %v639 = vmax.f32 %v637, %v638
      %v640 = vadd.f32 %v639, %v328
      %v641 = vsel %vm337, %v640, -inf
      %642 = vmax.xlane.f32.xlu0 %v641
      %v643 = vpop.xlane.xlu0 %642
      %v644 = vsub.f32 %v640, %v643
      %v645 = vmul.f32 %v644, 1.442695
      %v646 = vpow.pop %v645
      %v647 = vsel %vm337, %v646, 0.0
      %648 = vadd.xlane.f32.xlu0 %v647
      %v649 = vpop.xlane.xlu0 %648
      %v650 = vpack.c.bf16 %v646, %v646
      %v652 = vsel %vm337, %v650, 0
      %654 = vmatprep.subr.bf16.mxu0 0
      %655 = vmatpush1.bf16.msra.mxu0 %v382
      %656 = vmatprep.subr.bf16.mxu0 0
      %657 = vmatpush1.bf16.msra.mxu0 0
      %658 = vmatprep.subr.bf16.mxu0 0
      %659 = vmatpush1.bf16.msra.mxu0 0
      %660 = vmatprep.subr.bf16.mxu0 0
      %661 = vmatpush1.bf16.msra.mxu0 0
      %662 = vmatprep.subr.bf16.mxu0 0
      %663 = vmatpush1.bf16.msra.mxu0 0
      %664 = vmatprep.subr.bf16.mxu0 0
      %665 = vmatpush1.bf16.msra.mxu0 0
      %666 = vmatprep.subr.bf16.mxu0 0
      %667 = vmatpush1.bf16.msra.mxu0 0
      %668 = vmatprep.subr.bf16.mxu0 0
      %669 = vmatpush1.bf16.msra.mxu0 0
      %670 = vmatprep.subr.bf16.mxu0 0
      %671 = vmatpush1.bf16.msra.mxu0 0
      %672 = vmatprep.subr.bf16.mxu0 0
      %673 = vmatpush1.bf16.msra.mxu0 0
      %674 = vmatprep.subr.bf16.mxu0 0
      %675 = vmatpush1.bf16.msra.mxu0 0
      %676 = vmatprep.subr.bf16.mxu0 0
      %677 = vmatpush1.bf16.msra.mxu0 0
      %678 = vmatprep.subr.bf16.mxu0 0
      %679 = vmatpush1.bf16.msra.mxu0 0
      %680 = vmatprep.subr.bf16.mxu0 0
      %681 = vmatpush1.bf16.msra.mxu0 0
      %682 = vmatprep.subr.bf16.mxu0 0
      %683 = vmatpush1.bf16.msra.mxu0 0
      %684 = vmatprep.subr.bf16.mxu0 0
      %685 = vmatpush1.bf16.msra.mxu0 0
      %686 = vmatprep.mubr.bf16.mxu0 0
      %687 = vmatmul.mubr.bf16.gmra.mrb[0].mxu0 %v652
      %v688 = vpop.f32.mrb[0].mxu0
      %v689 = vadd.f32 0.0, %v688
      %v690 = vpop.f32.mrb[0].mxu0
      %v691 = vpop.f32.mrb[0].mxu0
      %v692 = vpop.f32.mrb[0].mxu0
      %693 = vdwg.mxu0
      %v694 = vrcp.pop %v649
      %v695 = vmul.f32 %v689, %v694
      %vm696 = vcmp.ge.s32.totalorder %v479, 16
      %vm697 = vcmp.lt.s32.totalorder %v479, 24
      %vm698 = vmand %vm696, %vm697
      %v699 = vsel %vm698, 1, 0
      %v700 = vcvt.s32.f32 %v699
      %v701 = vmul.f32 %v695, %v700
      %v702 = vadd.f32 %v628, %v701
      %703 = vset.pattern.permute.xlu0 3
      %704 = vperm.xlu0 %703, %v473
      %v705 = vpop.permute.xlu0 %704
      %v707 = vlaneseq
      %v708 = vshrl.u32 %v707, 7
      %v709 = vsub.s32 3, %v708
      %v710 = vrot.slane %v422, %v709
      %v711 = vadd.f32 %v705, %v710
      %v712 = vmul.f32 %v711, 0.2
      %v713 = vmax.f32 %v711, %v712
      %v714 = vadd.f32 %v713, %v328
      %v715 = vsel %vm337, %v714, -inf
      %716 = vmax.xlane.f32.xlu0 %v715
      %v717 = vpop.xlane.xlu0 %716
      %v718 = vsub.f32 %v714, %v717
      %v719 = vmul.f32 %v718, 1.442695
      %v720 = vpow.pop %v719
      %v721 = vsel %vm337, %v720, 0.0
      %722 = vadd.xlane.f32.xlu0 %v721
      %v723 = vpop.xlane.xlu0 %722
      %v724 = vpack.c.bf16 %v720, %v720
      %v726 = vsel %vm337, %v724, 0
      %728 = vmatprep.subr.bf16.mxu0 0
      %729 = vmatpush1.bf16.msra.mxu0 %v382
      %730 = vmatprep.subr.bf16.mxu0 0
      %731 = vmatpush1.bf16.msra.mxu0 0
      %732 = vmatprep.subr.bf16.mxu0 0
      %733 = vmatpush1.bf16.msra.mxu0 0
      %734 = vmatprep.subr.bf16.mxu0 0
      %735 = vmatpush1.bf16.msra.mxu0 0
      %736 = vmatprep.subr.bf16.mxu0 0
      %737 = vmatpush1.bf16.msra.mxu0 0
      %738 = vmatprep.subr.bf16.mxu0 0
      %739 = vmatpush1.bf16.msra.mxu0 0
      %740 = vmatprep.subr.bf16.mxu0 0
      %741 = vmatpush1.bf16.msra.mxu0 0
      %742 = vmatprep.subr.bf16.mxu0 0
      %743 = vmatpush1.bf16.msra.mxu0 0
      %744 = vmatprep.subr.bf16.mxu0 0
      %745 = vmatpush1.bf16.msra.mxu0 0
      %746 = vmatprep.subr.bf16.mxu0 0
      %747 = vmatpush1.bf16.msra.mxu0 0
      %748 = vmatprep.subr.bf16.mxu0 0
      %749 = vmatpush1.bf16.msra.mxu0 0
      %750 = vmatprep.subr.bf16.mxu0 0
      %751 = vmatpush1.bf16.msra.mxu0 0
      %752 = vmatprep.subr.bf16.mxu0 0
      %753 = vmatpush1.bf16.msra.mxu0 0
      %754 = vmatprep.subr.bf16.mxu0 0
      %755 = vmatpush1.bf16.msra.mxu0 0
      %756 = vmatprep.subr.bf16.mxu0 0
      %757 = vmatpush1.bf16.msra.mxu0 0
      %758 = vmatprep.subr.bf16.mxu0 0
      %759 = vmatpush1.bf16.msra.mxu0 0
      %760 = vmatprep.mubr.bf16.mxu0 0
      %761 = vmatmul.mubr.bf16.gmra.mrb[0].mxu0 %v726
      %v762 = vpop.f32.mrb[0].mxu0
      %v763 = vadd.f32 0.0, %v762
      %v764 = vpop.f32.mrb[0].mxu0
      %v765 = vpop.f32.mrb[0].mxu0
      %v766 = vpop.f32.mrb[0].mxu0
      %767 = vdwg.mxu0
      %v768 = vrcp.pop %v723
      %v769 = vmul.f32 %v763, %v768
      %vm770 = vcmp.ge.s32.totalorder %v479, 24
      %vm771 = vcmp.lt.s32.totalorder %v479, 32
      %vm772 = vmand %vm770, %vm771
      %v773 = vsel %vm772, 1, 0
      %v774 = vcvt.s32.f32 %v773
      %v775 = vmul.f32 %v769, %v774
      %v776 = vadd.f32 %v702, %v775
      %v777 = vld [vmem:[%s7] sm:$0x1]
      %v779 = vlaneseq
      %v780 = vshrl.u32 %v779, 7
      %v781 = vsub.s32 0, %v780
      %v782 = vrot.slane %v777, %v781
      %v784 = vadd.f32 %v776, %v782
      %v785 = vmax.f32 %v784, 0.0
      %vm786 = vcmask 261120
      %787 = vst.msk [vmem:[%s317] sm:$0xff] %vm786, %v785
      %p788 = scmp.lt.s32.totalorder %s19, 1
      %s789 = scalar_select %p788, %s19, 1
      %s790 = smul.addr %s789, 8
      %s791 = scalar_lea.vmem %s8, %s790
      // Predicated region
      $region53: #{_lambda_.3} parent=51 // pred_check
        %p792 = pneg %p215
      $region54: #{_lambda_.3} parent=51 // pred_check_branch
        %794 = sbr.rel (%p792) target = $region56
      $region55: #{_lambda_.3} parent=51 // pred_region
        _
      $region56: #{_lambda_.3} parent=51 // pred_fallthru
        _
    $region52: #{_lambda_.3} parent=5 // pred_fallthru
      _
    %p795 = scmp.le.s32.totalorder 2, %s14
    // Predicated region
    $region57: #{_lambda_.3} parent=5 // pred_check
      %p796 = pneg %p795
    $region58: #{_lambda_.3} parent=5 // pred_check_branch
      %798 = sbr.rel (%p796) target = $region60
    $region59: #{_lambda_.3} parent=5 // pred_region
      %s799 = ssub.s32 %s14, 2
      // Predicated region
      $region61: #{_lambda_.3} parent=59 // pred_check
        %p800 = pneg %p221
      $region62: #{_lambda_.3} parent=59 // pred_check_branch
        %802 = sbr.rel (%p800) target = $region64
      $region63: #{_lambda_.3} parent=59 // pred_region
        %p803 = scmp.lt.s32.totalorder %s20, 1
        %s804 = scalar_select %p803, %s20, 1
        %s805 = smul.addr %s804, 8
        %s806 = scalar_lea.vmem %s8, %s805
      $region64: #{_lambda_.3} parent=59 // pred_fallthru
        _
    $region60: #{_lambda_.3} parent=5 // pred_fallthru
      _
  $region6: #{_lambda_.3} parent=0 // loop_footer
    %s18 = sadd.s32 1, %s14
  $region7: #{_lambda_.3} parent=0 // loop_footer_branch
    %13 = sbr.rel target = $region3
  $region8: #{_lambda_.3} parent=0 // loop_exit
    _

// kernel: _lambda_.4
$region0: #{_lambda_.4}
  #allocation0 [shape = 'u32[]', space=smem, size = 0x4, offset = 0x4, fixed_abs, tag = 'smem constant byte address 0x4 - core index']
  #allocation1 [shape = 'u32[144,128]{1,0:T(1,128)}', space=vmem, size = 0x12000, scoped, tag = 'internal scratch']
  %s0 = inlined_call_operand.vmem [shape: f32[16,32], index: 0, kind: input, shape index: {}, may-alias: {0,2}]
  %s1 = inlined_call_operand.vmem [shape: f32[32,16], index: 1, kind: input, shape index: {}]
  %s2 = inlined_call_operand.vmem [shape: f32[16,32], index: 2, kind: input, shape index: {}, may-alias: {0,2}]
  %s3 = inlined_call_operand.vmem [shape: bf16[16,16], index: 3, kind: input, shape index: {}]
  %s4 = inlined_call_operand.vmem [shape: bf16[32,32], index: 4, kind: input, shape index: {}]
  %s5 = inlined_call_operand.vmem [shape: bf16[4,32], index: 5, kind: input, shape index: {}]
  %s6 = inlined_call_operand.vmem [shape: bf16[32,4], index: 6, kind: input, shape index: {}]
  %s7 = inlined_call_operand.vmem [shape: f32[1,32], index: 7, kind: input, shape index: {}]
  %s8 = inlined_call_operand.vmem [shape: f32[16,32], index: 8, kind: output, shape index: {}]
  %s9 = sld [smem:[#allocation0]]
  $region65: #{_lambda_.4} parent=0
    _
  %s11 = ssub.s32 1, %s9
  %s12 = scalar_select 0, %s11, %s9
  loop: start=0, step=1, limit=4
  $region2: #{_lambda_.4} parent=0 // loop_pre_header
    _
  $region3: #{_lambda_.4} parent=0 // loop_header
    %s14 = sphi 0, %s18
    %p15 = scmp.ge.s32.totalorder %s14, 4
    %s22 = sphi 0, %s22
    %s24 = sphi 0, %s22
    %s25 = sphi 0, %s24
    %s39 = sphi 0, %s25
    %s43 = sphi 0, %s43
    %s45 = sphi 0, %s43
    %s46 = sphi 0, %s45
    %s60 = sphi 0, %s46
    %s66 = sphi 0, %s68
    %s69 = sphi 0, %s66
    %s70 = sphi 0, %s69
    %s86 = sphi 0, %s70
    %s92 = sphi 0, %s94
    %s95 = sphi 0, %s92
    %s96 = sphi 0, %s95
    %s112 = sphi 0, %s96
    %s116 = sphi 0, %s116
    %s118 = sphi 0, %s116
    %s119 = sphi 0, %s118
    %s133 = sphi 0, %s119
    %s137 = sphi 0, %s137
    %s139 = sphi 0, %s137
    %s140 = sphi 0, %s139
    %s154 = sphi 0, %s140
    %s158 = sphi 0, %s158
    %s160 = sphi 0, %s158
    %s161 = sphi 0, %s160
    %s175 = sphi 0, %s161
    %s179 = sphi 0, %s179
    %s181 = sphi 0, %s179
    %s182 = sphi 0, %s181
    %s196 = sphi 0, %s182
    %s202 = sphi 0, %s204
    %s205 = sphi 0, %s202
    %s206 = sphi 0, %s205
    %s222 = sphi 0, %s206
  $region4: #{_lambda_.4} parent=0 // loop_header_branch
    %17 = sbr.rel (%p15) target = $region8
  $region5: #{_lambda_.4} parent=0 // loop_body
    %s19 = ssub.s32 %s14, 1
    %s20 = ssub.s32 %s14, 2
    %s21 = sadd.s32 %s14, 1
    %s23 = sadd.s32 %s22, 1
    %p26 = scmp.eq.s32.totalorder %s14, 1
    %p27 = scmp.ne.s32.totalorder %s22, %s24
    %p28 = scmp.eq.s32.totalorder %s14, 0
    %p29 = por %p27, %p28
    %p30 = scmp.ne.s32.totalorder %s22, %s24
    %p31 = scmp.eq.s32.totalorder %s19, 1
    %p32 = por %p30, %p31
    %p33 = scmp.ne.s32.totalorder %s24, %s25
    %p34 = scmp.eq.s32.totalorder %s19, 0
    %p35 = por %p33, %p34
    %p36 = scmp.ne.s32.totalorder %s24, %s25
    %p37 = scmp.eq.s32.totalorder %s20, 1
    %p38 = por %p36, %p37
    %p40 = scmp.ne.s32.totalorder %s25, %s39
    %p41 = scmp.eq.s32.totalorder %s20, 0
    %p42 = por %p40, %p41
    %s44 = sadd.s32 %s43, 1
    %p47 = scmp.eq.s32.totalorder %s14, 1
    %p48 = scmp.ne.s32.totalorder %s43, %s45
    %p49 = scmp.eq.s32.totalorder %s14, 0
    %p50 = por %p48, %p49
    %p51 = scmp.ne.s32.totalorder %s43, %s45
    %p52 = scmp.eq.s32.totalorder %s19, 1
    %p53 = por %p51, %p52
    %p54 = scmp.ne.s32.totalorder %s45, %s46
    %p55 = scmp.eq.s32.totalorder %s19, 0
    %p56 = por %p54, %p55
    %p57 = scmp.ne.s32.totalorder %s45, %s46
    %p58 = scmp.eq.s32.totalorder %s20, 1
    %p59 = por %p57, %p58
    %p61 = scmp.ne.s32.totalorder %s46, %s60
    %p62 = scmp.eq.s32.totalorder %s20, 0
    %p63 = por %p61, %p62
    %s64 = ssub.s32 %s14, %s21
    %p65 = scmp.eq.s32.totalorder %s64, 0
    %s67 = sadd.s32 %s66, 1
    %s68 = scalar_select %p65, %s66, %s67
    %p71 = pneg %p65
    %p72 = scmp.eq.s32.totalorder %s14, 1
    %p73 = por %p71, %p72
    %p74 = scmp.ne.s32.totalorder %s66, %s69
    %p75 = scmp.eq.s32.totalorder %s14, 0
    %p76 = por %p74, %p75
    %p77 = scmp.ne.s32.totalorder %s66, %s69
    %p78 = scmp.eq.s32.totalorder %s19, 1
    %p79 = por %p77, %p78
    %p80 = scmp.ne.s32.totalorder %s69, %s70
    %p81 = scmp.eq.s32.totalorder %s19, 0
    %p82 = por %p80, %p81
    %p83 = scmp.ne.s32.totalorder %s69, %s70
    %p84 = scmp.eq.s32.totalorder %s20, 1
    %p85 = por %p83, %p84
    %p87 = scmp.ne.s32.totalorder %s70, %s86
    %p88 = scmp.eq.s32.totalorder %s20, 0
    %p89 = por %p87, %p88
    %s90 = ssub.s32 %s14, %s21
    %p91 = scmp.eq.s32.totalorder %s90, 0
    %s93 = sadd.s32 %s92, 1
    %s94 = scalar_select %p91, %s92, %s93
    %p97 = pneg %p91
    %p98 = scmp.eq.s32.totalorder %s14, 1
    %p99 = por %p97, %p98
    %p100 = scmp.ne.s32.totalorder %s92, %s95
    %p101 = scmp.eq.s32.totalorder %s14, 0
    %p102 = por %p100, %p101
    %p103 = scmp.ne.s32.totalorder %s92, %s95
    %p104 = scmp.eq.s32.totalorder %s19, 1
    %p105 = por %p103, %p104
    %p106 = scmp.ne.s32.totalorder %s95, %s96
    %p107 = scmp.eq.s32.totalorder %s19, 0
    %p108 = por %p106, %p107
    %p109 = scmp.ne.s32.totalorder %s95, %s96
    %p110 = scmp.eq.s32.totalorder %s20, 1
    %p111 = por %p109, %p110
    %p113 = scmp.ne.s32.totalorder %s96, %s112
    %p114 = scmp.eq.s32.totalorder %s20, 0
    %p115 = por %p113, %p114
    %s117 = sadd.s32 %s116, 1
    %p120 = scmp.eq.s32.totalorder %s14, 1
    %p121 = scmp.ne.s32.totalorder %s116, %s118
    %p122 = scmp.eq.s32.totalorder %s14, 0
    %p123 = por %p121, %p122
    %p124 = scmp.ne.s32.totalorder %s116, %s118
    %p125 = scmp.eq.s32.totalorder %s19, 1
    %p126 = por %p124, %p125
    %p127 = scmp.ne.s32.totalorder %s118, %s119
    %p128 = scmp.eq.s32.totalorder %s19, 0
    %p129 = por %p127, %p128
    %p130 = scmp.ne.s32.totalorder %s118, %s119
    %p131 = scmp.eq.s32.totalorder %s20, 1
    %p132 = por %p130, %p131
    %p134 = scmp.ne.s32.totalorder %s119, %s133
    %p135 = scmp.eq.s32.totalorder %s20, 0
    %p136 = por %p134, %p135
    %s138 = sadd.s32 %s137, 1
    %p141 = scmp.eq.s32.totalorder %s14, 1
    %p142 = scmp.ne.s32.totalorder %s137, %s139
    %p143 = scmp.eq.s32.totalorder %s14, 0
    %p144 = por %p142, %p143
    %p145 = scmp.ne.s32.totalorder %s137, %s139
    %p146 = scmp.eq.s32.totalorder %s19, 1
    %p147 = por %p145, %p146
    %p148 = scmp.ne.s32.totalorder %s139, %s140
    %p149 = scmp.eq.s32.totalorder %s19, 0
    %p150 = por %p148, %p149
    %p151 = scmp.ne.s32.totalorder %s139, %s140
    %p152 = scmp.eq.s32.totalorder %s20, 1
    %p153 = por %p151, %p152
    %p155 = scmp.ne.s32.totalorder %s140, %s154
    %p156 = scmp.eq.s32.totalorder %s20, 0
    %p157 = por %p155, %p156
    %s159 = sadd.s32 %s158, 1
    %p162 = scmp.eq.s32.totalorder %s14, 1
    %p163 = scmp.ne.s32.totalorder %s158, %s160
    %p164 = scmp.eq.s32.totalorder %s14, 0
    %p165 = por %p163, %p164
    %p166 = scmp.ne.s32.totalorder %s158, %s160
    %p167 = scmp.eq.s32.totalorder %s19, 1
    %p168 = por %p166, %p167
    %p169 = scmp.ne.s32.totalorder %s160, %s161
    %p170 = scmp.eq.s32.totalorder %s19, 0
    %p171 = por %p169, %p170
    %p172 = scmp.ne.s32.totalorder %s160, %s161
    %p173 = scmp.eq.s32.totalorder %s20, 1
    %p174 = por %p172, %p173
    %p176 = scmp.ne.s32.totalorder %s161, %s175
    %p177 = scmp.eq.s32.totalorder %s20, 0
    %p178 = por %p176, %p177
    %s180 = sadd.s32 %s179, 1
    %p183 = scmp.eq.s32.totalorder %s14, 1
    %p184 = scmp.ne.s32.totalorder %s179, %s181
    %p185 = scmp.eq.s32.totalorder %s14, 0
    %p186 = por %p184, %p185
    %p187 = scmp.ne.s32.totalorder %s179, %s181
    %p188 = scmp.eq.s32.totalorder %s19, 1
    %p189 = por %p187, %p188
    %p190 = scmp.ne.s32.totalorder %s181, %s182
    %p191 = scmp.eq.s32.totalorder %s19, 0
    %p192 = por %p190, %p191
    %p193 = scmp.ne.s32.totalorder %s181, %s182
    %p194 = scmp.eq.s32.totalorder %s20, 1
    %p195 = por %p193, %p194
    %p197 = scmp.ne.s32.totalorder %s182, %s196
    %p198 = scmp.eq.s32.totalorder %s20, 0
    %p199 = por %p197, %p198
    %s200 = ssub.s32 %s14, %s21
    %p201 = scmp.eq.s32.totalorder %s200, 0
    %s203 = sadd.s32 %s202, 1
    %s204 = scalar_select %p201, %s202, %s203
    %p207 = pneg %p201
    %p208 = scmp.eq.s32.totalorder %s14, 1
    %p209 = por %p207, %p208
    %p210 = scmp.ne.s32.totalorder %s202, %s205
    %p211 = scmp.eq.s32.totalorder %s14, 0
    %p212 = por %p210, %p211
    %p213 = scmp.ne.s32.totalorder %s202, %s205
    %p214 = scmp.eq.s32.totalorder %s19, 1
    %p215 = por %p213, %p214
    %p216 = scmp.ne.s32.totalorder %s205, %s206
    %p217 = scmp.eq.s32.totalorder %s19, 0
    %p218 = por %p216, %p217
    %p219 = scmp.ne.s32.totalorder %s205, %s206
    %p220 = scmp.eq.s32.totalorder %s20, 1
    %p221 = por %p219, %p220
    %p223 = scmp.ne.s32.totalorder %s206, %s222
    %p224 = scmp.eq.s32.totalorder %s20, 0
    %p225 = por %p223, %p224
    %p226 = scmp.le.s32.totalorder 1, %s14
    %p227 = scmp.lt.s32.totalorder %s14, 3
    %p228 = pnand %p226, %p227
    %p229 = pneg %p228
    // Predicated region
    $region9: #{_lambda_.4} parent=5 // pred_check
      _
    $region10: #{_lambda_.4} parent=5 // pred_check_branch
      %231 = sbr.rel (%p228) target = $region12
    $region11: #{_lambda_.4} parent=5 // pred_region
      %s232 = ssub.s32 %s14, 1
      // Predicated region
      $region13: #{_lambda_.4} parent=11 // pred_check
        %p233 = pneg %p35
      $region14: #{_lambda_.4} parent=11 // pred_check_branch
        %235 = sbr.rel (%p233) target = $region16
      $region15: #{_lambda_.4} parent=11 // pred_region
        _
      $region16: #{_lambda_.4} parent=11 // pred_fallthru
        _
      // Predicated region
      $region17: #{_lambda_.4} parent=11 // pred_check
        %p236 = pneg %p56
      $region18: #{_lambda_.4} parent=11 // pred_check_branch
        %238 = sbr.rel (%p236) target = $region20
      $region19: #{_lambda_.4} parent=11 // pred_region
        _
      $region20: #{_lambda_.4} parent=11 // pred_fallthru
        _
      // Predicated region
      $region21: #{_lambda_.4} parent=11 // pred_check
        %p239 = pneg %p129
      $region22: #{_lambda_.4} parent=11 // pred_check_branch
        %241 = sbr.rel (%p239) target = $region24
      $region23: #{_lambda_.4} parent=11 // pred_region
        _
      $region24: #{_lambda_.4} parent=11 // pred_fallthru
        _
      // Predicated region
      $region25: #{_lambda_.4} parent=11 // pred_check
        %p242 = pneg %p150
      $region26: #{_lambda_.4} parent=11 // pred_check_branch
        %244 = sbr.rel (%p242) target = $region28
      $region27: #{_lambda_.4} parent=11 // pred_region
        _
      $region28: #{_lambda_.4} parent=11 // pred_fallthru
        _
      // Predicated region
      $region29: #{_lambda_.4} parent=11 // pred_check
        %p245 = pneg %p171
      $region30: #{_lambda_.4} parent=11 // pred_check_branch
        %247 = sbr.rel (%p245) target = $region32
      $region31: #{_lambda_.4} parent=11 // pred_region
        _
      $region32: #{_lambda_.4} parent=11 // pred_fallthru
        _
      // Predicated region
      $region33: #{_lambda_.4} parent=11 // pred_check
        %p248 = pneg %p192
      $region34: #{_lambda_.4} parent=11 // pred_check_branch
        %250 = sbr.rel (%p248) target = $region36
      $region35: #{_lambda_.4} parent=11 // pred_region
        _
      $region36: #{_lambda_.4} parent=11 // pred_fallthru
        _
    $region12: #{_lambda_.4} parent=5 // pred_fallthru
      _
    %p251 = scmp.lt.s32.totalorder %s14, 2
    // Predicated region
    $region37: #{_lambda_.4} parent=5 // pred_check
      %p252 = pneg %p251
    $region38: #{_lambda_.4} parent=5 // pred_check_branch
      %254 = sbr.rel (%p252) target = $region40
    $region39: #{_lambda_.4} parent=5 // pred_region
      // Predicated region
      $region41: #{_lambda_.4} parent=39 // pred_check
        %p255 = pneg %p76
      $region42: #{_lambda_.4} parent=39 // pred_check_branch
        %257 = sbr.rel (%p255) target = $region44
      $region43: #{_lambda_.4} parent=39 // pred_region
        %p258 = scmp.lt.s32.totalorder %s14, 1
        %s259 = scalar_select %p258, %s14, 1
        %s260 = smul.addr %s259, 8
        %s261 = scalar_lea.vmem %s2, %s260
      $region44: #{_lambda_.4} parent=39 // pred_fallthru
        _
      // Predicated region
      $region45: #{_lambda_.4} parent=39 // pred_check
        %p262 = pneg %p102
      $region46: #{_lambda_.4} parent=39 // pred_check_branch
        %264 = sbr.rel (%p262) target = $region48
      $region47: #{_lambda_.4} parent=39 // pred_region
        %p265 = scmp.lt.s32.totalorder %s14, 1
        %s266 = scalar_select %p265, %s14, 1
        %s267 = smul.addr %s266, 4
        %s268 = scalar_lea.vmem %s3, %s267
      $region48: #{_lambda_.4} parent=39 // pred_fallthru
        _
    $region40: #{_lambda_.4} parent=5 // pred_fallthru
      _
    %p269 = scmp.le.s32.totalorder 1, %s14
    %p270 = scmp.lt.s32.totalorder %s14, 3
    %p271 = pnand %p269, %p270
    %p272 = pneg %p271
    // Predicated region
    $region49: #{_lambda_.4} parent=5 // pred_check
      _
    $region50: #{_lambda_.4} parent=5 // pred_check_branch
      %274 = sbr.rel (%p271) target = $region52
    $region51: #{_lambda_.4} parent=5 // pred_region
      %s275 = ssub.s32 %s14, 1
      %p276 = pneg %p35
      %p277 = pneg %p32
      %p278 = pneg %p56
      %p279 = pneg %p53
      %p280 = scmp.lt.s32.totalorder %s19, 1
      %s281 = scalar_select %p280, %s19, 1
      %s282 = smul.addr %s281, 8
      %s283 = scalar_lea.vmem %s2, %s282
      %p284 = pneg %p82
      %p285 = pneg %p79
      %p286 = scmp.lt.s32.totalorder %s19, 1
      %s287 = scalar_select %p286, %s19, 1
      %s288 = smul.addr %s287, 4
      %s289 = scalar_lea.vmem %s3, %s288
      %p290 = pneg %p108
      %p291 = pneg %p105
      %p292 = pneg %p129
      %p293 = pneg %p126
      %p294 = pneg %p150
      %p295 = pneg %p147
      %p296 = pneg %p171
      %p297 = pneg %p168
      %p298 = pneg %p192
      %p299 = pneg %p189
      %p300 = pneg %p218
      %p301 = pneg %p215
      %p302 = scmp.lt.s32.totalorder %s19, 1
      %s303 = scalar_select %p302, %s19, 1
      %s304 = smul.addr %s303, 8
      %s305 = scalar_lea.vmem %s8, %s304
      %p306 = scmp.lt.s32.totalorder %s19, 1
      %s307 = scalar_select %p306, %s19, 1
      %s308 = smul.addr %s307, 8
      %s309 = scalar_lea.vmem %s2, %s308
      %p310 = scmp.lt.s32.totalorder %s19, 1
      %s311 = scalar_select %p310, %s19, 1
      %s312 = smul.addr %s311, 4
      %s313 = scalar_lea.vmem %s3, %s312
      %p314 = scmp.lt.s32.totalorder %s19, 1
      %s315 = scalar_select %p314, %s19, 1
      %s316 = smul.addr %s315, 8
      %s317 = scalar_lea.vmem %s8, %s316
      %v319 = vld [vmem:[%s0] sm:$0xff]
      %v320 = vld [vmem:[%s0 + $0x8] sm:$0xff]
      %v321 = vpack.c.bf16 %v320, %v319
      %v322 = vld [vmem:[%s1] sm:$0xff]
      %v323 = vld [vmem:[%s1 + $0x8] sm:$0xff]
      %v324 = vld [vmem:[%s1 + $0x10] sm:$0xff]
      %v325 = vld [vmem:[%s1 + $0x18] sm:$0xff]
      %v326 = vpack.c.bf16 %v323, %v322
      %v327 = vpack.c.bf16 %v325, %v324
      %v328 = vld [vmem:[%s309] sm:$0xff]
      %v329 = vpack.c.bf16 %v328, %v328
      %v330 = vld [vmem:[%s313] sm:$0xf]
      %v331 = vunpack.c.l.bf16 %v330
      %v332 = vld [vmem:[%s4] sm:$0xf]
      %v333 = vld [vmem:[%s4 + $0x4] sm:$0xf]
      %v334 = vld [vmem:[%s4 + $0x8] sm:$0xf]
      %v335 = vld [vmem:[%s4 + $0xc] sm:$0xf]
      %v340 = vunpack.c.l.b16 %v332
      %v341 = vunpack.c.l.b16 %v333
      %v342 = vunpack.c.l.b16 %v334
      %v343 = vunpack.c.l.b16 %v335
      %v344 = vpack.c.b16 %v341, %v340
      %v345 = vpack.c.b16 %v343, %v342
      %vm348 = vcmask 261120
      %v350 = vsel %vm348, %v321, 0
      %352 = vmatprep.subr.bf16.mxu0 0
      %353 = vmatpush1.bf16.msra.mxu0 %v344
      %354 = vmatprep.subr.bf16.mxu0 0
      %355 = vmatpush1.bf16.msra.mxu0 %v345
      %356 = vmatprep.subr.bf16.mxu0 0
      %357 = vmatpush1.bf16.msra.mxu0 0
      %358 = vmatprep.subr.bf16.mxu0 0
      %359 = vmatpush1.bf16.msra.mxu0 0
      %360 = vmatprep.subr.bf16.mxu0 0
      %361 = vmatpush1.bf16.msra.mxu0 0
      %362 = vmatprep.subr.bf16.mxu0 0
      %363 = vmatpush1.bf16.msra.mxu0 0
      %364 = vmatprep.subr.bf16.mxu0 0
      %365 = vmatpush1.bf16.msra.mxu0 0
      %366 = vmatprep.subr.bf16.mxu0 0
      %367 = vmatpush1.bf16.msra.mxu0 0
      %368 = vmatprep.subr.bf16.mxu0 0
      %369 = vmatpush1.bf16.msra.mxu0 0
      %370 = vmatprep.subr.bf16.mxu0 0
      %371 = vmatpush1.bf16.msra.mxu0 0
      %372 = vmatprep.subr.bf16.mxu0 0
      %373 = vmatpush1.bf16.msra.mxu0 0
      %374 = vmatprep.subr.bf16.mxu0 0
      %375 = vmatpush1.bf16.msra.mxu0 0
      %376 = vmatprep.subr.bf16.mxu0 0
      %377 = vmatpush1.bf16.msra.mxu0 0
      %378 = vmatprep.subr.bf16.mxu0 0
      %379 = vmatpush1.bf16.msra.mxu0 0
      %380 = vmatprep.subr.bf16.mxu0 0
      %381 = vmatpush1.bf16.msra.mxu0 0
      %382 = vmatprep.subr.bf16.mxu0 0
      %383 = vmatpush1.bf16.msra.mxu0 0
      %384 = vmatprep.mubr.bf16.mxu0 0
      %385 = vmatmul.mubr.bf16.gmra.mrb[0].mxu0 %v350
      %v386 = vpop.f32.mrb[0].mxu0
      %v387 = vadd.f32 0.0, %v386
      %v388 = vpop.f32.mrb[0].mxu0
      %v389 = vpop.f32.mrb[0].mxu0
      %v390 = vadd.f32 0.0, %v389
      %v391 = vpop.f32.mrb[0].mxu0
      %392 = vdwg.mxu0
      %v393 = vpack.c.bf16 %v390, %v387
      %v394 = vld [vmem:[%s5] sm:$0x3]
      %v396 = vsel %vm348, %v394, 0
      %398 = vmatprep.subr.bf16.mxu0 0
      %399 = vmatpush1.bf16.msra.mxu0 %v326
      %400 = vmatprep.subr.bf16.mxu0 0
      %401 = vmatpush1.bf16.msra.mxu0 %v327
      %402 = vmatprep.subr.bf16.mxu0 0
      %403 = vmatpush1.bf16.msra.mxu0 0
      %404 = vmatprep.subr.bf16.mxu0 0
      %405 = vmatpush1.bf16.msra.mxu0 0
      %406 = vmatprep.subr.bf16.mxu0 0
      %407 = vmatpush1.bf16.msra.mxu0 0
      %408 = vmatprep.subr.bf16.mxu0 0
      %409 = vmatpush1.bf16.msra.mxu0 0
      %410 = vmatprep.subr.bf16.mxu0 0
      %411 = vmatpush1.bf16.msra.mxu0 0
      %412 = vmatprep.subr.bf16.mxu0 0
      %413 = vmatpush1.bf16.msra.mxu0 0
      %414 = vmatprep.subr.bf16.mxu0 0
      %415 = vmatpush1.bf16.msra.mxu0 0
      %416 = vmatprep.subr.bf16.mxu0 0
      %417 = vmatpush1.bf16.msra.mxu0 0
      %418 = vmatprep.subr.bf16.mxu0 0
      %419 = vmatpush1.bf16.msra.mxu0 0
      %420 = vmatprep.subr.bf16.mxu0 0
      %421 = vmatpush1.bf16.msra.mxu0 0
      %422 = vmatprep.subr.bf16.mxu0 0
      %423 = vmatpush1.bf16.msra.mxu0 0
      %424 = vmatprep.subr.bf16.mxu0 0
      %425 = vmatpush1.bf16.msra.mxu0 0
      %426 = vmatprep.subr.bf16.mxu0 0
      %427 = vmatpush1.bf16.msra.mxu0 0
      %428 = vmatprep.subr.bf16.mxu0 0
      %429 = vmatpush1.bf16.msra.mxu0 0
      %430 = vmatprep.mubr.bf16.mxu0 0
      %431 = vmatmul.mubr.bf16.gmra.mrb[0].mxu0 %v396
      %v432 = vpop.f32.mrb[0].mxu0
      %v433 = vadd.f32 0.0, %v432
      %v434 = vpop.f32.mrb[0].mxu0
      %v435 = vpop.f32.mrb[0].mxu0
      %v436 = vpop.f32.mrb[0].mxu0
      %437 = vdwg.mxu0
      %v438 = vld [vmem:[%s6] sm:$0xf]
      %v439 = vld [vmem:[%s6 + $0x4] sm:$0xf]
      %v440 = vld [vmem:[%s6 + $0x8] sm:$0xf]
      %v441 = vld [vmem:[%s6 + $0xc] sm:$0xf]
      %v446 = vunpack.c.l.b16 %v438
      %v447 = vunpack.c.l.b16 %v439
      %v448 = vunpack.c.l.b16 %v440
      %v449 = vunpack.c.l.b16 %v441
      %v450 = vpack.c.b16 %v447, %v446
      %v451 = vpack.c.b16 %v449, %v448
      %v455 = vsel %vm348, %v329, 0
      %457 = vmatprep.subr.bf16.mxu0 0
      %458 = vmatpush1.bf16.msra.mxu0 %v450
      %459 = vmatprep.subr.bf16.mxu0 0
      %460 = vmatpush1.bf16.msra.mxu0 %v451
      %461 = vmatprep.subr.bf16.mxu0 0
      %462 = vmatpush1.bf16.msra.mxu0 0
      %463 = vmatprep.subr.bf16.mxu0 0
      %464 = vmatpush1.bf16.msra.mxu0 0
      %465 = vmatprep.subr.bf16.mxu0 0
      %466 = vmatpush1.bf16.msra.mxu0 0
      %467 = vmatprep.subr.bf16.mxu0 0
      %468 = vmatpush1.bf16.msra.mxu0 0
      %469 = vmatprep.subr.bf16.mxu0 0
      %470 = vmatpush1.bf16.msra.mxu0 0
      %471 = vmatprep.subr.bf16.mxu0 0
      %472 = vmatpush1.bf16.msra.mxu0 0
      %473 = vmatprep.subr.bf16.mxu0 0
      %474 = vmatpush1.bf16.msra.mxu0 0
      %475 = vmatprep.subr.bf16.mxu0 0
      %476 = vmatpush1.bf16.msra.mxu0 0
      %477 = vmatprep.subr.bf16.mxu0 0
      %478 = vmatpush1.bf16.msra.mxu0 0
      %479 = vmatprep.subr.bf16.mxu0 0
      %480 = vmatpush1.bf16.msra.mxu0 0
      %481 = vmatprep.subr.bf16.mxu0 0
      %482 = vmatpush1.bf16.msra.mxu0 0
      %483 = vmatprep.subr.bf16.mxu0 0
      %484 = vmatpush1.bf16.msra.mxu0 0
      %485 = vmatprep.subr.bf16.mxu0 0
      %486 = vmatpush1.bf16.msra.mxu0 0
      %487 = vmatprep.subr.bf16.mxu0 0
      %488 = vmatpush1.bf16.msra.mxu0 0
      %489 = vmatprep.mubr.bf16.mxu0 0
      %490 = vmatmul.mubr.bf16.gmra.mrb[0].mxu0 %v455
      %v491 = vpop.f32.mrb[0].mxu0
      %v492 = vadd.f32 0.0, %v491
      %v493 = vpop.f32.mrb[0].mxu0
      %v494 = vpop.f32.mrb[0].mxu0
      %v495 = vpop.f32.mrb[0].mxu0
      %496 = vdwg.mxu0
      %v497 = vlaneseq
      %v498 = vand.u32 %v497, 127
      %500 = vset.pattern.permute.xlu0 0
      %501 = vperm.xlu0 %500, %v492
      %v502 = vpop.permute.xlu0 %501
      %v504 = vlaneseq
      %v505 = vshrl.u32 %v504, 7
      %v506 = vsub.s32 0, %v505
      %v507 = vrot.slane %v433, %v506
      %v508 = vadd.f32 %v502, %v507
      %v509 = vmul.f32 %v508, 0.2
      %v510 = vmax.f32 %v508, %v509
      %v511 = vadd.f32 %v510, %v331
      %vm512 = vcmask 130048
      %v513 = vsel %vm512, %v511, -inf
      %514 = vmax.xlane.f32.xlu0 %v513
      %v515 = vpop.xlane.xlu0 %514
      %v516 = vsub.f32 %v511, %v515
      %v517 = vmul.f32 %v516, 1.442695
      %v518 = vpow.pop %v517
      %v519 = vsel %vm512, %v518, 0.0
      %520 = vadd.xlane.f32.xlu0 %v519
      %v521 = vpop.xlane.xlu0 %520
      %v522 = vpack.c.bf16 %v518, %v518
      %v524 = vsel %vm512, %v522, 0
      %526 = vmatprep.subr.bf16.mxu0 0
      %527 = vmatpush1.bf16.msra.mxu0 %v393
      %528 = vmatprep.subr.bf16.mxu0 0
      %529 = vmatpush1.bf16.msra.mxu0 0
      %530 = vmatprep.subr.bf16.mxu0 0
      %531 = vmatpush1.bf16.msra.mxu0 0
      %532 = vmatprep.subr.bf16.mxu0 0
      %533 = vmatpush1.bf16.msra.mxu0 0
      %534 = vmatprep.subr.bf16.mxu0 0
      %535 = vmatpush1.bf16.msra.mxu0 0
      %536 = vmatprep.subr.bf16.mxu0 0
      %537 = vmatpush1.bf16.msra.mxu0 0
      %538 = vmatprep.subr.bf16.mxu0 0
      %539 = vmatpush1.bf16.msra.mxu0 0
      %540 = vmatprep.subr.bf16.mxu0 0
      %541 = vmatpush1.bf16.msra.mxu0 0
      %542 = vmatprep.subr.bf16.mxu0 0
      %543 = vmatpush1.bf16.msra.mxu0 0
      %544 = vmatprep.subr.bf16.mxu0 0
      %545 = vmatpush1.bf16.msra.mxu0 0
      %546 = vmatprep.subr.bf16.mxu0 0
      %547 = vmatpush1.bf16.msra.mxu0 0
      %548 = vmatprep.subr.bf16.mxu0 0
      %549 = vmatpush1.bf16.msra.mxu0 0
      %550 = vmatprep.subr.bf16.mxu0 0
      %551 = vmatpush1.bf16.msra.mxu0 0
      %552 = vmatprep.subr.bf16.mxu0 0
      %553 = vmatpush1.bf16.msra.mxu0 0
      %554 = vmatprep.subr.bf16.mxu0 0
      %555 = vmatpush1.bf16.msra.mxu0 0
      %556 = vmatprep.subr.bf16.mxu0 0
      %557 = vmatpush1.bf16.msra.mxu0 0
      %558 = vmatprep.mubr.bf16.mxu0 0
      %559 = vmatmul.mubr.bf16.gmra.mrb[0].mxu0 %v524
      %v560 = vpop.f32.mrb[0].mxu0
      %v561 = vadd.f32 0.0, %v560
      %v562 = vpop.f32.mrb[0].mxu0
      %v563 = vpop.f32.mrb[0].mxu0
      %v564 = vpop.f32.mrb[0].mxu0
      %565 = vdwg.mxu0
      %v566 = vrcp.pop %v521
      %v567 = vmul.f32 %v561, %v566
      %vm568 = vcmp.ge.s32.totalorder %v498, 0
      %vm569 = vcmp.lt.s32.totalorder %v498, 8
      %vm570 = vmand %vm568, %vm569
      %v571 = vsel %vm570, 1, 0
      %v572 = vcvt.s32.f32 %v571
      %v573 = vmul.f32 %v567, %v572
      %v574 = vadd.f32 %v573, 0.0
      %575 = vset.pattern.permute.xlu0 1
      %576 = vperm.xlu0 %575, %v492
      %v577 = vpop.permute.xlu0 %576
      %v579 = vlaneseq
      %v580 = vshrl.u32 %v579, 7
      %v581 = vsub.s32 1, %v580
      %v582 = vrot.slane %v433, %v581
      %v583 = vadd.f32 %v577, %v582
      %v584 = vmul.f32 %v583, 0.2
      %v585 = vmax.f32 %v583, %v584
      %v586 = vadd.f32 %v585, %v331
      %v587 = vsel %vm512, %v586, -inf
      %588 = vmax.xlane.f32.xlu0 %v587
      %v589 = vpop.xlane.xlu0 %588
      %v590 = vsub.f32 %v586, %v589
      %v591 = vmul.f32 %v590, 1.442695
      %v592 = vpow.pop %v591
      %v593 = vsel %vm512, %v592, 0.0
      %594 = vadd.xlane.f32.xlu0 %v593
      %v595 = vpop.xlane.xlu0 %594
      %v596 = vpack.c.bf16 %v592, %v592
      %v598 = vsel %vm512, %v596, 0
      %600 = vmatprep.subr.bf16.mxu0 0
      %601 = vmatpush1.bf16.msra.mxu0 %v393
      %602 = vmatprep.subr.bf16.mxu0 0
      %603 = vmatpush1.bf16.msra.mxu0 0
      %604 = vmatprep.subr.bf16.mxu0 0
      %605 = vmatpush1.bf16.msra.mxu0 0
      %606 = vmatprep.subr.bf16.mxu0 0
      %607 = vmatpush1.bf16.msra.mxu0 0
      %608 = vmatprep.subr.bf16.mxu0 0
      %609 = vmatpush1.bf16.msra.mxu0 0
      %610 = vmatprep.subr.bf16.mxu0 0
      %611 = vmatpush1.bf16.msra.mxu0 0
      %612 = vmatprep.subr.bf16.mxu0 0
      %613 = vmatpush1.bf16.msra.mxu0 0
      %614 = vmatprep.subr.bf16.mxu0 0
      %615 = vmatpush1.bf16.msra.mxu0 0
      %616 = vmatprep.subr.bf16.mxu0 0
      %617 = vmatpush1.bf16.msra.mxu0 0
      %618 = vmatprep.subr.bf16.mxu0 0
      %619 = vmatpush1.bf16.msra.mxu0 0
      %620 = vmatprep.subr.bf16.mxu0 0
      %621 = vmatpush1.bf16.msra.mxu0 0
      %622 = vmatprep.subr.bf16.mxu0 0
      %623 = vmatpush1.bf16.msra.mxu0 0
      %624 = vmatprep.subr.bf16.mxu0 0
      %625 = vmatpush1.bf16.msra.mxu0 0
      %626 = vmatprep.subr.bf16.mxu0 0
      %627 = vmatpush1.bf16.msra.mxu0 0
      %628 = vmatprep.subr.bf16.mxu0 0
      %629 = vmatpush1.bf16.msra.mxu0 0
      %630 = vmatprep.subr.bf16.mxu0 0
      %631 = vmatpush1.bf16.msra.mxu0 0
      %632 = vmatprep.mubr.bf16.mxu0 0
      %633 = vmatmul.mubr.bf16.gmra.mrb[0].mxu0 %v598
      %v634 = vpop.f32.mrb[0].mxu0
      %v635 = vadd.f32 0.0, %v634
      %v636 = vpop.f32.mrb[0].mxu0
      %v637 = vpop.f32.mrb[0].mxu0
      %v638 = vpop.f32.mrb[0].mxu0
      %639 = vdwg.mxu0
      %v640 = vrcp.pop %v595
      %v641 = vmul.f32 %v635, %v640
      %vm642 = vcmp.ge.s32.totalorder %v498, 8
      %vm643 = vcmp.lt.s32.totalorder %v498, 16
      %vm644 = vmand %vm642, %vm643
      %v645 = vsel %vm644, 1, 0
      %v646 = vcvt.s32.f32 %v645
      %v647 = vmul.f32 %v641, %v646
      %v648 = vadd.f32 %v574, %v647
      %649 = vset.pattern.permute.xlu0 2
      %650 = vperm.xlu0 %649, %v492
      %v651 = vpop.permute.xlu0 %650
      %v653 = vlaneseq
      %v654 = vshrl.u32 %v653, 7
      %v655 = vsub.s32 2, %v654
      %v656 = vrot.slane %v433, %v655
      %v657 = vadd.f32 %v651, %v656
      %v658 = vmul.f32 %v657, 0.2
      %v659 = vmax.f32 %v657, %v658
      %v660 = vadd.f32 %v659, %v331
      %v661 = vsel %vm512, %v660, -inf
      %662 = vmax.xlane.f32.xlu0 %v661
      %v663 = vpop.xlane.xlu0 %662
      %v664 = vsub.f32 %v660, %v663
      %v665 = vmul.f32 %v664, 1.442695
      %v666 = vpow.pop %v665
      %v667 = vsel %vm512, %v666, 0.0
      %668 = vadd.xlane.f32.xlu0 %v667
      %v669 = vpop.xlane.xlu0 %668
      %v670 = vpack.c.bf16 %v666, %v666
      %v672 = vsel %vm512, %v670, 0
      %674 = vmatprep.subr.bf16.mxu0 0
      %675 = vmatpush1.bf16.msra.mxu0 %v393
      %676 = vmatprep.subr.bf16.mxu0 0
      %677 = vmatpush1.bf16.msra.mxu0 0
      %678 = vmatprep.subr.bf16.mxu0 0
      %679 = vmatpush1.bf16.msra.mxu0 0
      %680 = vmatprep.subr.bf16.mxu0 0
      %681 = vmatpush1.bf16.msra.mxu0 0
      %682 = vmatprep.subr.bf16.mxu0 0
      %683 = vmatpush1.bf16.msra.mxu0 0
      %684 = vmatprep.subr.bf16.mxu0 0
      %685 = vmatpush1.bf16.msra.mxu0 0
      %686 = vmatprep.subr.bf16.mxu0 0
      %687 = vmatpush1.bf16.msra.mxu0 0
      %688 = vmatprep.subr.bf16.mxu0 0
      %689 = vmatpush1.bf16.msra.mxu0 0
      %690 = vmatprep.subr.bf16.mxu0 0
      %691 = vmatpush1.bf16.msra.mxu0 0
      %692 = vmatprep.subr.bf16.mxu0 0
      %693 = vmatpush1.bf16.msra.mxu0 0
      %694 = vmatprep.subr.bf16.mxu0 0
      %695 = vmatpush1.bf16.msra.mxu0 0
      %696 = vmatprep.subr.bf16.mxu0 0
      %697 = vmatpush1.bf16.msra.mxu0 0
      %698 = vmatprep.subr.bf16.mxu0 0
      %699 = vmatpush1.bf16.msra.mxu0 0
      %700 = vmatprep.subr.bf16.mxu0 0
      %701 = vmatpush1.bf16.msra.mxu0 0
      %702 = vmatprep.subr.bf16.mxu0 0
      %703 = vmatpush1.bf16.msra.mxu0 0
      %704 = vmatprep.subr.bf16.mxu0 0
      %705 = vmatpush1.bf16.msra.mxu0 0
      %706 = vmatprep.mubr.bf16.mxu0 0
      %707 = vmatmul.mubr.bf16.gmra.mrb[0].mxu0 %v672
      %v708 = vpop.f32.mrb[0].mxu0
      %v709 = vadd.f32 0.0, %v708
      %v710 = vpop.f32.mrb[0].mxu0
      %v711 = vpop.f32.mrb[0].mxu0
      %v712 = vpop.f32.mrb[0].mxu0
      %713 = vdwg.mxu0
      %v714 = vrcp.pop %v669
      %v715 = vmul.f32 %v709, %v714
      %vm716 = vcmp.ge.s32.totalorder %v498, 16
      %vm717 = vcmp.lt.s32.totalorder %v498, 24
      %vm718 = vmand %vm716, %vm717
      %v719 = vsel %vm718, 1, 0
      %v720 = vcvt.s32.f32 %v719
      %v721 = vmul.f32 %v715, %v720
      %v722 = vadd.f32 %v648, %v721
      %723 = vset.pattern.permute.xlu0 3
      %724 = vperm.xlu0 %723, %v492
      %v725 = vpop.permute.xlu0 %724
      %v727 = vlaneseq
      %v728 = vshrl.u32 %v727, 7
      %v729 = vsub.s32 3, %v728
      %v730 = vrot.slane %v433, %v729
      %v731 = vadd.f32 %v725, %v730
      %v732 = vmul.f32 %v731, 0.2
      %v733 = vmax.f32 %v731, %v732
      %v734 = vadd.f32 %v733, %v331
      %v735 = vsel %vm512, %v734, -inf
      %736 = vmax.xlane.f32.xlu0 %v735
      %v737 = vpop.xlane.xlu0 %736
      %v738 = vsub.f32 %v734, %v737
      %v739 = vmul.f32 %v738, 1.442695
      %v740 = vpow.pop %v739
      %v741 = vsel %vm512, %v740, 0.0
      %742 = vadd.xlane.f32.xlu0 %v741
      %v743 = vpop.xlane.xlu0 %742
      %v744 = vpack.c.bf16 %v740, %v740
      %v746 = vsel %vm512, %v744, 0
      %748 = vmatprep.subr.bf16.mxu0 0
      %749 = vmatpush1.bf16.msra.mxu0 %v393
      %750 = vmatprep.subr.bf16.mxu0 0
      %751 = vmatpush1.bf16.msra.mxu0 0
      %752 = vmatprep.subr.bf16.mxu0 0
      %753 = vmatpush1.bf16.msra.mxu0 0
      %754 = vmatprep.subr.bf16.mxu0 0
      %755 = vmatpush1.bf16.msra.mxu0 0
      %756 = vmatprep.subr.bf16.mxu0 0
      %757 = vmatpush1.bf16.msra.mxu0 0
      %758 = vmatprep.subr.bf16.mxu0 0
      %759 = vmatpush1.bf16.msra.mxu0 0
      %760 = vmatprep.subr.bf16.mxu0 0
      %761 = vmatpush1.bf16.msra.mxu0 0
      %762 = vmatprep.subr.bf16.mxu0 0
      %763 = vmatpush1.bf16.msra.mxu0 0
      %764 = vmatprep.subr.bf16.mxu0 0
      %765 = vmatpush1.bf16.msra.mxu0 0
      %766 = vmatprep.subr.bf16.mxu0 0
      %767 = vmatpush1.bf16.msra.mxu0 0
      %768 = vmatprep.subr.bf16.mxu0 0
      %769 = vmatpush1.bf16.msra.mxu0 0
      %770 = vmatprep.subr.bf16.mxu0 0
      %771 = vmatpush1.bf16.msra.mxu0 0
      %772 = vmatprep.subr.bf16.mxu0 0
      %773 = vmatpush1.bf16.msra.mxu0 0
      %774 = vmatprep.subr.bf16.mxu0 0
      %775 = vmatpush1.bf16.msra.mxu0 0
      %776 = vmatprep.subr.bf16.mxu0 0
      %777 = vmatpush1.bf16.msra.mxu0 0
      %778 = vmatprep.subr.bf16.mxu0 0
      %779 = vmatpush1.bf16.msra.mxu0 0
      %780 = vmatprep.mubr.bf16.mxu0 0
      %781 = vmatmul.mubr.bf16.gmra.mrb[0].mxu0 %v746
      %v782 = vpop.f32.mrb[0].mxu0
      %v783 = vadd.f32 0.0, %v782
      %v784 = vpop.f32.mrb[0].mxu0
      %v785 = vpop.f32.mrb[0].mxu0
      %v786 = vpop.f32.mrb[0].mxu0
      %787 = vdwg.mxu0
      %v788 = vrcp.pop %v743
      %v789 = vmul.f32 %v783, %v788
      %vm790 = vcmp.ge.s32.totalorder %v498, 24
      %vm791 = vcmp.lt.s32.totalorder %v498, 32
      %vm792 = vmand %vm790, %vm791
      %v793 = vsel %vm792, 1, 0
      %v794 = vcvt.s32.f32 %v793
      %v795 = vmul.f32 %v789, %v794
      %v796 = vadd.f32 %v722, %v795
      %v797 = vld [vmem:[%s7] sm:$0x1]
      %v799 = vlaneseq
      %v800 = vshrl.u32 %v799, 7
      %v801 = vsub.s32 0, %v800
      %v802 = vrot.slane %v797, %v801
      %v804 = vadd.f32 %v796, %v802
      %v805 = vmax.f32 %v804, 0.0
      %806 = vst.msk [vmem:[%s317] sm:$0xff] %vm348, %v805
      %p807 = scmp.lt.s32.totalorder %s19, 1
      %s808 = scalar_select %p807, %s19, 1
      %s809 = smul.addr %s808, 8
      %s810 = scalar_lea.vmem %s8, %s809
      // Predicated region
      $region53: #{_lambda_.4} parent=51 // pred_check
        %p811 = pneg %p215
      $region54: #{_lambda_.4} parent=51 // pred_check_branch
        %813 = sbr.rel (%p811) target = $region56
      $region55: #{_lambda_.4} parent=51 // pred_region
        _
      $region56: #{_lambda_.4} parent=51 // pred_fallthru
        _
    $region52: #{_lambda_.4} parent=5 // pred_fallthru
      _
    %p814 = scmp.le.s32.totalorder 2, %s14
    // Predicated region
    $region57: #{_lambda_.4} parent=5 // pred_check
      %p815 = pneg %p814
    $region58: #{_lambda_.4} parent=5 // pred_check_branch
      %817 = sbr.rel (%p815) target = $region60
    $region59: #{_lambda_.4} parent=5 // pred_region
      %s818 = ssub.s32 %s14, 2
      // Predicated region
      $region61: #{_lambda_.4} parent=59 // pred_check
        %p819 = pneg %p221
      $region62: #{_lambda_.4} parent=59 // pred_check_branch
        %821 = sbr.rel (%p819) target = $region64
      $region63: #{_lambda_.4} parent=59 // pred_region
        %p822 = scmp.lt.s32.totalorder %s20, 1
        %s823 = scalar_select %p822, %s20, 1
        %s824 = smul.addr %s823, 8
        %s825 = scalar_lea.vmem %s8, %s824
      $region64: #{_lambda_.4} parent=59 // pred_fallthru
        _
    $region60: #{_lambda_.4} parent=5 // pred_fallthru
      _
  $region6: #{_lambda_.4} parent=0 // loop_footer
    %s18 = sadd.s32 1, %s14
  $region7: #{_lambda_.4} parent=0 // loop_footer_branch
    %13 = sbr.rel target = $region3
  $region8: #{_lambda_.4} parent=0 // loop_exit
    _

// kernel: _lambda_.5
$region0: #{_lambda_.5}
  #allocation0 [shape = 'u32[]', space=smem, size = 0x4, offset = 0x4, fixed_abs, tag = 'smem constant byte address 0x4 - core index']
  #allocation1 [shape = 'u32[144,128]{1,0:T(1,128)}', space=vmem, size = 0x12000, scoped, tag = 'internal scratch']
  %s0 = inlined_call_operand.vmem [shape: f32[16,32], index: 0, kind: input, shape index: {}, may-alias: {0,2}]
  %s1 = inlined_call_operand.vmem [shape: f32[32,16], index: 1, kind: input, shape index: {}]
  %s2 = inlined_call_operand.vmem [shape: f32[16,32], index: 2, kind: input, shape index: {}, may-alias: {0,2}]
  %s3 = inlined_call_operand.vmem [shape: bf16[16,16], index: 3, kind: input, shape index: {}]
  %s4 = inlined_call_operand.vmem [shape: bf16[32,16], index: 4, kind: input, shape index: {}]
  %s5 = inlined_call_operand.vmem [shape: bf16[1,32], index: 5, kind: input, shape index: {}]
  %s6 = inlined_call_operand.vmem [shape: bf16[32,1], index: 6, kind: input, shape index: {}]
  %s7 = inlined_call_operand.vmem [shape: f32[1,16], index: 7, kind: input, shape index: {}, may-alias: {7,10,12}]
  %s8 = inlined_call_operand.vmem [shape: bf16[32,16], index: 8, kind: input, shape index: {}]
  %s9 = inlined_call_operand.vmem [shape: bf16[16,16], index: 9, kind: input, shape index: {}]
  %s10 = inlined_call_operand.vmem [shape: f32[1,16], index: 10, kind: input, shape index: {}, may-alias: {7,10,12}]
  %s11 = inlined_call_operand.vmem [shape: bf16[16,16], index: 11, kind: input, shape index: {}]
  %s12 = inlined_call_operand.vmem [shape: f32[1,16], index: 12, kind: input, shape index: {}, may-alias: {7,10,12}]
  %s13 = inlined_call_operand.hbm [shape: f32[16,16], index: 13, kind: output, shape index: {}]
  %s14 = sld [smem:[#allocation0]]
  $region85: #{_lambda_.5} parent=0
    _
  %s16 = ssub.s32 1, %s14
  %s17 = scalar_select 0, %s16, %s14
  $region1: #{_lambda_.5} parent=0
    #allocation2 [shape = 'u8[8192]{0}', space=vmem, size = 0x2000, scoped, tag = 'output window, operand 0']
    #allocation3 [shape = 's32[2]{0}', space=sflag, size = 0x8, scoped, tag = 'scoped memory for _lambda_.5']
    %18 = vsyncpa [#allocation3], 0
    %s19 = scalar_lea.sflag [#allocation3], 1
    %20 = vsyncpa %s19, 0
    loop: start=0, step=1, limit=4
    $region2: #{_lambda_.5} parent=1 // loop_pre_header
      _
    $region3: #{_lambda_.5} parent=1 // loop_header
      %s22 = sphi 0, %s26
      %p23 = scmp.ge.s32.totalorder %s22, 4
      %s30 = sphi 0, %s30
      %s32 = sphi 0, %s30
      %s33 = sphi 0, %s32
      %s47 = sphi 0, %s33
      %s51 = sphi 0, %s51
      %s53 = sphi 0, %s51
      %s54 = sphi 0, %s53
      %s68 = sphi 0, %s54
      %s74 = sphi 0, %s76
      %s77 = sphi 0, %s74
      %s78 = sphi 0, %s77
      %s94 = sphi 0, %s78
      %s100 = sphi 0, %s102
      %s103 = sphi 0, %s100
      %s104 = sphi 0, %s103
      %s120 = sphi 0, %s104
      %s124 = sphi 0, %s124
      %s126 = sphi 0, %s124
      %s127 = sphi 0, %s126
      %s141 = sphi 0, %s127
      %s145 = sphi 0, %s145
      %s147 = sphi 0, %s145
      %s148 = sphi 0, %s147
      %s162 = sphi 0, %s148
      %s166 = sphi 0, %s166
      %s168 = sphi 0, %s166
      %s169 = sphi 0, %s168
      %s183 = sphi 0, %s169
      %s187 = sphi 0, %s187
      %s189 = sphi 0, %s187
      %s190 = sphi 0, %s189
      %s204 = sphi 0, %s190
      %s208 = sphi 0, %s208
      %s210 = sphi 0, %s208
      %s211 = sphi 0, %s210
      %s225 = sphi 0, %s211
      %s229 = sphi 0, %s229
      %s231 = sphi 0, %s229
      %s232 = sphi 0, %s231
      %s246 = sphi 0, %s232
      %s250 = sphi 0, %s250
      %s252 = sphi 0, %s250
      %s253 = sphi 0, %s252
      %s267 = sphi 0, %s253
      %s271 = sphi 0, %s271
      %s273 = sphi 0, %s271
      %s274 = sphi 0, %s273
      %s288 = sphi 0, %s274
      %s292 = sphi 0, %s292
      %s294 = sphi 0, %s292
      %s295 = sphi 0, %s294
      %s309 = sphi 0, %s295
      %s315 = sphi 0, %s317
      %s318 = sphi 0, %s315
      %s319 = sphi 0, %s318
      %s335 = sphi 0, %s319
    $region4: #{_lambda_.5} parent=1 // loop_header_branch
      %25 = sbr.rel (%p23) target = $region8
    $region5: #{_lambda_.5} parent=1 // loop_body
      %s27 = ssub.s32 %s22, 1
      %s28 = ssub.s32 %s22, 2
      %s29 = sadd.s32 %s22, 1
      %s31 = sadd.s32 %s30, 1
      %p34 = scmp.eq.s32.totalorder %s22, 1
      %p35 = scmp.ne.s32.totalorder %s30, %s32
      %p36 = scmp.eq.s32.totalorder %s22, 0
      %p37 = por %p35, %p36
      %p38 = scmp.ne.s32.totalorder %s30, %s32
      %p39 = scmp.eq.s32.totalorder %s27, 1
      %p40 = por %p38, %p39
      %p41 = scmp.ne.s32.totalorder %s32, %s33
      %p42 = scmp.eq.s32.totalorder %s27, 0
      %p43 = por %p41, %p42
      %p44 = scmp.ne.s32.totalorder %s32, %s33
      %p45 = scmp.eq.s32.totalorder %s28, 1
      %p46 = por %p44, %p45
      %p48 = scmp.ne.s32.totalorder %s33, %s47
      %p49 = scmp.eq.s32.totalorder %s28, 0
      %p50 = por %p48, %p49
      %s52 = sadd.s32 %s51, 1
      %p55 = scmp.eq.s32.totalorder %s22, 1
      %p56 = scmp.ne.s32.totalorder %s51, %s53
      %p57 = scmp.eq.s32.totalorder %s22, 0
      %p58 = por %p56, %p57
      %p59 = scmp.ne.s32.totalorder %s51, %s53
      %p60 = scmp.eq.s32.totalorder %s27, 1
      %p61 = por %p59, %p60
      %p62 = scmp.ne.s32.totalorder %s53, %s54
      %p63 = scmp.eq.s32.totalorder %s27, 0
      %p64 = por %p62, %p63
      %p65 = scmp.ne.s32.totalorder %s53, %s54
      %p66 = scmp.eq.s32.totalorder %s28, 1
      %p67 = por %p65, %p66
      %p69 = scmp.ne.s32.totalorder %s54, %s68
      %p70 = scmp.eq.s32.totalorder %s28, 0
      %p71 = por %p69, %p70
      %s72 = ssub.s32 %s22, %s29
      %p73 = scmp.eq.s32.totalorder %s72, 0
      %s75 = sadd.s32 %s74, 1
      %s76 = scalar_select %p73, %s74, %s75
      %p79 = pneg %p73
      %p80 = scmp.eq.s32.totalorder %s22, 1
      %p81 = por %p79, %p80
      %p82 = scmp.ne.s32.totalorder %s74, %s77
      %p83 = scmp.eq.s32.totalorder %s22, 0
      %p84 = por %p82, %p83
      %p85 = scmp.ne.s32.totalorder %s74, %s77
      %p86 = scmp.eq.s32.totalorder %s27, 1
      %p87 = por %p85, %p86
      %p88 = scmp.ne.s32.totalorder %s77, %s78
      %p89 = scmp.eq.s32.totalorder %s27, 0
      %p90 = por %p88, %p89
      %p91 = scmp.ne.s32.totalorder %s77, %s78
      %p92 = scmp.eq.s32.totalorder %s28, 1
      %p93 = por %p91, %p92
      %p95 = scmp.ne.s32.totalorder %s78, %s94
      %p96 = scmp.eq.s32.totalorder %s28, 0
      %p97 = por %p95, %p96
      %s98 = ssub.s32 %s22, %s29
      %p99 = scmp.eq.s32.totalorder %s98, 0
      %s101 = sadd.s32 %s100, 1
      %s102 = scalar_select %p99, %s100, %s101
      %p105 = pneg %p99
      %p106 = scmp.eq.s32.totalorder %s22, 1
      %p107 = por %p105, %p106
      %p108 = scmp.ne.s32.totalorder %s100, %s103
      %p109 = scmp.eq.s32.totalorder %s22, 0
      %p110 = por %p108, %p109
      %p111 = scmp.ne.s32.totalorder %s100, %s103
      %p112 = scmp.eq.s32.totalorder %s27, 1
      %p113 = por %p111, %p112
      %p114 = scmp.ne.s32.totalorder %s103, %s104
      %p115 = scmp.eq.s32.totalorder %s27, 0
      %p116 = por %p114, %p115
      %p117 = scmp.ne.s32.totalorder %s103, %s104
      %p118 = scmp.eq.s32.totalorder %s28, 1
      %p119 = por %p117, %p118
      %p121 = scmp.ne.s32.totalorder %s104, %s120
      %p122 = scmp.eq.s32.totalorder %s28, 0
      %p123 = por %p121, %p122
      %s125 = sadd.s32 %s124, 1
      %p128 = scmp.eq.s32.totalorder %s22, 1
      %p129 = scmp.ne.s32.totalorder %s124, %s126
      %p130 = scmp.eq.s32.totalorder %s22, 0
      %p131 = por %p129, %p130
      %p132 = scmp.ne.s32.totalorder %s124, %s126
      %p133 = scmp.eq.s32.totalorder %s27, 1
      %p134 = por %p132, %p133
      %p135 = scmp.ne.s32.totalorder %s126, %s127
      %p136 = scmp.eq.s32.totalorder %s27, 0
      %p137 = por %p135, %p136
      %p138 = scmp.ne.s32.totalorder %s126, %s127
      %p139 = scmp.eq.s32.totalorder %s28, 1
      %p140 = por %p138, %p139
      %p142 = scmp.ne.s32.totalorder %s127, %s141
      %p143 = scmp.eq.s32.totalorder %s28, 0
      %p144 = por %p142, %p143
      %s146 = sadd.s32 %s145, 1
      %p149 = scmp.eq.s32.totalorder %s22, 1
      %p150 = scmp.ne.s32.totalorder %s145, %s147
      %p151 = scmp.eq.s32.totalorder %s22, 0
      %p152 = por %p150, %p151
      %p153 = scmp.ne.s32.totalorder %s145, %s147
      %p154 = scmp.eq.s32.totalorder %s27, 1
      %p155 = por %p153, %p154
      %p156 = scmp.ne.s32.totalorder %s147, %s148
      %p157 = scmp.eq.s32.totalorder %s27, 0
      %p158 = por %p156, %p157
      %p159 = scmp.ne.s32.totalorder %s147, %s148
      %p160 = scmp.eq.s32.totalorder %s28, 1
      %p161 = por %p159, %p160
      %p163 = scmp.ne.s32.totalorder %s148, %s162
      %p164 = scmp.eq.s32.totalorder %s28, 0
      %p165 = por %p163, %p164
      %s167 = sadd.s32 %s166, 1
      %p170 = scmp.eq.s32.totalorder %s22, 1
      %p171 = scmp.ne.s32.totalorder %s166, %s168
      %p172 = scmp.eq.s32.totalorder %s22, 0
      %p173 = por %p171, %p172
      %p174 = scmp.ne.s32.totalorder %s166, %s168
      %p175 = scmp.eq.s32.totalorder %s27, 1
      %p176 = por %p174, %p175
      %p177 = scmp.ne.s32.totalorder %s168, %s169
      %p178 = scmp.eq.s32.totalorder %s27, 0
      %p179 = por %p177, %p178
      %p180 = scmp.ne.s32.totalorder %s168, %s169
      %p181 = scmp.eq.s32.totalorder %s28, 1
      %p182 = por %p180, %p181
      %p184 = scmp.ne.s32.totalorder %s169, %s183
      %p185 = scmp.eq.s32.totalorder %s28, 0
      %p186 = por %p184, %p185
      %s188 = sadd.s32 %s187, 1
      %p191 = scmp.eq.s32.totalorder %s22, 1
      %p192 = scmp.ne.s32.totalorder %s187, %s189
      %p193 = scmp.eq.s32.totalorder %s22, 0
      %p194 = por %p192, %p193
      %p195 = scmp.ne.s32.totalorder %s187, %s189
      %p196 = scmp.eq.s32.totalorder %s27, 1
      %p197 = por %p195, %p196
      %p198 = scmp.ne.s32.totalorder %s189, %s190
      %p199 = scmp.eq.s32.totalorder %s27, 0
      %p200 = por %p198, %p199
      %p201 = scmp.ne.s32.totalorder %s189, %s190
      %p202 = scmp.eq.s32.totalorder %s28, 1
      %p203 = por %p201, %p202
      %p205 = scmp.ne.s32.totalorder %s190, %s204
      %p206 = scmp.eq.s32.totalorder %s28, 0
      %p207 = por %p205, %p206
      %s209 = sadd.s32 %s208, 1
      %p212 = scmp.eq.s32.totalorder %s22, 1
      %p213 = scmp.ne.s32.totalorder %s208, %s210
      %p214 = scmp.eq.s32.totalorder %s22, 0
      %p215 = por %p213, %p214
      %p216 = scmp.ne.s32.totalorder %s208, %s210
      %p217 = scmp.eq.s32.totalorder %s27, 1
      %p218 = por %p216, %p217
      %p219 = scmp.ne.s32.totalorder %s210, %s211
      %p220 = scmp.eq.s32.totalorder %s27, 0
      %p221 = por %p219, %p220
      %p222 = scmp.ne.s32.totalorder %s210, %s211
      %p223 = scmp.eq.s32.totalorder %s28, 1
      %p224 = por %p222, %p223
      %p226 = scmp.ne.s32.totalorder %s211, %s225
      %p227 = scmp.eq.s32.totalorder %s28, 0
      %p228 = por %p226, %p227
      %s230 = sadd.s32 %s229, 1
      %p233 = scmp.eq.s32.totalorder %s22, 1
      %p234 = scmp.ne.s32.totalorder %s229, %s231
      %p235 = scmp.eq.s32.totalorder %s22, 0
      %p236 = por %p234, %p235
      %p237 = scmp.ne.s32.totalorder %s229, %s231
      %p238 = scmp.eq.s32.totalorder %s27, 1
      %p239 = por %p237, %p238
      %p240 = scmp.ne.s32.totalorder %s231, %s232
      %p241 = scmp.eq.s32.totalorder %s27, 0
      %p242 = por %p240, %p241
      %p243 = scmp.ne.s32.totalorder %s231, %s232
      %p244 = scmp.eq.s32.totalorder %s28, 1
      %p245 = por %p243, %p244
      %p247 = scmp.ne.s32.totalorder %s232, %s246
      %p248 = scmp.eq.s32.totalorder %s28, 0
      %p249 = por %p247, %p248
      %s251 = sadd.s32 %s250, 1
      %p254 = scmp.eq.s32.totalorder %s22, 1
      %p255 = scmp.ne.s32.totalorder %s250, %s252
      %p256 = scmp.eq.s32.totalorder %s22, 0
      %p257 = por %p255, %p256
      %p258 = scmp.ne.s32.totalorder %s250, %s252
      %p259 = scmp.eq.s32.totalorder %s27, 1
      %p260 = por %p258, %p259
      %p261 = scmp.ne.s32.totalorder %s252, %s253
      %p262 = scmp.eq.s32.totalorder %s27, 0
      %p263 = por %p261, %p262
      %p264 = scmp.ne.s32.totalorder %s252, %s253
      %p265 = scmp.eq.s32.totalorder %s28, 1
      %p266 = por %p264, %p265
      %p268 = scmp.ne.s32.totalorder %s253, %s267
      %p269 = scmp.eq.s32.totalorder %s28, 0
      %p270 = por %p268, %p269
      %s272 = sadd.s32 %s271, 1
      %p275 = scmp.eq.s32.totalorder %s22, 1
      %p276 = scmp.ne.s32.totalorder %s271, %s273
      %p277 = scmp.eq.s32.totalorder %s22, 0
      %p278 = por %p276, %p277
      %p279 = scmp.ne.s32.totalorder %s271, %s273
      %p280 = scmp.eq.s32.totalorder %s27, 1
      %p281 = por %p279, %p280
      %p282 = scmp.ne.s32.totalorder %s273, %s274
      %p283 = scmp.eq.s32.totalorder %s27, 0
      %p284 = por %p282, %p283
      %p285 = scmp.ne.s32.totalorder %s273, %s274
      %p286 = scmp.eq.s32.totalorder %s28, 1
      %p287 = por %p285, %p286
      %p289 = scmp.ne.s32.totalorder %s274, %s288
      %p290 = scmp.eq.s32.totalorder %s28, 0
      %p291 = por %p289, %p290
      %s293 = sadd.s32 %s292, 1
      %p296 = scmp.eq.s32.totalorder %s22, 1
      %p297 = scmp.ne.s32.totalorder %s292, %s294
      %p298 = scmp.eq.s32.totalorder %s22, 0
      %p299 = por %p297, %p298
      %p300 = scmp.ne.s32.totalorder %s292, %s294
      %p301 = scmp.eq.s32.totalorder %s27, 1
      %p302 = por %p300, %p301
      %p303 = scmp.ne.s32.totalorder %s294, %s295
      %p304 = scmp.eq.s32.totalorder %s27, 0
      %p305 = por %p303, %p304
      %p306 = scmp.ne.s32.totalorder %s294, %s295
      %p307 = scmp.eq.s32.totalorder %s28, 1
      %p308 = por %p306, %p307
      %p310 = scmp.ne.s32.totalorder %s295, %s309
      %p311 = scmp.eq.s32.totalorder %s28, 0
      %p312 = por %p310, %p311
      %s313 = ssub.s32 %s22, %s29
      %p314 = scmp.eq.s32.totalorder %s313, 0
      %s316 = sadd.s32 %s315, 1
      %s317 = scalar_select %p314, %s315, %s316
      %p320 = pneg %p314
      %p321 = scmp.eq.s32.totalorder %s22, 1
      %p322 = por %p320, %p321
      %p323 = scmp.ne.s32.totalorder %s315, %s318
      %p324 = scmp.eq.s32.totalorder %s22, 0
      %p325 = por %p323, %p324
      %p326 = scmp.ne.s32.totalorder %s315, %s318
      %p327 = scmp.eq.s32.totalorder %s27, 1
      %p328 = por %p326, %p327
      %p329 = scmp.ne.s32.totalorder %s318, %s319
      %p330 = scmp.eq.s32.totalorder %s27, 0
      %p331 = por %p329, %p330
      %p332 = scmp.ne.s32.totalorder %s318, %s319
      %p333 = scmp.eq.s32.totalorder %s28, 1
      %p334 = por %p332, %p333
      %p336 = scmp.ne.s32.totalorder %s319, %s335
      %p337 = scmp.eq.s32.totalorder %s28, 0
      %p338 = por %p336, %p337
      %p339 = scmp.le.s32.totalorder 1, %s22
      %p340 = scmp.lt.s32.totalorder %s22, 3
      %p341 = pnand %p339, %p340
      %p342 = pneg %p341
      // Predicated region
      $region9: #{_lambda_.5} parent=5 // pred_check
        _
      $region10: #{_lambda_.5} parent=5 // pred_check_branch
        %344 = sbr.rel (%p341) target = $region12
      $region11: #{_lambda_.5} parent=5 // pred_region
        %s345 = ssub.s32 %s22, 1
        // Predicated region
        $region13: #{_lambda_.5} parent=11 // pred_check
          %p346 = pneg %p43
        $region14: #{_lambda_.5} parent=11 // pred_check_branch
          %348 = sbr.rel (%p346) target = $region16
        $region15: #{_lambda_.5} parent=11 // pred_region
          _
        $region16: #{_lambda_.5} parent=11 // pred_fallthru
          _
        // Predicated region
        $region17: #{_lambda_.5} parent=11 // pred_check
          %p349 = pneg %p64
        $region18: #{_lambda_.5} parent=11 // pred_check_branch
          %351 = sbr.rel (%p349) target = $region20
        $region19: #{_lambda_.5} parent=11 // pred_region
          _
        $region20: #{_lambda_.5} parent=11 // pred_fallthru
          _
        // Predicated region
        $region21: #{_lambda_.5} parent=11 // pred_check
          %p352 = pneg %p137
        $region22: #{_lambda_.5} parent=11 // pred_check_branch
          %354 = sbr.rel (%p352) target = $region24
        $region23: #{_lambda_.5} parent=11 // pred_region
          _
        $region24: #{_lambda_.5} parent=11 // pred_fallthru
          _
        // Predicated region
        $region25: #{_lambda_.5} parent=11 // pred_check
          %p355 = pneg %p158
        $region26: #{_lambda_.5} parent=11 // pred_check_branch
          %357 = sbr.rel (%p355) target = $region28
        $region27: #{_lambda_.5} parent=11 // pred_region
          _
        $region28: #{_lambda_.5} parent=11 // pred_fallthru
          _
        // Predicated region
        $region29: #{_lambda_.5} parent=11 // pred_check
          %p358 = pneg %p179
        $region30: #{_lambda_.5} parent=11 // pred_check_branch
          %360 = sbr.rel (%p358) target = $region32
        $region31: #{_lambda_.5} parent=11 // pred_region
          _
        $region32: #{_lambda_.5} parent=11 // pred_fallthru
          _
        // Predicated region
        $region33: #{_lambda_.5} parent=11 // pred_check
          %p361 = pneg %p200
        $region34: #{_lambda_.5} parent=11 // pred_check_branch
          %363 = sbr.rel (%p361) target = $region36
        $region35: #{_lambda_.5} parent=11 // pred_region
          _
        $region36: #{_lambda_.5} parent=11 // pred_fallthru
          _
        // Predicated region
        $region37: #{_lambda_.5} parent=11 // pred_check
          %p364 = pneg %p221
        $region38: #{_lambda_.5} parent=11 // pred_check_branch
          %366 = sbr.rel (%p364) target = $region40
        $region39: #{_lambda_.5} parent=11 // pred_region
          _
        $region40: #{_lambda_.5} parent=11 // pred_fallthru
          _
        // Predicated region
        $region41: #{_lambda_.5} parent=11 // pred_check
          %p367 = pneg %p242
        $region42: #{_lambda_.5} parent=11 // pred_check_branch
          %369 = sbr.rel (%p367) target = $region44
        $region43: #{_lambda_.5} parent=11 // pred_region
          _
        $region44: #{_lambda_.5} parent=11 // pred_fallthru
          _
        // Predicated region
        $region45: #{_lambda_.5} parent=11 // pred_check
          %p370 = pneg %p263
        $region46: #{_lambda_.5} parent=11 // pred_check_branch
          %372 = sbr.rel (%p370) target = $region48
        $region47: #{_lambda_.5} parent=11 // pred_region
          _
        $region48: #{_lambda_.5} parent=11 // pred_fallthru
          _
        // Predicated region
        $region49: #{_lambda_.5} parent=11 // pred_check
          %p373 = pneg %p284
        $region50: #{_lambda_.5} parent=11 // pred_check_branch
          %375 = sbr.rel (%p373) target = $region52
        $region51: #{_lambda_.5} parent=11 // pred_region
          _
        $region52: #{_lambda_.5} parent=11 // pred_fallthru
          _
        // Predicated region
        $region53: #{_lambda_.5} parent=11 // pred_check
          %p376 = pneg %p305
        $region54: #{_lambda_.5} parent=11 // pred_check_branch
          %378 = sbr.rel (%p376) target = $region56
        $region55: #{_lambda_.5} parent=11 // pred_region
          _
        $region56: #{_lambda_.5} parent=11 // pred_fallthru
          _
      $region12: #{_lambda_.5} parent=5 // pred_fallthru
        _
      %p379 = scmp.lt.s32.totalorder %s22, 2
      // Predicated region
      $region57: #{_lambda_.5} parent=5 // pred_check
        %p380 = pneg %p379
      $region58: #{_lambda_.5} parent=5 // pred_check_branch
        %382 = sbr.rel (%p380) target = $region60
      $region59: #{_lambda_.5} parent=5 // pred_region
        // Predicated region
        $region61: #{_lambda_.5} parent=59 // pred_check
          %p383 = pneg %p84
        $region62: #{_lambda_.5} parent=59 // pred_check_branch
          %385 = sbr.rel (%p383) target = $region64
        $region63: #{_lambda_.5} parent=59 // pred_region
          %p386 = scmp.lt.s32.totalorder %s22, 1
          %s387 = scalar_select %p386, %s22, 1
          %s388 = smul.addr %s387, 8
          %s389 = scalar_lea.vmem %s2, %s388
        $region64: #{_lambda_.5} parent=59 // pred_fallthru
          _
        // Predicated region
        $region65: #{_lambda_.5} parent=59 // pred_check
          %p390 = pneg %p110
        $region66: #{_lambda_.5} parent=59 // pred_check_branch
          %392 = sbr.rel (%p390) target = $region68
        $region67: #{_lambda_.5} parent=59 // pred_region
          %p393 = scmp.lt.s32.totalorder %s22, 1
          %s394 = scalar_select %p393, %s22, 1
          %s395 = smul.addr %s394, 4
          %s396 = scalar_lea.vmem %s3, %s395
        $region68: #{_lambda_.5} parent=59 // pred_fallthru
          _
      $region60: #{_lambda_.5} parent=5 // pred_fallthru
        _
      %p397 = scmp.le.s32.totalorder 1, %s22
      %p398 = scmp.lt.s32.totalorder %s22, 3
      %p399 = pnand %p397, %p398
      %p400 = pneg %p399
      // Predicated region
      $region69: #{_lambda_.5} parent=5 // pred_check
        _
      $region70: #{_lambda_.5} parent=5 // pred_check_branch
        %402 = sbr.rel (%p399) target = $region72
      $region71: #{_lambda_.5} parent=5 // pred_region
        %s403 = ssub.s32 %s22, 1
        %p404 = pneg %p43
        %p405 = pneg %p40
        %p406 = pneg %p64
        %p407 = pneg %p61
        %p408 = scmp.lt.s32.totalorder %s27, 1
        %s409 = scalar_select %p408, %s27, 1
        %s410 = smul.addr %s409, 8
        %s411 = scalar_lea.vmem %s2, %s410
        %p412 = pneg %p90
        %p413 = pneg %p87
        %p414 = scmp.lt.s32.totalorder %s27, 1
        %s415 = scalar_select %p414, %s27, 1
        %s416 = smul.addr %s415, 4
        %s417 = scalar_lea.vmem %s3, %s416
        %p418 = pneg %p116
        %p419 = pneg %p113
        %p420 = pneg %p137
        %p421 = pneg %p134
        %p422 = pneg %p158
        %p423 = pneg %p155
        %p424 = pneg %p179
        %p425 = pneg %p176
        %p426 = pneg %p200
        %p427 = pneg %p197
        %p428 = pneg %p221
        %p429 = pneg %p218
        %p430 = pneg %p242
        %p431 = pneg %p239
        %p432 = pneg %p263
        %p433 = pneg %p260
        %p434 = pneg %p284
        %p435 = pneg %p281
        %p436 = pneg %p305
        %p437 = pneg %p302
        %p438 = pneg %p331
        %p439 = pneg %p328
        %s440 = sand.u32 %s318, 1
        %s441 = scalar_lea.sflag [#allocation3], %s440
        %s442 = sand.u32 %s318, 1
        %s443 = smul.addr %s442, 8
        %s444 = scalar_lea.vmem [#allocation2], %s443
        %p445 = scmp.lt.s32.totalorder %s27, 1
        %s446 = scalar_select %p445, %s27, 1
        %s447 = smul.addr %s446, 8
        %s448 = scalar_lea.vmem %s2, %s447
        %p449 = scmp.lt.s32.totalorder %s27, 1
        %s450 = scalar_select %p449, %s27, 1
        %s451 = smul.addr %s450, 4
        %s452 = scalar_lea.vmem %s3, %s451
        %v454 = vld [vmem:[%s0] sm:$0xff]
        %v455 = vld [vmem:[%s0 + $0x8] sm:$0xff]
        %v456 = vpack.c.bf16 %v455, %v454
        %v457 = vld [vmem:[%s1] sm:$0xff]
        %v458 = vld [vmem:[%s1 + $0x8] sm:$0xff]
        %v459 = vld [vmem:[%s1 + $0x10] sm:$0xff]
        %v460 = vld [vmem:[%s1 + $0x18] sm:$0xff]
        %v461 = vpack.c.bf16 %v458, %v457
        %v462 = vpack.c.bf16 %v460, %v459
        %v463 = vld [vmem:[%s448] sm:$0xff]
        %v464 = vpack.c.bf16 %v463, %v463
        %v465 = vld [vmem:[%s452] sm:$0xf]
        %v466 = vunpack.c.l.bf16 %v465
        %v467 = vld [vmem:[%s4] sm:$0xf]
        %v468 = vld [vmem:[%s4 + $0x4] sm:$0xf]
        %v469 = vld [vmem:[%s4 + $0x8] sm:$0xf]
        %v470 = vld [vmem:[%s4 + $0xc] sm:$0xf]
        %v475 = vunpack.c.l.b16 %v467
        %v476 = vunpack.c.l.b16 %v468
        %v477 = vunpack.c.l.b16 %v469
        %v478 = vunpack.c.l.b16 %v470
        %v479 = vpack.c.b16 %v476, %v475
        %v480 = vpack.c.b16 %v478, %v477
        %vm483 = vcmask 261120
        %v485 = vsel %vm483, %v456, 0
        %487 = vmatprep.subr.bf16.mxu0 0
        %488 = vmatpush1.bf16.msra.mxu0 %v479
        %489 = vmatprep.subr.bf16.mxu0 0
        %490 = vmatpush1.bf16.msra.mxu0 %v480
        %491 = vmatprep.subr.bf16.mxu0 0
        %492 = vmatpush1.bf16.msra.mxu0 0
        %493 = vmatprep.subr.bf16.mxu0 0
        %494 = vmatpush1.bf16.msra.mxu0 0
        %495 = vmatprep.subr.bf16.mxu0 0
        %496 = vmatpush1.bf16.msra.mxu0 0
        %497 = vmatprep.subr.bf16.mxu0 0
        %498 = vmatpush1.bf16.msra.mxu0 0
        %499 = vmatprep.subr.bf16.mxu0 0
        %500 = vmatpush1.bf16.msra.mxu0 0
        %501 = vmatprep.subr.bf16.mxu0 0
        %502 = vmatpush1.bf16.msra.mxu0 0
        %503 = vmatprep.subr.bf16.mxu0 0
        %504 = vmatpush1.bf16.msra.mxu0 0
        %505 = vmatprep.subr.bf16.mxu0 0
        %506 = vmatpush1.bf16.msra.mxu0 0
        %507 = vmatprep.subr.bf16.mxu0 0
        %508 = vmatpush1.bf16.msra.mxu0 0
        %509 = vmatprep.subr.bf16.mxu0 0
        %510 = vmatpush1.bf16.msra.mxu0 0
        %511 = vmatprep.subr.bf16.mxu0 0
        %512 = vmatpush1.bf16.msra.mxu0 0
        %513 = vmatprep.subr.bf16.mxu0 0
        %514 = vmatpush1.bf16.msra.mxu0 0
        %515 = vmatprep.subr.bf16.mxu0 0
        %516 = vmatpush1.bf16.msra.mxu0 0
        %517 = vmatprep.subr.bf16.mxu0 0
        %518 = vmatpush1.bf16.msra.mxu0 0
        %519 = vmatprep.mubr.bf16.mxu0 0
        %520 = vmatmul.mubr.bf16.gmra.mrb[0].mxu0 %v485
        %v521 = vpop.f32.mrb[0].mxu0
        %v522 = vadd.f32 0.0, %v521
        %v523 = vpop.f32.mrb[0].mxu0
        %v524 = vpop.f32.mrb[0].mxu0
        %v525 = vadd.f32 0.0, %v524
        %v526 = vpop.f32.mrb[0].mxu0
        %527 = vdwg.mxu0
        %v528 = vpack.c.bf16 %v525, %v522
        %v529 = vld [vmem:[%s5] sm:$0x1]
        %v531 = vsel %vm483, %v529, 0
        %533 = vmatprep.subr.bf16.mxu0 0
        %534 = vmatpush1.bf16.msra.mxu0 %v461
        %535 = vmatprep.subr.bf16.mxu0 0
        %536 = vmatpush1.bf16.msra.mxu0 %v462
        %537 = vmatprep.subr.bf16.mxu0 0
        %538 = vmatpush1.bf16.msra.mxu0 0
        %539 = vmatprep.subr.bf16.mxu0 0
        %540 = vmatpush1.bf16.msra.mxu0 0
        %541 = vmatprep.subr.bf16.mxu0 0
        %542 = vmatpush1.bf16.msra.mxu0 0
        %543 = vmatprep.subr.bf16.mxu0 0
        %544 = vmatpush1.bf16.msra.mxu0 0
        %545 = vmatprep.subr.bf16.mxu0 0
        %546 = vmatpush1.bf16.msra.mxu0 0
        %547 = vmatprep.subr.bf16.mxu0 0
        %548 = vmatpush1.bf16.msra.mxu0 0
        %549 = vmatprep.subr.bf16.mxu0 0
        %550 = vmatpush1.bf16.msra.mxu0 0
        %551 = vmatprep.subr.bf16.mxu0 0
        %552 = vmatpush1.bf16.msra.mxu0 0
        %553 = vmatprep.subr.bf16.mxu0 0
        %554 = vmatpush1.bf16.msra.mxu0 0
        %555 = vmatprep.subr.bf16.mxu0 0
        %556 = vmatpush1.bf16.msra.mxu0 0
        %557 = vmatprep.subr.bf16.mxu0 0
        %558 = vmatpush1.bf16.msra.mxu0 0
        %559 = vmatprep.subr.bf16.mxu0 0
        %560 = vmatpush1.bf16.msra.mxu0 0
        %561 = vmatprep.subr.bf16.mxu0 0
        %562 = vmatpush1.bf16.msra.mxu0 0
        %563 = vmatprep.subr.bf16.mxu0 0
        %564 = vmatpush1.bf16.msra.mxu0 0
        %565 = vmatprep.mubr.bf16.mxu0 0
        %566 = vmatmul.mubr.bf16.gmra.mrb[0].mxu0 %v531
        %v567 = vpop.f32.mrb[0].mxu0
        %v568 = vadd.f32 0.0, %v567
        %v569 = vpop.f32.mrb[0].mxu0
        %v570 = vpop.f32.mrb[0].mxu0
        %v571 = vpop.f32.mrb[0].mxu0
        %572 = vdwg.mxu0
        %v573 = vld [vmem:[%s6] sm:$0xf]
        %v574 = vld [vmem:[%s6 + $0x4] sm:$0xf]
        %v575 = vld [vmem:[%s6 + $0x8] sm:$0xf]
        %v576 = vld [vmem:[%s6 + $0xc] sm:$0xf]
        %v581 = vunpack.c.l.b16 %v573
        %v582 = vunpack.c.l.b16 %v574
        %v583 = vunpack.c.l.b16 %v575
        %v584 = vunpack.c.l.b16 %v576
        %v585 = vpack.c.b16 %v582, %v581
        %v586 = vpack.c.b16 %v584, %v583
        %v590 = vsel %vm483, %v464, 0
        %592 = vmatprep.subr.bf16.mxu0 0
        %593 = vmatpush1.bf16.msra.mxu0 %v585
        %594 = vmatprep.subr.bf16.mxu0 0
        %595 = vmatpush1.bf16.msra.mxu0 %v586
        %596 = vmatprep.subr.bf16.mxu0 0
        %597 = vmatpush1.bf16.msra.mxu0 0
        %598 = vmatprep.subr.bf16.mxu0 0
        %599 = vmatpush1.bf16.msra.mxu0 0
        %600 = vmatprep.subr.bf16.mxu0 0
        %601 = vmatpush1.bf16.msra.mxu0 0
        %602 = vmatprep.subr.bf16.mxu0 0
        %603 = vmatpush1.bf16.msra.mxu0 0
        %604 = vmatprep.subr.bf16.mxu0 0
        %605 = vmatpush1.bf16.msra.mxu0 0
        %606 = vmatprep.subr.bf16.mxu0 0
        %607 = vmatpush1.bf16.msra.mxu0 0
        %608 = vmatprep.subr.bf16.mxu0 0
        %609 = vmatpush1.bf16.msra.mxu0 0
        %610 = vmatprep.subr.bf16.mxu0 0
        %611 = vmatpush1.bf16.msra.mxu0 0
        %612 = vmatprep.subr.bf16.mxu0 0
        %613 = vmatpush1.bf16.msra.mxu0 0
        %614 = vmatprep.subr.bf16.mxu0 0
        %615 = vmatpush1.bf16.msra.mxu0 0
        %616 = vmatprep.subr.bf16.mxu0 0
        %617 = vmatpush1.bf16.msra.mxu0 0
        %618 = vmatprep.subr.bf16.mxu0 0
        %619 = vmatpush1.bf16.msra.mxu0 0
        %620 = vmatprep.subr.bf16.mxu0 0
        %621 = vmatpush1.bf16.msra.mxu0 0
        %622 = vmatprep.subr.bf16.mxu0 0
        %623 = vmatpush1.bf16.msra.mxu0 0
        %624 = vmatprep.mubr.bf16.mxu0 0
        %625 = vmatmul.mubr.bf16.gmra.mrb[0].mxu0 %v590
        %v626 = vpop.f32.mrb[0].mxu0
        %v627 = vadd.f32 0.0, %v626
        %v628 = vpop.f32.mrb[0].mxu0
        %v629 = vpop.f32.mrb[0].mxu0
        %v630 = vpop.f32.mrb[0].mxu0
        %631 = vdwg.mxu0
        %633 = vset.pattern.permute.xlu0 0
        %634 = vperm.xlu0 %633, %v627
        %v635 = vpop.permute.xlu0 %634
        %v637 = vlaneseq
        %v638 = vshrl.u32 %v637, 7
        %v639 = vsub.s32 0, %v638
        %v640 = vrot.slane %v568, %v639
        %v641 = vadd.f32 %v635, %v640
        %v642 = vmul.f32 %v641, 0.2
        %v643 = vmax.f32 %v641, %v642
        %v644 = vadd.f32 %v643, %v466
        %vm645 = vcmask 130048
        %v646 = vsel %vm645, %v644, -inf
        %647 = vmax.xlane.f32.xlu0 %v646
        %v648 = vpop.xlane.xlu0 %647
        %v649 = vsub.f32 %v644, %v648
        %v650 = vmul.f32 %v649, 1.442695
        %v651 = vpow.pop %v650
        %v652 = vsel %vm645, %v651, 0.0
        %653 = vadd.xlane.f32.xlu0 %v652
        %v654 = vpop.xlane.xlu0 %653
        %v655 = vpack.c.bf16 %v651, %v651
        %v657 = vsel %vm645, %v655, 0
        %659 = vmatprep.subr.bf16.mxu0 0
        %660 = vmatpush1.bf16.msra.mxu0 %v528
        %661 = vmatprep.subr.bf16.mxu0 0
        %662 = vmatpush1.bf16.msra.mxu0 0
        %663 = vmatprep.subr.bf16.mxu0 0
        %664 = vmatpush1.bf16.msra.mxu0 0
        %665 = vmatprep.subr.bf16.mxu0 0
        %666 = vmatpush1.bf16.msra.mxu0 0
        %667 = vmatprep.subr.bf16.mxu0 0
        %668 = vmatpush1.bf16.msra.mxu0 0
        %669 = vmatprep.subr.bf16.mxu0 0
        %670 = vmatpush1.bf16.msra.mxu0 0
        %671 = vmatprep.subr.bf16.mxu0 0
        %672 = vmatpush1.bf16.msra.mxu0 0
        %673 = vmatprep.subr.bf16.mxu0 0
        %674 = vmatpush1.bf16.msra.mxu0 0
        %675 = vmatprep.subr.bf16.mxu0 0
        %676 = vmatpush1.bf16.msra.mxu0 0
        %677 = vmatprep.subr.bf16.mxu0 0
        %678 = vmatpush1.bf16.msra.mxu0 0
        %679 = vmatprep.subr.bf16.mxu0 0
        %680 = vmatpush1.bf16.msra.mxu0 0
        %681 = vmatprep.subr.bf16.mxu0 0
        %682 = vmatpush1.bf16.msra.mxu0 0
        %683 = vmatprep.subr.bf16.mxu0 0
        %684 = vmatpush1.bf16.msra.mxu0 0
        %685 = vmatprep.subr.bf16.mxu0 0
        %686 = vmatpush1.bf16.msra.mxu0 0
        %687 = vmatprep.subr.bf16.mxu0 0
        %688 = vmatpush1.bf16.msra.mxu0 0
        %689 = vmatprep.subr.bf16.mxu0 0
        %690 = vmatpush1.bf16.msra.mxu0 0
        %691 = vmatprep.mubr.bf16.mxu0 0
        %692 = vmatmul.mubr.bf16.gmra.mrb[0].mxu0 %v657
        %v693 = vpop.f32.mrb[0].mxu0
        %v694 = vadd.f32 0.0, %v693
        %v695 = vpop.f32.mrb[0].mxu0
        %v696 = vpop.f32.mrb[0].mxu0
        %v697 = vpop.f32.mrb[0].mxu0
        %698 = vdwg.mxu0
        %v699 = vrcp.pop %v654
        %v700 = vmul.f32 %v694, %v699
        %v701 = vld [vmem:[%s7] sm:$0x1]
        %v703 = vlaneseq
        %v704 = vshrl.u32 %v703, 7
        %v705 = vsub.s32 0, %v704
        %v706 = vrot.slane %v701, %v705
        %v708 = vadd.f32 %v700, %v706
        %v709 = vld [vmem:[%s8] sm:$0xf]
        %v710 = vld [vmem:[%s8 + $0x4] sm:$0xf]
        %v711 = vld [vmem:[%s8 + $0x8] sm:$0xf]
        %v712 = vld [vmem:[%s8 + $0xc] sm:$0xf]
        %v713 = vpack.c.bf16 %v708, %v708
        %v714 = vld [vmem:[%s9] sm:$0xf]
        %v715 = vld [vmem:[%s9 + $0x4] sm:$0xf]
        %v718 = vunpack.c.l.b16 %v714
        %v719 = vunpack.c.l.b16 %v715
        %v720 = vpack.c.b16 %v719, %v718
        %v723 = vsel %vm645, %v713, 0
        %725 = vmatprep.subr.bf16.mxu0 0
        %726 = vmatpush1.bf16.msra.mxu0 %v720
        %727 = vmatprep.subr.bf16.mxu0 0
        %728 = vmatpush1.bf16.msra.mxu0 0
        %729 = vmatprep.subr.bf16.mxu0 0
        %730 = vmatpush1.bf16.msra.mxu0 0
        %731 = vmatprep.subr.bf16.mxu0 0
        %732 = vmatpush1.bf16.msra.mxu0 0
        %733 = vmatprep.subr.bf16.mxu0 0
        %734 = vmatpush1.bf16.msra.mxu0 0
        %735 = vmatprep.subr.bf16.mxu0 0
        %736 = vmatpush1.bf16.msra.mxu0 0
        %737 = vmatprep.subr.bf16.mxu0 0
        %738 = vmatpush1.bf16.msra.mxu0 0
        %739 = vmatprep.subr.bf16.mxu0 0
        %740 = vmatpush1.bf16.msra.mxu0 0
        %741 = vmatprep.subr.bf16.mxu0 0
        %742 = vmatpush1.bf16.msra.mxu0 0
        %743 = vmatprep.subr.bf16.mxu0 0
        %744 = vmatpush1.bf16.msra.mxu0 0
        %745 = vmatprep.subr.bf16.mxu0 0
        %746 = vmatpush1.bf16.msra.mxu0 0
        %747 = vmatprep.subr.bf16.mxu0 0
        %748 = vmatpush1.bf16.msra.mxu0 0
        %749 = vmatprep.subr.bf16.mxu0 0
        %750 = vmatpush1.bf16.msra.mxu0 0
        %751 = vmatprep.subr.bf16.mxu0 0
        %752 = vmatpush1.bf16.msra.mxu0 0
        %753 = vmatprep.subr.bf16.mxu0 0
        %754 = vmatpush1.bf16.msra.mxu0 0
        %755 = vmatprep.subr.bf16.mxu0 0
        %756 = vmatpush1.bf16.msra.mxu0 0
        %757 = vmatprep.mubr.bf16.mxu0 0
        %758 = vmatmul.mubr.bf16.gmra.mrb[0].mxu0 %v723
        %v759 = vpop.f32.mrb[0].mxu0
        %v760 = vadd.f32 0.0, %v759
        %v761 = vpop.f32.mrb[0].mxu0
        %v762 = vpop.f32.mrb[0].mxu0
        %v763 = vpop.f32.mrb[0].mxu0
        %764 = vdwg.mxu0
        %v769 = vunpack.c.l.b16 %v709
        %v770 = vunpack.c.l.b16 %v710
        %v771 = vunpack.c.l.b16 %v711
        %v772 = vunpack.c.l.b16 %v712
        %v773 = vpack.c.b16 %v770, %v769
        %v774 = vpack.c.b16 %v772, %v771
        %777 = vmatprep.subr.bf16.mxu0 0
        %778 = vmatpush1.bf16.msra.mxu0 %v773
        %779 = vmatprep.subr.bf16.mxu0 0
        %780 = vmatpush1.bf16.msra.mxu0 %v774
        %781 = vmatprep.subr.bf16.mxu0 0
        %782 = vmatpush1.bf16.msra.mxu0 0
        %783 = vmatprep.subr.bf16.mxu0 0
        %784 = vmatpush1.bf16.msra.mxu0 0
        %785 = vmatprep.subr.bf16.mxu0 0
        %786 = vmatpush1.bf16.msra.mxu0 0
        %787 = vmatprep.subr.bf16.mxu0 0
        %788 = vmatpush1.bf16.msra.mxu0 0
        %789 = vmatprep.subr.bf16.mxu0 0
        %790 = vmatpush1.bf16.msra.mxu0 0
        %791 = vmatprep.subr.bf16.mxu0 0
        %792 = vmatpush1.bf16.msra.mxu0 0
        %793 = vmatprep.subr.bf16.mxu0 0
        %794 = vmatpush1.bf16.msra.mxu0 0
        %795 = vmatprep.subr.bf16.mxu0 0
        %796 = vmatpush1.bf16.msra.mxu0 0
        %797 = vmatprep.subr.bf16.mxu0 0
        %798 = vmatpush1.bf16.msra.mxu0 0
        %799 = vmatprep.subr.bf16.mxu0 0
        %800 = vmatpush1.bf16.msra.mxu0 0
        %801 = vmatprep.subr.bf16.mxu0 0
        %802 = vmatpush1.bf16.msra.mxu0 0
        %803 = vmatprep.subr.bf16.mxu0 0
        %804 = vmatpush1.bf16.msra.mxu0 0
        %805 = vmatprep.subr.bf16.mxu0 0
        %806 = vmatpush1.bf16.msra.mxu0 0
        %807 = vmatprep.subr.bf16.mxu0 0
        %808 = vmatpush1.bf16.msra.mxu0 0
        %809 = vmatprep.mubr.bf16.mxu0 0
        %810 = vmatmul.mubr.bf16.gmra.mrb[0].mxu0 %v590
        %v811 = vpop.f32.mrb[0].mxu0
        %v812 = vadd.f32 %v760, %v811
        %v813 = vpop.f32.mrb[0].mxu0
        %v814 = vpop.f32.mrb[0].mxu0
        %v815 = vpop.f32.mrb[0].mxu0
        %816 = vdwg.mxu0
        %v817 = vld [vmem:[%s10] sm:$0x1]
        %v819 = vlaneseq
        %v820 = vshrl.u32 %v819, 7
        %v821 = vsub.s32 0, %v820
        %v822 = vrot.slane %v817, %v821
        %v824 = vadd.f32 %v812, %v822
        %v825 = vmax.f32 %v824, 0.0
        %v826 = vpack.c.bf16 %v825, %v825
        %v827 = vld [vmem:[%s11] sm:$0xf]
        %v828 = vld [vmem:[%s11 + $0x4] sm:$0xf]
        %v829 = vld [vmem:[%s12] sm:$0x1]
        %v831 = vlaneseq
        %v832 = vshrl.u32 %v831, 7
        %v833 = vsub.s32 0, %v832
        %v834 = vrot.slane %v829, %v833
        %v838 = vunpack.c.l.b16 %v827
        %v839 = vunpack.c.l.b16 %v828
        %v840 = vpack.c.b16 %v839, %v838
        %v843 = vsel %vm645, %v826, 0
        %845 = vmatprep.subr.bf16.mxu0 0
        %846 = vmatpush1.bf16.msra.mxu0 %v840
        %847 = vmatprep.subr.bf16.mxu0 0
        %848 = vmatpush1.bf16.msra.mxu0 0
        %849 = vmatprep.subr.bf16.mxu0 0
        %850 = vmatpush1.bf16.msra.mxu0 0
        %851 = vmatprep.subr.bf16.mxu0 0
        %852 = vmatpush1.bf16.msra.mxu0 0
        %853 = vmatprep.subr.bf16.mxu0 0
        %854 = vmatpush1.bf16.msra.mxu0 0
        %855 = vmatprep.subr.bf16.mxu0 0
        %856 = vmatpush1.bf16.msra.mxu0 0
        %857 = vmatprep.subr.bf16.mxu0 0
        %858 = vmatpush1.bf16.msra.mxu0 0
        %859 = vmatprep.subr.bf16.mxu0 0
        %860 = vmatpush1.bf16.msra.mxu0 0
        %861 = vmatprep.subr.bf16.mxu0 0
        %862 = vmatpush1.bf16.msra.mxu0 0
        %863 = vmatprep.subr.bf16.mxu0 0
        %864 = vmatpush1.bf16.msra.mxu0 0
        %865 = vmatprep.subr.bf16.mxu0 0
        %866 = vmatpush1.bf16.msra.mxu0 0
        %867 = vmatprep.subr.bf16.mxu0 0
        %868 = vmatpush1.bf16.msra.mxu0 0
        %869 = vmatprep.subr.bf16.mxu0 0
        %870 = vmatpush1.bf16.msra.mxu0 0
        %871 = vmatprep.subr.bf16.mxu0 0
        %872 = vmatpush1.bf16.msra.mxu0 0
        %873 = vmatprep.subr.bf16.mxu0 0
        %874 = vmatpush1.bf16.msra.mxu0 0
        %875 = vmatprep.subr.bf16.mxu0 0
        %876 = vmatpush1.bf16.msra.mxu0 0
        %877 = vmatprep.mubr.bf16.mxu0 0
        %878 = vmatmul.mubr.bf16.gmra.mrb[0].mxu0 %v843
        %v879 = vpop.f32.mrb[0].mxu0
        %v880 = vadd.f32 %v834, %v879
        %v881 = vpop.f32.mrb[0].mxu0
        %v882 = vpop.f32.mrb[0].mxu0
        %v883 = vpop.f32.mrb[0].mxu0
        %884 = vdwg.mxu0
        %885 = vst.msk [vmem:[%s444] sm:$0xff] %vm645, %v880
        %s886 = sand.u32 %s318, 1
        %s887 = scalar_lea.sflag [#allocation3], %s886
        %s888 = sand.u32 %s318, 1
        %s889 = smul.addr %s888, 8
        %s890 = scalar_lea.vmem [#allocation2], %s889
        // Predicated region
        $region73: #{_lambda_.5} parent=71 // pred_check
          %p891 = pneg %p328
        $region74: #{_lambda_.5} parent=71 // pred_check_branch
          %893 = sbr.rel (%p891) target = $region76
        $region75: #{_lambda_.5} parent=71 // pred_region
          %s895 = ssub.s32 128, 128
          %896 = vsyncadd %s887, %s895
          %s897 = smul.addr %s27, 128
          %s898 = scalar_lea.hbm %s13, %s897
          %s900 = sshll.u32 %s890, 4
          %s901 = int_to_ptr.vmem [resolvable:$true] %s900
          %903 = dma.vmem_to_hbm [thread:$0]  %s901, 128, %s898, %s887
        $region76: #{_lambda_.5} parent=71 // pred_fallthru
          _
      $region72: #{_lambda_.5} parent=5 // pred_fallthru
        _
      %p904 = scmp.le.s32.totalorder 2, %s22
      // Predicated region
      $region77: #{_lambda_.5} parent=5 // pred_check
        %p905 = pneg %p904
      $region78: #{_lambda_.5} parent=5 // pred_check_branch
        %907 = sbr.rel (%p905) target = $region80
      $region79: #{_lambda_.5} parent=5 // pred_region
        %s908 = ssub.s32 %s22, 2
        // Predicated region
        $region81: #{_lambda_.5} parent=79 // pred_check
          %p909 = pneg %p334
        $region82: #{_lambda_.5} parent=79 // pred_check_branch
          %911 = sbr.rel (%p909) target = $region84
        $region83: #{_lambda_.5} parent=79 // pred_region
          %s912 = sand.u32 %s319, 1
          %s913 = scalar_lea.sflag [#allocation3], %s912
          %s914 = sand.u32 %s319, 1
          %s915 = smul.addr %s914, 8
          %s916 = scalar_lea.vmem [#allocation2], %s915
          %917 = dma.done %s913, 128
        $region84: #{_lambda_.5} parent=79 // pred_fallthru
          _
      $region80: #{_lambda_.5} parent=5 // pred_fallthru
        _
    $region6: #{_lambda_.5} parent=1 // loop_footer
      %s26 = sadd.s32 1, %s22
    $region7: #{_lambda_.5} parent=1 // loop_footer_branch
      %21 = sbr.rel target = $region3
    $region8: #{_lambda_.5} parent=1 // loop_exit
      _
    %918 = vsyncpa [#allocation3], 1
    %s919 = scalar_lea.sflag [#allocation3], 1
    %920 = vsyncpa %s919, 1

</llo_original>
